<compile_context>
chip_gen: v7x
topology: tpu7x:2x2x1
jax: 0.10.0
libtpu: 0.0.40
codegen_flags: <defaults>
</compile_context>

<pallas_src>
import jax
import jax.numpy as jnp
from jax import lax
from jax.experimental import pallas as pl
from jax.experimental.pallas import tpu as pltpu

EPS = 1e-5          # nn.LayerNorm default
NEG_MASK = -1e30    # large finite negative instead of -inf (avoids inf-inf NaN)
VMEM_LIMIT = 64 * 1024 * 1024


# ----------------------------------------------------------------------------
# helpers
# ----------------------------------------------------------------------------
def _bf16(x):
    return x.astype(jnp.bfloat16)


def _ln(x, g, b):
    """LayerNorm over the last axis, f32 math (matches nn.LayerNorm)."""
    mu = jnp.mean(x, axis=-1, keepdims=True)
    xc = x - mu
    var = jnp.mean(xc * xc, axis=-1, keepdims=True)
    return xc * lax.rsqrt(var + EPS) * g + b


def _pick_tile(dim, pref, align):
    """Largest tile <= pref that is a multiple of `align` and divides `dim`,
    else the full dim (full-dim blocks always satisfy the (8,128) rule)."""
    if dim <= pref:
        return dim
    t = (pref // align) * align
    while t >= align:
        if dim % t == 0:
            return t
        t -= align
    return dim


# ----------------------------------------------------------------------------
# Prologue kernel: memory = LN(grid_to_embedding(spikes));
# per-layer cross-attention contribution ca_l = out_proj_l(v_proj_l(memory))
# (memory length == 1  =>  softmax over a single key is the identity)
# ----------------------------------------------------------------------------
def _memory_ca_kernel(spk_ref, g2ew_ref, g2eb_ref, lng_ref, lnb_ref,
                      cvw_ref, cvb_ref, caow_ref, caob_ref, ca_ref):
    mem = _ln(jnp.dot(_bf16(spk_ref[...]), g2ew_ref[...],
                      preferred_element_type=jnp.float32) + g2eb_ref[...],
              lng_ref[...], lnb_ref[...])                       # [B, E]
    memb = _bf16(mem)
    L = ca_ref.shape[0]
    for l in range(L):                                          # L is small (static)
        v = jnp.dot(memb, cvw_ref[l],
                    preferred_element_type=jnp.float32) + cvb_ref[l]
        ca_ref[l] = jnp.dot(_bf16(v), caow_ref[l],
                            preferred_element_type=jnp.float32) + caob_ref[l]


def memory_cross_attn(spikes, prep):
    B = spikes.shape[0]
    L, E, _ = prep["cvw"].shape
    return pl.pallas_call(
        _memory_ca_kernel,
        out_shape=jax.ShapeDtypeStruct((L, B, E), jnp.float32),
        in_specs=[pl.BlockSpec(memory_space=pltpu.MemorySpace.VMEM)] * 9,
        out_specs=pl.BlockSpec(memory_space=pltpu.MemorySpace.VMEM),
        compiler_params=pltpu.CompilerParams(vmem_limit_bytes=VMEM_LIMIT),
    )(spikes, prep["g2ew"], prep["g2eb"], prep["lng"], prep["lnb"],
      prep["cvw"], prep["cvb"], prep["caow"], prep["caob"])


# ----------------------------------------------------------------------------
# Fused decoder stack: one pallas_call, grid = (B, L), x carried in the
# resident output block, target-embedding LN fused under pl.when(l == 0)
# ----------------------------------------------------------------------------
def _decoder_stack_kernel(tok_ref, pos_ref, lne_g_ref, lne_b_ref, ca_ref,
                          wq_ref, wk_ref, wv_ref, bq_ref, bk_ref, bv_ref,
                          wo_ref, bo_ref, ln1g_ref, ln1b_ref,
                          ln2g_ref, ln2b_ref,
                          ffw1_ref, ffb1_ref, ffw2_ref, ffb2_ref,
                          ln3g_ref, ln3b_ref, o_ref):
    l = pl.program_id(1)
    S, E = o_ref.shape[1], o_ref.shape[2]
    H = wq_ref.shape[1]
    Dh = wq_ref.shape[3]
    scale = 1.0 / (Dh ** 0.5)

    # layer-0 prologue: target embeddings = LN(token_embed + position_embed)
    @pl.when(l == 0)
    def _():
        o_ref[0] = _ln(tok_ref[0] + pos_ref[0], lne_g_ref[...], lne_b_ref[...])

    x = o_ref[0]                                   # [S, E] f32 (prev layer / embed)
    xb = _bf16(x)

    # causal additive bias built in-kernel (no HBM mask traffic)
    row = lax.broadcasted_iota(jnp.int32, (S, S), 0)
    col = lax.broadcasted_iota(jnp.int32, (S, S), 1)
    bias = jnp.where(col > row, jnp.float32(NEG_MASK), jnp.float32(0.0))

    # ---- self-attention: per-head weight blocks (major-axis slices only),
    #      out-projection fused into the per-head accumulation ----
    sa = jnp.zeros((S, E), jnp.float32)
    for h in range(H):                             # static unroll (small H)
        qh = jnp.dot(xb, wq_ref[0, h], preferred_element_type=jnp.float32) + bq_ref[0, h]
        kh = jnp.dot(xb, wk_ref[0, h], preferred_element_type=jnp.float32) + bk_ref[0, h]
        vh = jnp.dot(xb, wv_ref[0, h], preferred_element_type=jnp.float32) + bv_ref[0, h]
        s = lax.dot_general(_bf16(qh), _bf16(kh), (((1,), (1,)), ((), ())),
                            preferred_element_type=jnp.float32) * scale + bias
        s = s - jnp.max(s, axis=-1, keepdims=True)
        p = jnp.exp(s)
        p = p * pl.reciprocal(jnp.sum(p, axis=-1, keepdims=True), approx=True)
        oh = jnp.dot(_bf16(p), _bf16(vh), preferred_element_type=jnp.float32)
        sa = sa + jnp.dot(_bf16(oh), wo_ref[0, h], preferred_element_type=jnp.float32)
    sa = sa + bo_ref[0]

    x1 = _ln(x + sa, ln1g_ref[0], ln1b_ref[0])

    # ---- cross-attention (memory length 1): precomputed per-layer vector ----
    x2 = _ln(x1 + ca_ref[0, 0], ln2g_ref[0], ln2b_ref[0])

    # ---- feed-forward (relu) ----
    h1 = jnp.maximum(
        jnp.dot(_bf16(x2), ffw1_ref[0],
                preferred_element_type=jnp.float32) + ffb1_ref[0], 0.0)
    ff = jnp.dot(_bf16(h1), ffw2_ref[0],
                 preferred_element_type=jnp.float32) + ffb2_ref[0]
    o_ref[0] = _ln(x2 + ff, ln3g_ref[0], ln3b_ref[0])


def decoder_stack(tok, pos, ca4, prep):
    """tok: [B,S,E] f32, pos: [1,S,E] f32, ca4: [L,B,1,E] f32."""
    B, S, E = tok.shape
    L = prep["wq"].shape[0]

    def wspec(shape):       # stacked per-layer weights: one layer per step, indexed by l
        n = len(shape)
        return pl.BlockSpec((1,) + tuple(shape[1:]), lambda b, l, _n=n: (l,) + (0,) * (_n - 1))

    def cspec(shape):       # grid-invariant constants
        n = len(shape)
        return pl.BlockSpec(tuple(shape), lambda b, l, _n=n: (0,) * _n)

    args = (tok, pos, prep["lng"], prep["lnb"], ca4,
            prep["wq"], prep["wk"], prep["wv"],
            prep["bq"], prep["bk"], prep["bv"],
            prep["wo"], prep["bo"], prep["ln1g"], prep["ln1b"],
            prep["ln2g"], prep["ln2b"],
            prep["ffw1"], prep["ffb1"], prep["ffw2"], prep["ffb2"],
            prep["ln3g"], prep["ln3b"])

    in_specs = [
        pl.BlockSpec((1, S, E), lambda b, l: (b, 0, 0)),        # tok (resident per b)
        cspec(pos.shape),                                       # pos  [1,S,E]
        cspec(prep["lng"].shape),                               # embed LN gamma [1,E]
        cspec(prep["lnb"].shape),                               # embed LN beta  [1,E]
        pl.BlockSpec((1, 1, 1, E), lambda b, l: (l, b, 0, 0)),  # ca   [L,B,1,E]
    ] + [wspec(a.shape) for a in args[5:]]

    return pl.pallas_call(
        _decoder_stack_kernel,
        out_shape=jax.ShapeDtypeStruct((B, S, E), jnp.float32),
        grid=(B, L),
        in_specs=in_specs,
        out_specs=pl.BlockSpec((1, S, E), lambda b, l: (b, 0, 0)),
        compiler_params=pltpu.CompilerParams(
            dimension_semantics=("parallel", "arbitrary"),
            vmem_limit_bytes=VMEM_LIMIT),
    )(*args)


# ----------------------------------------------------------------------------
# Final vocab projection: tiled matmul over [B*S, V]
# ----------------------------------------------------------------------------
def _final_proj_kernel(x_ref, w_ref, b_ref, o_ref):
    o_ref[...] = jnp.dot(_bf16(x_ref[...]), w_ref[...],
                         preferred_element_type=jnp.float32) + b_ref[...]


def final_projection(x2d, w, b):
    M, E = x2d.shape
    V = w.shape[1]
    tm = _pick_tile(M, 256, 8)
    tn = _pick_tile(V, 512, 128)
    return pl.pallas_call(
        _final_proj_kernel,
        out_shape=jax.ShapeDtypeStruct((M, V), jnp.float32),
        grid=(M // tm, V // tn),
        in_specs=[pl.BlockSpec((tm, E), lambda i, j: (i, 0)),
                  pl.BlockSpec((E, tn), lambda i, j: (0, j)),
                  pl.BlockSpec((1, tn), lambda i, j: (0, j))],
        out_specs=pl.BlockSpec((tm, tn), lambda i, j: (i, j)),
        compiler_params=pltpu.CompilerParams(
            dimension_semantics=("parallel", "parallel"),
            vmem_limit_bytes=VMEM_LIMIT),
    )(x2d, w, b)


# ----------------------------------------------------------------------------
# One-time weight preparation (bf16 conversion + per-head / per-layer stacking)
# ----------------------------------------------------------------------------
def prepare_params(params, num_heads):
    E = params["g2e_w"].shape[1]
    H = num_heads
    Dh = E // H
    layers = params["layers"]

    def stack(fn):
        return jnp.stack([fn(lp) for lp in layers], axis=0)

    def qkv_w(lp, which):   # [E,E] column block -> per-head [H, E, Dh]
        w = lp["self_attn"]["in_w"][:, which * E:(which + 1) * E]
        return w.reshape(E, H, Dh).transpose(1, 0, 2)

    def qkv_b(lp, which):
        return lp["self_attn"]["in_b"][which * E:(which + 1) * E].reshape(H, 1, Dh)

    return {
        # decoder stack (stacked along leading L axis)
        "wq": _bf16(stack(lambda lp: qkv_w(lp, 0))),            # [L,H,E,Dh]
        "wk": _bf16(stack(lambda lp: qkv_w(lp, 1))),
        "wv": _bf16(stack(lambda lp: qkv_w(lp, 2))),
        "bq": stack(lambda lp: qkv_b(lp, 0)),                   # [L,H,1,Dh] f32
        "bk": stack(lambda lp: qkv_b(lp, 1)),
        "bv": stack(lambda lp: qkv_b(lp, 2)),
        "wo": _bf16(stack(lambda lp: lp["self_attn"]["out_w"].reshape(H, Dh, E))),
        "bo": stack(lambda lp: lp["self_attn"]["out_b"].reshape(1, E)),
        "ln1g": stack(lambda lp: lp["ln1_g"].reshape(1, E)),
        "ln1b": stack(lambda lp: lp["ln1_b"].reshape(1, E)),
        "ln2g": stack(lambda lp: lp["ln2_g"].reshape(1, E)),
        "ln2b": stack(lambda lp: lp["ln2_b"].reshape(1, E)),
        "ffw1": _bf16(stack(lambda lp: lp["ff_w1"])),           # [L,E,F]
        "ffb1": stack(lambda lp: lp["ff_b1"].reshape(1, -1)),
        "ffw2": _bf16(stack(lambda lp: lp["ff_w2"])),           # [L,F,E]
        "ffb2": stack(lambda lp: lp["ff_b2"].reshape(1, E)),
        "ln3g": stack(lambda lp: lp["ln3_g"].reshape(1, E)),
        "ln3b": stack(lambda lp: lp["ln3_b"].reshape(1, E)),
        # cross-attention (len-1 memory): only the V slice + out-proj are needed
        "cvw": _bf16(stack(lambda lp: lp["cross_attn"]["in_w"][:, 2 * E:])),
        "cvb": stack(lambda lp: lp["cross_attn"]["in_b"][2 * E:].reshape(1, E)),
        "caow": _bf16(stack(lambda lp: lp["cross_attn"]["out_w"])),
        "caob": stack(lambda lp: lp["cross_attn"]["out_b"].reshape(1, E)),
        # prologue / embeddings / final projection
        "g2ew": _bf16(params["g2e_w"]),
        "g2eb": params["g2e_b"].reshape(1, E),
        "lng": params["ln_g"].reshape(1, E),
        "lnb": params["ln_b"].reshape(1, E),
        "tok_emb": params["tok_emb"],
        "pos_emb": params["pos_emb"],
        "fp_w": _bf16(params["fp_w"]),
        "fp_b": params["fp_b"].reshape(1, -1),
    }


# ----------------------------------------------------------------------------
# Full forward (teacher forcing, eval semantics / dropout = 0)
# ----------------------------------------------------------------------------
@jax.jit
def output_interface_forward_training(prep, grid_spikes, target_tokens):
    B, _, Hg, Wg = grid_spikes.shape
    S = target_tokens.shape[1]
    L = prep["wq"].shape[0]
    E = prep["wq"].shape[2]
    V = prep["fp_w"].shape[1]

    # memory + per-layer cross-attention contributions (one small prologue call)
    spikes = grid_spikes[:, -1, :, :].reshape(B, Hg * Wg)
    ca = memory_cross_attn(spikes, prep)                        # [L, B, E]

    # target embeddings: token gather stays in XLA; add+LN fused into layer 0
    tok = jnp.take(prep["tok_emb"], target_tokens, axis=0)      # [B, S, E]
    pos = prep["pos_emb"][:S].reshape(1, S, E)

    x = decoder_stack(tok, pos, ca.reshape(L, B, 1, E), prep)   # [B, S, E]

    logits = final_projection(x.reshape(B * S, E), prep["fp_w"], prep["fp_b"])
    return logits.reshape(B, S, V)


# ----------------------------------------------------------------------------
# Deterministic synthetic parameter init (weights stored [in, out] — the
# transpose of PyTorch's [out, in] layout)
# ----------------------------------------------------------------------------
def init_params(key, vocab_size, grid_h, grid_w, E, max_len, num_layers, dff):
    keys = iter(jax.random.split(key, 128))

    def w(shape, scale=0.05):
        return scale * jax.random.normal(next(keys), shape, jnp.float32)

    def mha_params():
        return {"in_w": w((E, 3 * E)), "in_b": w((3 * E,)),
                "out_w": w((E, E)), "out_b": w((E,))}

    layers = []
    for _ in range(num_layers):
        layers.append({
            "self_attn": mha_params(),
            "cross_attn": mha_params(),
            "ff_w1": w((E, dff)), "ff_b1": w((dff,)),
            "ff_w2": w((dff, E)), "ff_b2": w((E,)),
            "ln1_g": jnp.ones((E,), jnp.float32), "ln1_b": jnp.zeros((E,), jnp.float32),
            "ln2_g": jnp.ones((E,), jnp.float32), "ln2_b": jnp.zeros((E,), jnp.float32),
            "ln3_g": jnp.ones((E,), jnp.float32), "ln3_b": jnp.zeros((E,), jnp.float32),
        })

    return {
        "g2e_w": w((grid_h * grid_w, E)), "g2e_b": w((E,)),
        "tok_emb": w((vocab_size, E)),
        "pos_emb": w((max_len, E)),
        "ln_g": jnp.ones((E,), jnp.float32), "ln_b": jnp.zeros((E,), jnp.float32),
        "fp_w": w((E, vocab_size)), "fp_b": w((vocab_size,)),
        "layers": layers,
    }


# TODO(synk): dropout (train-mode) and the host-side autoregressive generation
# state machine (start_generation/generate_token_at_clk/add_generated_token)
# are Python-state driven and not part of this kernel; eval semantics
# (dropout off) and the teacher-forcing batch path are implemented.
# TODO(synk): optional tgt_key_padding_mask (attention_mask) is not applied.
# TODO(synk): for B=1 on v7x, add a query-tile parallel grid axis so both
# TensorCores are used; not needed at these demo shapes.

if __name__ == "__main__":
    # small config consistent with the module
    VOCAB, GH, GW = 32, 8, 8
    EMB, MAX_LEN, HEADS, LAYERS, DFF = 32, 16, 4, 2, 64
    B, MAX_CLK, SEQ = 2, 3, 8

    root = jax.random.PRNGKey(0)
    k_p, k_s, k_t = jax.random.split(root, 3)

    params = init_params(k_p, VOCAB, GH, GW, EMB, MAX_LEN, LAYERS, DFF)
    prep = prepare_params(params, HEADS)   # bf16 conversion + stacking, once

    grid_spikes = jax.random.bernoulli(k_s, 0.3, (B, MAX_CLK, GH, GW)).astype(jnp.float32)
    target_tokens = jax.random.randint(k_t, (B, SEQ), 0, VOCAB, dtype=jnp.int32)

    logits = output_interface_forward_training(prep, grid_spikes, target_tokens)
    logits = jax.block_until_ready(logits)

    assert logits.shape == (B, SEQ, VOCAB), logits.shape
    assert bool(jnp.all(jnp.isfinite(logits)))
    print("KERNEL_OK")
</pallas_src>

<mosaic_0001>
module attributes {stable_mosaic.version = 11 : i64} {
  func.func @_memory_ca_kernel(%arg0: memref<2x64xf32, #tpu.memory_space<vmem>>, %arg1: memref<64x32xbf16, #tpu.memory_space<vmem>>, %arg2: memref<1x32xf32, #tpu.memory_space<vmem>>, %arg3: memref<1x32xf32, #tpu.memory_space<vmem>>, %arg4: memref<1x32xf32, #tpu.memory_space<vmem>>, %arg5: memref<2x32x32xbf16, #tpu.memory_space<vmem>>, %arg6: memref<2x1x32xf32, #tpu.memory_space<vmem>>, %arg7: memref<2x32x32xbf16, #tpu.memory_space<vmem>>, %arg8: memref<2x1x32xf32, #tpu.memory_space<vmem>>, %arg9: memref<2x2x32xf32, #tpu.memory_space<vmem>>) attributes {dimension_semantics = [], scalar_prefetch = 0 : i64, scratch_operands = 0 : i64, tpu.core_type = #tpu.core_type<tc>} {
    %c0 = arith.constant 0 : index
    %c0_0 = arith.constant 0 : index
    %0 = vector.load %arg0[%c0, %c0_0] : memref<2x64xf32, #tpu.memory_space<vmem>>, vector<2x64xf32>
    %1 = arith.truncf %0 : vector<2x64xf32> to vector<2x64xbf16>
    %c0_1 = arith.constant 0 : index
    %c0_2 = arith.constant 0 : index
    %2 = vector.load %arg1[%c0_1, %c0_2] : memref<64x32xbf16, #tpu.memory_space<vmem>>, vector<64x32xbf16>
    %cst = arith.constant dense<0.000000e+00> : vector<2x32xf32>
    %3 = tpu.matmul %1, %2, %cst {dimension_numbers = #tpu.dot_dimension_numbers<[1], [0], [0], [1], [0, 0, 1, 1], [], []>} : vector<2x64xbf16>, vector<64x32xbf16>, vector<2x32xf32> -> vector<2x32xf32>
    %c0_3 = arith.constant 0 : index
    %c0_4 = arith.constant 0 : index
    %4 = vector.load %arg2[%c0_3, %c0_4] : memref<1x32xf32, #tpu.memory_space<vmem>>, vector<1x32xf32>
    %5 = vector.broadcast %4 : vector<1x32xf32> to vector<2x32xf32>
    %6 = arith.addf %3, %5 : vector<2x32xf32>
    %c0_5 = arith.constant 0 : index
    %c0_6 = arith.constant 0 : index
    %7 = vector.load %arg3[%c0_5, %c0_6] : memref<1x32xf32, #tpu.memory_space<vmem>>, vector<1x32xf32>
    %c0_7 = arith.constant 0 : index
    %c0_8 = arith.constant 0 : index
    %8 = vector.load %arg4[%c0_7, %c0_8] : memref<1x32xf32, #tpu.memory_space<vmem>>, vector<1x32xf32>
    %cst_9 = arith.constant dense<0.000000e+00> : vector<2xf32>
    %9 = vector.multi_reduction <add>, %6, %cst_9 [1] : vector<2x32xf32> to vector<2xf32>
    %10 = vector.shape_cast %9 : vector<2xf32> to vector<2x1xf32>
    %cst_10 = arith.constant 3.200000e+01 : f32
    %11 = vector.broadcast %cst_10 : f32 to vector<2x1xf32>
    %12 = arith.divf %10, %11 : vector<2x1xf32>
    %13 = vector.broadcast %12 : vector<2x1xf32> to vector<2x32xf32>
    %14 = arith.subf %6, %13 : vector<2x32xf32>
    %15 = arith.mulf %14, %14 : vector<2x32xf32>
    %cst_11 = arith.constant dense<0.000000e+00> : vector<2xf32>
    %16 = vector.multi_reduction <add>, %15, %cst_11 [1] : vector<2x32xf32> to vector<2xf32>
    %17 = vector.shape_cast %16 : vector<2xf32> to vector<2x1xf32>
    %cst_12 = arith.constant 3.200000e+01 : f32
    %18 = vector.broadcast %cst_12 : f32 to vector<2x1xf32>
    %19 = arith.divf %17, %18 : vector<2x1xf32>
    %cst_13 = arith.constant 9.99999974E-6 : f32
    %20 = vector.broadcast %cst_13 : f32 to vector<2x1xf32>
    %21 = arith.addf %19, %20 : vector<2x1xf32>
    %22 = math.rsqrt %21 : vector<2x1xf32>
    %23 = vector.broadcast %22 : vector<2x1xf32> to vector<2x32xf32>
    %24 = arith.mulf %14, %23 : vector<2x32xf32>
    %25 = vector.broadcast %7 : vector<1x32xf32> to vector<2x32xf32>
    %26 = arith.mulf %24, %25 : vector<2x32xf32>
    %27 = vector.broadcast %8 : vector<1x32xf32> to vector<2x32xf32>
    %28 = arith.addf %26, %27 : vector<2x32xf32>
    %29 = arith.truncf %28 : vector<2x32xf32> to vector<2x32xbf16>
    %c0_14 = arith.constant 0 : index
    %c0_15 = arith.constant 0 : index
    %c0_16 = arith.constant 0 : index
    %30 = vector.load %arg5[%c0_14, %c0_15, %c0_16] : memref<2x32x32xbf16, #tpu.memory_space<vmem>>, vector<1x32x32xbf16>
    %31 = vector.shape_cast %30 : vector<1x32x32xbf16> to vector<32x32xbf16>
    %cst_17 = arith.constant dense<0.000000e+00> : vector<2x32xf32>
    %32 = tpu.matmul %29, %31, %cst_17 {dimension_numbers = #tpu.dot_dimension_numbers<[1], [0], [0], [1], [0, 0, 1, 1], [], []>} : vector<2x32xbf16>, vector<32x32xbf16>, vector<2x32xf32> -> vector<2x32xf32>
    %c0_18 = arith.constant 0 : index
    %c0_19 = arith.constant 0 : index
    %c0_20 = arith.constant 0 : index
    %33 = vector.load %arg6[%c0_18, %c0_19, %c0_20] : memref<2x1x32xf32, #tpu.memory_space<vmem>>, vector<1x1x32xf32>
    %34 = vector.shape_cast %33 : vector<1x1x32xf32> to vector<1x32xf32>
    %35 = vector.broadcast %34 : vector<1x32xf32> to vector<2x32xf32>
    %36 = arith.addf %32, %35 : vector<2x32xf32>
    %37 = arith.truncf %36 : vector<2x32xf32> to vector<2x32xbf16>
    %c0_21 = arith.constant 0 : index
    %c0_22 = arith.constant 0 : index
    %c0_23 = arith.constant 0 : index
    %38 = vector.load %arg7[%c0_21, %c0_22, %c0_23] : memref<2x32x32xbf16, #tpu.memory_space<vmem>>, vector<1x32x32xbf16>
    %39 = vector.shape_cast %38 : vector<1x32x32xbf16> to vector<32x32xbf16>
    %cst_24 = arith.constant dense<0.000000e+00> : vector<2x32xf32>
    %40 = tpu.matmul %37, %39, %cst_24 {dimension_numbers = #tpu.dot_dimension_numbers<[1], [0], [0], [1], [0, 0, 1, 1], [], []>} : vector<2x32xbf16>, vector<32x32xbf16>, vector<2x32xf32> -> vector<2x32xf32>
    %c0_25 = arith.constant 0 : index
    %c0_26 = arith.constant 0 : index
    %c0_27 = arith.constant 0 : index
    %41 = vector.load %arg8[%c0_25, %c0_26, %c0_27] : memref<2x1x32xf32, #tpu.memory_space<vmem>>, vector<1x1x32xf32>
    %42 = vector.shape_cast %41 : vector<1x1x32xf32> to vector<1x32xf32>
    %43 = vector.broadcast %42 : vector<1x32xf32> to vector<2x32xf32>
    %44 = arith.addf %40, %43 : vector<2x32xf32>
    %c0_28 = arith.constant 0 : index
    %c0_29 = arith.constant 0 : index
    %c0_30 = arith.constant 0 : index
    %45 = vector.load %arg9[%c0_28, %c0_29, %c0_30] : memref<2x2x32xf32, #tpu.memory_space<vmem>>, vector<1x2x32xf32>
    %46 = vector.shape_cast %45 : vector<1x2x32xf32> to vector<2x32xf32>
    %47 = vector.shape_cast %44 : vector<2x32xf32> to vector<1x2x32xf32>
    tpu.vector_store %arg9[%c0_28, %c0_29, %c0_30], %47 {strides = array<i32>} : memref<2x2x32xf32, #tpu.memory_space<vmem>>, vector<1x2x32xf32>,
    %c1 = arith.constant 1 : index
    %c0_31 = arith.constant 0 : index
    %c0_32 = arith.constant 0 : index
    %48 = vector.load %arg5[%c1, %c0_31, %c0_32] : memref<2x32x32xbf16, #tpu.memory_space<vmem>>, vector<1x32x32xbf16>
    %49 = vector.shape_cast %48 : vector<1x32x32xbf16> to vector<32x32xbf16>
    %cst_33 = arith.constant dense<0.000000e+00> : vector<2x32xf32>
    %50 = tpu.matmul %29, %49, %cst_33 {dimension_numbers = #tpu.dot_dimension_numbers<[1], [0], [0], [1], [0, 0, 1, 1], [], []>} : vector<2x32xbf16>, vector<32x32xbf16>, vector<2x32xf32> -> vector<2x32xf32>
    %c1_34 = arith.constant 1 : index
    %c0_35 = arith.constant 0 : index
    %c0_36 = arith.constant 0 : index
    %51 = vector.load %arg6[%c1_34, %c0_35, %c0_36] : memref<2x1x32xf32, #tpu.memory_space<vmem>>, vector<1x1x32xf32>
    %52 = vector.shape_cast %51 : vector<1x1x32xf32> to vector<1x32xf32>
    %53 = vector.broadcast %52 : vector<1x32xf32> to vector<2x32xf32>
    %54 = arith.addf %50, %53 : vector<2x32xf32>
    %55 = arith.truncf %54 : vector<2x32xf32> to vector<2x32xbf16>
    %c1_37 = arith.constant 1 : index
    %c0_38 = arith.constant 0 : index
    %c0_39 = arith.constant 0 : index
    %56 = vector.load %arg7[%c1_37, %c0_38, %c0_39] : memref<2x32x32xbf16, #tpu.memory_space<vmem>>, vector<1x32x32xbf16>
    %57 = vector.shape_cast %56 : vector<1x32x32xbf16> to vector<32x32xbf16>
    %cst_40 = arith.constant dense<0.000000e+00> : vector<2x32xf32>
    %58 = tpu.matmul %55, %57, %cst_40 {dimension_numbers = #tpu.dot_dimension_numbers<[1], [0], [0], [1], [0, 0, 1, 1], [], []>} : vector<2x32xbf16>, vector<32x32xbf16>, vector<2x32xf32> -> vector<2x32xf32>
    %c1_41 = arith.constant 1 : index
    %c0_42 = arith.constant 0 : index
    %c0_43 = arith.constant 0 : index
    %59 = vector.load %arg8[%c1_41, %c0_42, %c0_43] : memref<2x1x32xf32, #tpu.memory_space<vmem>>, vector<1x1x32xf32>
    %60 = vector.shape_cast %59 : vector<1x1x32xf32> to vector<1x32xf32>
    %61 = vector.broadcast %60 : vector<1x32xf32> to vector<2x32xf32>
    %62 = arith.addf %58, %61 : vector<2x32xf32>
    %c1_44 = arith.constant 1 : index
    %c0_45 = arith.constant 0 : index
    %c0_46 = arith.constant 0 : index
    %63 = vector.load %arg9[%c1_44, %c0_45, %c0_46] : memref<2x2x32xf32, #tpu.memory_space<vmem>>, vector<1x2x32xf32>
    %64 = vector.shape_cast %63 : vector<1x2x32xf32> to vector<2x32xf32>
    %65 = vector.shape_cast %62 : vector<2x32xf32> to vector<1x2x32xf32>
    tpu.vector_store %arg9[%c1_44, %c0_45, %c0_46], %65 {strides = array<i32>} : memref<2x2x32xf32, #tpu.memory_space<vmem>>, vector<1x2x32xf32>,
    return
  }
}

module attributes {stable_mosaic.version = 11 : i64} {
  func.func @_final_proj_kernel(%arg0: i32, %arg1: i32, %arg2: memref<16x32xf32, #tpu.memory_space<vmem>>, %arg3: memref<32x32xbf16, #tpu.memory_space<vmem>>, %arg4: memref<1x32xf32, #tpu.memory_space<vmem>>, %arg5: memref<16x32xf32, #tpu.memory_space<vmem>>) attributes {dimension_semantics = [#tpu.dimension_semantics<parallel>, #tpu.dimension_semantics<parallel>], iteration_bounds = array<i64: 1, 1>, scalar_prefetch = 0 : i64, scratch_operands = 0 : i64, tpu.core_type = #tpu.core_type<tc>, window_params = [{transform_indices = @transform_0, window_bounds = array<i64: 16, 32>}, {transform_indices = @transform_1, window_bounds = array<i64: 32, 32>}, {transform_indices = @transform_2, window_bounds = array<i64: 1, 32>}, {transform_indices = @transform_3, window_bounds = array<i64: 16, 32>}]} {
    %c0 = arith.constant 0 : index
    %c0_0 = arith.constant 0 : index
    %0 = vector.load %arg2[%c0, %c0_0] : memref<16x32xf32, #tpu.memory_space<vmem>>, vector<16x32xf32>
    %1 = arith.truncf %0 : vector<16x32xf32> to vector<16x32xbf16>
    %c0_1 = arith.constant 0 : index
    %c0_2 = arith.constant 0 : index
    %2 = vector.load %arg3[%c0_1, %c0_2] : memref<32x32xbf16, #tpu.memory_space<vmem>>, vector<32x32xbf16>
    %cst = arith.constant dense<0.000000e+00> : vector<16x32xf32>
    %3 = tpu.matmul %1, %2, %cst {dimension_numbers = #tpu.dot_dimension_numbers<[1], [0], [0], [1], [0, 0, 1, 1], [], []>} : vector<16x32xbf16>, vector<32x32xbf16>, vector<16x32xf32> -> vector<16x32xf32>
    %c0_3 = arith.constant 0 : index
    %c0_4 = arith.constant 0 : index
    %4 = vector.load %arg4[%c0_3, %c0_4] : memref<1x32xf32, #tpu.memory_space<vmem>>, vector<1x32xf32>
    %5 = vector.broadcast %4 : vector<1x32xf32> to vector<16x32xf32>
    %6 = arith.addf %3, %5 : vector<16x32xf32>
    %c0_5 = arith.constant 0 : index
    %c0_6 = arith.constant 0 : index
    %7 = vector.load %arg5[%c0_5, %c0_6] : memref<16x32xf32, #tpu.memory_space<vmem>>, vector<16x32xf32>
    tpu.vector_store %arg5[%c0_5, %c0_6], %6 {strides = array<i32>} : memref<16x32xf32, #tpu.memory_space<vmem>>, vector<16x32xf32>,
    return
  }
  func.func @transform_0(%arg0: i32, %arg1: i32) -> (i32, i32) {
    %c0_i32 = arith.constant 0 : i32
    %c0_i32_0 = arith.constant 0 : i32
    return %arg0, %c0_i32 : i32, i32
  }
  func.func @transform_1(%arg0: i32, %arg1: i32) -> (i32, i32) {
    %c0_i32 = arith.constant 0 : i32
    %c0_i32_0 = arith.constant 0 : i32
    return %c0_i32, %arg1 : i32, i32
  }
  func.func @transform_2(%arg0: i32, %arg1: i32) -> (i32, i32) {
    %c0_i32 = arith.constant 0 : i32
    %c0_i32_0 = arith.constant 0 : i32
    return %c0_i32, %arg1 : i32, i32
  }
  func.func @transform_3(%arg0: i32, %arg1: i32) -> (i32, i32) {
    %c0_i32 = arith.constant 0 : i32
    return %arg0, %arg1 : i32, i32
  }
}

module attributes {stable_mosaic.version = 11 : i64} {
  func.func @_decoder_stack_kernel(%arg0: i32, %arg1: i32, %arg2: memref<1x8x32xf32, #tpu.memory_space<vmem>>, %arg3: memref<1x8x32xf32, #tpu.memory_space<vmem>>, %arg4: memref<1x32xf32, #tpu.memory_space<vmem>>, %arg5: memref<1x32xf32, #tpu.memory_space<vmem>>, %arg6: memref<1x1x1x32xf32, #tpu.memory_space<vmem>>, %arg7: memref<1x4x32x8xbf16, #tpu.memory_space<vmem>>, %arg8: memref<1x4x32x8xbf16, #tpu.memory_space<vmem>>, %arg9: memref<1x4x32x8xbf16, #tpu.memory_space<vmem>>, %arg10: memref<1x4x1x8xf32, #tpu.memory_space<vmem>>, %arg11: memref<1x4x1x8xf32, #tpu.memory_space<vmem>>, %arg12: memref<1x4x1x8xf32, #tpu.memory_space<vmem>>, %arg13: memref<1x4x8x32xbf16, #tpu.memory_space<vmem>>, %arg14: memref<1x1x32xf32, #tpu.memory_space<vmem>>, %arg15: memref<1x1x32xf32, #tpu.memory_space<vmem>>, %arg16: memref<1x1x32xf32, #tpu.memory_space<vmem>>, %arg17: memref<1x1x32xf32, #tpu.memory_space<vmem>>, %arg18: memref<1x1x32xf32, #tpu.memory_space<vmem>>, %arg19: memref<1x32x64xbf16, #tpu.memory_space<vmem>>, %arg20: memref<1x1x64xf32, #tpu.memory_space<vmem>>, %arg21: memref<1x64x32xbf16, #tpu.memory_space<vmem>>, %arg22: memref<1x1x32xf32, #tpu.memory_space<vmem>>, %arg23: memref<1x1x32xf32, #tpu.memory_space<vmem>>, %arg24: memref<1x1x32xf32, #tpu.memory_space<vmem>>, %arg25: memref<1x8x32xf32, #tpu.memory_space<vmem>>) attributes {dimension_semantics = [#tpu.dimension_semantics<parallel>, #tpu.dimension_semantics<arbitrary>], iteration_bounds = array<i64: 2, 2>, scalar_prefetch = 0 : i64, scratch_operands = 0 : i64, tpu.core_type = #tpu.core_type<tc>, window_params = [{transform_indices = @transform_0, window_bounds = array<i64: 1, 8, 32>}, {pipeline_mode = #tpu.pipeline_mode<synchronous>, transform_indices = @transform_1, window_bounds = array<i64: 1, 8, 32>}, {pipeline_mode = #tpu.pipeline_mode<synchronous>, transform_indices = @transform_2, window_bounds = array<i64: 1, 32>}, {pipeline_mode = #tpu.pipeline_mode<synchronous>, transform_indices = @transform_3, window_bounds = array<i64: 1, 32>}, {transform_indices = @transform_4, window_bounds = array<i64: 1, 1, 1, 32>}, {transform_indices = @transform_5, window_bounds = array<i64: 1, 4, 32, 8>}, {transform_indices = @transform_6, window_bounds = array<i64: 1, 4, 32, 8>}, {transform_indices = @transform_7, window_bounds = array<i64: 1, 4, 32, 8>}, {transform_indices = @transform_8, window_bounds = array<i64: 1, 4, 1, 8>}, {transform_indices = @transform_9, window_bounds = array<i64: 1, 4, 1, 8>}, {transform_indices = @transform_10, window_bounds = array<i64: 1, 4, 1, 8>}, {transform_indices = @transform_11, window_bounds = array<i64: 1, 4, 8, 32>}, {transform_indices = @transform_12, window_bounds = array<i64: 1, 1, 32>}, {transform_indices = @transform_13, window_bounds = array<i64: 1, 1, 32>}, {transform_indices = @transform_14, window_bounds = array<i64: 1, 1, 32>}, {transform_indices = @transform_15, window_bounds = array<i64: 1, 1, 32>}, {transform_indices = @transform_16, window_bounds = array<i64: 1, 1, 32>}, {transform_indices = @transform_17, window_bounds = array<i64: 1, 32, 64>}, {transform_indices = @transform_18, window_bounds = array<i64: 1, 1, 64>}, {transform_indices = @transform_19, window_bounds = array<i64: 1, 64, 32>}, {transform_indices = @transform_20, window_bounds = array<i64: 1, 1, 32>}, {transform_indices = @transform_21, window_bounds = array<i64: 1, 1, 32>}, {transform_indices = @transform_22, window_bounds = array<i64: 1, 1, 32>}, {transform_indices = @transform_23, window_bounds = array<i64: 1, 8, 32>}]} {
    %c0_i32 = arith.constant 0 : i32
    %0 = arith.cmpi eq, %arg1, %c0_i32 : i32
    %1 = arith.extui %0 : i1 to i32
    %c0_i32_0 = arith.constant 0 : i32
    %2 = arith.cmpi ne, %1, %c0_i32_0 : i32
    scf.if %2 {
      %c0_208 = arith.constant 0 : index
      %c0_209 = arith.constant 0 : index
      %c0_210 = arith.constant 0 : index
      %296 = vector.load %arg2[%c0_208, %c0_209, %c0_210] : memref<1x8x32xf32, #tpu.memory_space<vmem>>, vector<1x8x32xf32>
      %297 = vector.shape_cast %296 : vector<1x8x32xf32> to vector<8x32xf32>
      %c0_211 = arith.constant 0 : index
      %c0_212 = arith.constant 0 : index
      %c0_213 = arith.constant 0 : index
      %298 = vector.load %arg3[%c0_211, %c0_212, %c0_213] : memref<1x8x32xf32, #tpu.memory_space<vmem>>, vector<1x8x32xf32>
      %299 = vector.shape_cast %298 : vector<1x8x32xf32> to vector<8x32xf32>
      %300 = arith.addf %297, %299 : vector<8x32xf32>
      %c0_214 = arith.constant 0 : index
      %c0_215 = arith.constant 0 : index
      %301 = vector.load %arg4[%c0_214, %c0_215] : memref<1x32xf32, #tpu.memory_space<vmem>>, vector<1x32xf32>
      %c0_216 = arith.constant 0 : index
      %c0_217 = arith.constant 0 : index
      %302 = vector.load %arg5[%c0_216, %c0_217] : memref<1x32xf32, #tpu.memory_space<vmem>>, vector<1x32xf32>
      %cst_218 = arith.constant dense<0.000000e+00> : vector<8xf32>
      %303 = vector.multi_reduction <add>, %300, %cst_218 [1] : vector<8x32xf32> to vector<8xf32>
      %304 = vector.shape_cast %303 : vector<8xf32> to vector<8x1xf32>
      %cst_219 = arith.constant 3.200000e+01 : f32
      %305 = vector.broadcast %cst_219 : f32 to vector<8x1xf32>
      %306 = arith.divf %304, %305 : vector<8x1xf32>
      %307 = vector.broadcast %306 : vector<8x1xf32> to vector<8x32xf32>
      %308 = arith.subf %300, %307 : vector<8x32xf32>
      %309 = arith.mulf %308, %308 : vector<8x32xf32>
      %cst_220 = arith.constant dense<0.000000e+00> : vector<8xf32>
      %310 = vector.multi_reduction <add>, %309, %cst_220 [1] : vector<8x32xf32> to vector<8xf32>
      %311 = vector.shape_cast %310 : vector<8xf32> to vector<8x1xf32>
      %cst_221 = arith.constant 3.200000e+01 : f32
      %312 = vector.broadcast %cst_221 : f32 to vector<8x1xf32>
      %313 = arith.divf %311, %312 : vector<8x1xf32>
      %cst_222 = arith.constant 9.99999974E-6 : f32
      %314 = vector.broadcast %cst_222 : f32 to vector<8x1xf32>
      %315 = arith.addf %313, %314 : vector<8x1xf32>
      %316 = math.rsqrt %315 : vector<8x1xf32>
      %317 = vector.broadcast %316 : vector<8x1xf32> to vector<8x32xf32>
      %318 = arith.mulf %308, %317 : vector<8x32xf32>
      %319 = vector.broadcast %301 : vector<1x32xf32> to vector<8x32xf32>
      %320 = arith.mulf %318, %319 : vector<8x32xf32>
      %321 = vector.broadcast %302 : vector<1x32xf32> to vector<8x32xf32>
      %322 = arith.addf %320, %321 : vector<8x32xf32>
      %c0_223 = arith.constant 0 : index
      %c0_224 = arith.constant 0 : index
      %c0_225 = arith.constant 0 : index
      %323 = vector.load %arg25[%c0_223, %c0_224, %c0_225] : memref<1x8x32xf32, #tpu.memory_space<vmem>>, vector<1x8x32xf32>
      %324 = vector.shape_cast %323 : vector<1x8x32xf32> to vector<8x32xf32>
      %325 = vector.shape_cast %322 : vector<8x32xf32> to vector<1x8x32xf32>
      tpu.vector_store %arg25[%c0_223, %c0_224, %c0_225], %325 {strides = array<i32>} : memref<1x8x32xf32, #tpu.memory_space<vmem>>, vector<1x8x32xf32>,
    } else {
    }
    %c0 = arith.constant 0 : index
    %c0_1 = arith.constant 0 : index
    %c0_2 = arith.constant 0 : index
    %3 = vector.load %arg25[%c0, %c0_1, %c0_2] : memref<1x8x32xf32, #tpu.memory_space<vmem>>, vector<1x8x32xf32>
    %4 = vector.shape_cast %3 : vector<1x8x32xf32> to vector<8x32xf32>
    %5 = arith.truncf %4 : vector<8x32xf32> to vector<8x32xbf16>
    %6 = tpu.iota {dimensions = array<i32: 0>} : vector<8x8xi32>
    %7 = tpu.iota {dimensions = array<i32: 1>} : vector<8x8xi32>
    %8 = arith.cmpi sgt, %7, %6 : vector<8x8xi32>
    %cst = arith.constant -1.000000e+30 : f32
    %cst_3 = arith.constant 0.000000e+00 : f32
    %9 = vector.broadcast %cst : f32 to vector<8x8xf32>
    %10 = vector.broadcast %cst_3 : f32 to vector<8x8xf32>
    %11 = arith.select %8, %9, %10 : vector<8x8xi1>, vector<8x8xf32>
    %cst_4 = arith.constant 0.000000e+00 : f32
    %12 = vector.broadcast %cst_4 : f32 to vector<8x32xf32>
    %c0_5 = arith.constant 0 : index
    %c0_6 = arith.constant 0 : index
    %c0_7 = arith.constant 0 : index
    %c0_8 = arith.constant 0 : index
    %13 = vector.load %arg7[%c0_5, %c0_6, %c0_7, %c0_8] : memref<1x4x32x8xbf16, #tpu.memory_space<vmem>>, vector<1x1x32x8xbf16>
    %14 = vector.shape_cast %13 : vector<1x1x32x8xbf16> to vector<32x8xbf16>
    %cst_9 = arith.constant dense<0.000000e+00> : vector<8x8xf32>
    %15 = tpu.matmul %5, %14, %cst_9 {dimension_numbers = #tpu.dot_dimension_numbers<[1], [0], [0], [1], [0, 0, 1, 1], [], []>} : vector<8x32xbf16>, vector<32x8xbf16>, vector<8x8xf32> -> vector<8x8xf32>
    %c0_10 = arith.constant 0 : index
    %c0_11 = arith.constant 0 : index
    %c0_12 = arith.constant 0 : index
    %c0_13 = arith.constant 0 : index
    %16 = vector.load %arg10[%c0_10, %c0_11, %c0_12, %c0_13] : memref<1x4x1x8xf32, #tpu.memory_space<vmem>>, vector<1x1x1x8xf32>
    %17 = vector.shape_cast %16 : vector<1x1x1x8xf32> to vector<1x8xf32>
    %18 = vector.broadcast %17 : vector<1x8xf32> to vector<8x8xf32>
    %19 = arith.addf %15, %18 : vector<8x8xf32>
    %c0_14 = arith.constant 0 : index
    %c0_15 = arith.constant 0 : index
    %c0_16 = arith.constant 0 : index
    %c0_17 = arith.constant 0 : index
    %20 = vector.load %arg8[%c0_14, %c0_15, %c0_16, %c0_17] : memref<1x4x32x8xbf16, #tpu.memory_space<vmem>>, vector<1x1x32x8xbf16>
    %21 = vector.shape_cast %20 : vector<1x1x32x8xbf16> to vector<32x8xbf16>
    %cst_18 = arith.constant dense<0.000000e+00> : vector<8x8xf32>
    %22 = tpu.matmul %5, %21, %cst_18 {dimension_numbers = #tpu.dot_dimension_numbers<[1], [0], [0], [1], [0, 0, 1, 1], [], []>} : vector<8x32xbf16>, vector<32x8xbf16>, vector<8x8xf32> -> vector<8x8xf32>
    %c0_19 = arith.constant 0 : index
    %c0_20 = arith.constant 0 : index
    %c0_21 = arith.constant 0 : index
    %c0_22 = arith.constant 0 : index
    %23 = vector.load %arg11[%c0_19, %c0_20, %c0_21, %c0_22] : memref<1x4x1x8xf32, #tpu.memory_space<vmem>>, vector<1x1x1x8xf32>
    %24 = vector.shape_cast %23 : vector<1x1x1x8xf32> to vector<1x8xf32>
    %25 = vector.broadcast %24 : vector<1x8xf32> to vector<8x8xf32>
    %26 = arith.addf %22, %25 : vector<8x8xf32>
    %c0_23 = arith.constant 0 : index
    %c0_24 = arith.constant 0 : index
    %c0_25 = arith.constant 0 : index
    %c0_26 = arith.constant 0 : index
    %27 = vector.load %arg9[%c0_23, %c0_24, %c0_25, %c0_26] : memref<1x4x32x8xbf16, #tpu.memory_space<vmem>>, vector<1x1x32x8xbf16>
    %28 = vector.shape_cast %27 : vector<1x1x32x8xbf16> to vector<32x8xbf16>
    %cst_27 = arith.constant dense<0.000000e+00> : vector<8x8xf32>
    %29 = tpu.matmul %5, %28, %cst_27 {dimension_numbers = #tpu.dot_dimension_numbers<[1], [0], [0], [1], [0, 0, 1, 1], [], []>} : vector<8x32xbf16>, vector<32x8xbf16>, vector<8x8xf32> -> vector<8x8xf32>
    %c0_28 = arith.constant 0 : index
    %c0_29 = arith.constant 0 : index
    %c0_30 = arith.constant 0 : index
    %c0_31 = arith.constant 0 : index
    %30 = vector.load %arg12[%c0_28, %c0_29, %c0_30, %c0_31] : memref<1x4x1x8xf32, #tpu.memory_space<vmem>>, vector<1x1x1x8xf32>
    %31 = vector.shape_cast %30 : vector<1x1x1x8xf32> to vector<1x8xf32>
    %32 = vector.broadcast %31 : vector<1x8xf32> to vector<8x8xf32>
    %33 = arith.addf %29, %32 : vector<8x8xf32>
    %34 = arith.truncf %19 : vector<8x8xf32> to vector<8x8xbf16>
    %35 = arith.truncf %26 : vector<8x8xf32> to vector<8x8xbf16>
    %cst_32 = arith.constant dense<0.000000e+00> : vector<8x8xf32>
    %36 = tpu.matmul %34, %35, %cst_32 {dimension_numbers = #tpu.dot_dimension_numbers<[1], [1], [0], [0], [0, 0, 1, 0], [], []>} : vector<8x8xbf16>, vector<8x8xbf16>, vector<8x8xf32> -> vector<8x8xf32>
    %cst_33 = arith.constant 0.353553385 : f32
    %37 = vector.broadcast %cst_33 : f32 to vector<8x8xf32>
    %38 = arith.mulf %36, %37 : vector<8x8xf32>
    %39 = arith.addf %38, %11 : vector<8x8xf32>
    %cst_34 = arith.constant dense<0xFF800000> : vector<8xf32>
    %40 = vector.multi_reduction <maximumf>, %39, %cst_34 [1] : vector<8x8xf32> to vector<8xf32>
    %41 = vector.shape_cast %40 : vector<8xf32> to vector<8x1xf32>
    %42 = vector.broadcast %41 : vector<8x1xf32> to vector<8x8xf32>
    %43 = arith.subf %39, %42 : vector<8x8xf32>
    %44 = math.exp %43 : vector<8x8xf32>
    %cst_35 = arith.constant dense<0.000000e+00> : vector<8xf32>
    %45 = vector.multi_reduction <add>, %44, %cst_35 [1] : vector<8x8xf32> to vector<8xf32>
    %46 = vector.shape_cast %45 : vector<8xf32> to vector<8x1xf32>
    %47 = tpu.reciprocal %46 {approx = true} : vector<8x1xf32> -> vector<8x1xf32>
    %48 = vector.broadcast %47 : vector<8x1xf32> to vector<8x8xf32>
    %49 = arith.mulf %44, %48 : vector<8x8xf32>
    %50 = arith.truncf %49 : vector<8x8xf32> to vector<8x8xbf16>
    %51 = arith.truncf %33 : vector<8x8xf32> to vector<8x8xbf16>
    %cst_36 = arith.constant dense<0.000000e+00> : vector<8x8xf32>
    %52 = tpu.matmul %50, %51, %cst_36 {dimension_numbers = #tpu.dot_dimension_numbers<[1], [0], [0], [1], [0, 0, 1, 1], [], []>} : vector<8x8xbf16>, vector<8x8xbf16>, vector<8x8xf32> -> vector<8x8xf32>
    %53 = arith.truncf %52 : vector<8x8xf32> to vector<8x8xbf16>
    %c0_37 = arith.constant 0 : index
    %c0_38 = arith.constant 0 : index
    %c0_39 = arith.constant 0 : index
    %c0_40 = arith.constant 0 : index
    %54 = vector.load %arg13[%c0_37, %c0_38, %c0_39, %c0_40] : memref<1x4x8x32xbf16, #tpu.memory_space<vmem>>, vector<1x1x8x32xbf16>
    %55 = vector.shape_cast %54 : vector<1x1x8x32xbf16> to vector<8x32xbf16>
    %cst_41 = arith.constant dense<0.000000e+00> : vector<8x32xf32>
    %56 = tpu.matmul %53, %55, %cst_41 {dimension_numbers = #tpu.dot_dimension_numbers<[1], [0], [0], [1], [0, 0, 1, 1], [], []>} : vector<8x8xbf16>, vector<8x32xbf16>, vector<8x32xf32> -> vector<8x32xf32>
    %57 = arith.addf %12, %56 : vector<8x32xf32>
    %c0_42 = arith.constant 0 : index
    %c1 = arith.constant 1 : index
    %c0_43 = arith.constant 0 : index
    %c0_44 = arith.constant 0 : index
    %58 = vector.load %arg7[%c0_42, %c1, %c0_43, %c0_44] : memref<1x4x32x8xbf16, #tpu.memory_space<vmem>>, vector<1x1x32x8xbf16>
    %59 = vector.shape_cast %58 : vector<1x1x32x8xbf16> to vector<32x8xbf16>
    %cst_45 = arith.constant dense<0.000000e+00> : vector<8x8xf32>
    %60 = tpu.matmul %5, %59, %cst_45 {dimension_numbers = #tpu.dot_dimension_numbers<[1], [0], [0], [1], [0, 0, 1, 1], [], []>} : vector<8x32xbf16>, vector<32x8xbf16>, vector<8x8xf32> -> vector<8x8xf32>
    %c0_46 = arith.constant 0 : index
    %c1_47 = arith.constant 1 : index
    %c0_48 = arith.constant 0 : index
    %c0_49 = arith.constant 0 : index
    %61 = vector.load %arg10[%c0_46, %c1_47, %c0_48, %c0_49] : memref<1x4x1x8xf32, #tpu.memory_space<vmem>>, vector<1x1x1x8xf32>
    %62 = vector.shape_cast %61 : vector<1x1x1x8xf32> to vector<1x8xf32>
    %63 = vector.broadcast %62 : vector<1x8xf32> to vector<8x8xf32>
    %64 = arith.addf %60, %63 : vector<8x8xf32>
    %c0_50 = arith.constant 0 : index
    %c1_51 = arith.constant 1 : index
    %c0_52 = arith.constant 0 : index
    %c0_53 = arith.constant 0 : index
    %65 = vector.load %arg8[%c0_50, %c1_51, %c0_52, %c0_53] : memref<1x4x32x8xbf16, #tpu.memory_space<vmem>>, vector<1x1x32x8xbf16>
    %66 = vector.shape_cast %65 : vector<1x1x32x8xbf16> to vector<32x8xbf16>
    %cst_54 = arith.constant dense<0.000000e+00> : vector<8x8xf32>
    %67 = tpu.matmul %5, %66, %cst_54 {dimension_numbers = #tpu.dot_dimension_numbers<[1], [0], [0], [1], [0, 0, 1, 1], [], []>} : vector<8x32xbf16>, vector<32x8xbf16>, vector<8x8xf32> -> vector<8x8xf32>
    %c0_55 = arith.constant 0 : index
    %c1_56 = arith.constant 1 : index
    %c0_57 = arith.constant 0 : index
    %c0_58 = arith.constant 0 : index
    %68 = vector.load %arg11[%c0_55, %c1_56, %c0_57, %c0_58] : memref<1x4x1x8xf32, #tpu.memory_space<vmem>>, vector<1x1x1x8xf32>
    %69 = vector.shape_cast %68 : vector<1x1x1x8xf32> to vector<1x8xf32>
    %70 = vector.broadcast %69 : vector<1x8xf32> to vector<8x8xf32>
    %71 = arith.addf %67, %70 : vector<8x8xf32>
    %c0_59 = arith.constant 0 : index
    %c1_60 = arith.constant 1 : index
    %c0_61 = arith.constant 0 : index
    %c0_62 = arith.constant 0 : index
    %72 = vector.load %arg9[%c0_59, %c1_60, %c0_61, %c0_62] : memref<1x4x32x8xbf16, #tpu.memory_space<vmem>>, vector<1x1x32x8xbf16>
    %73 = vector.shape_cast %72 : vector<1x1x32x8xbf16> to vector<32x8xbf16>
    %cst_63 = arith.constant dense<0.000000e+00> : vector<8x8xf32>
    %74 = tpu.matmul %5, %73, %cst_63 {dimension_numbers = #tpu.dot_dimension_numbers<[1], [0], [0], [1], [0, 0, 1, 1], [], []>} : vector<8x32xbf16>, vector<32x8xbf16>, vector<8x8xf32> -> vector<8x8xf32>
    %c0_64 = arith.constant 0 : index
    %c1_65 = arith.constant 1 : index
    %c0_66 = arith.constant 0 : index
    %c0_67 = arith.constant 0 : index
    %75 = vector.load %arg12[%c0_64, %c1_65, %c0_66, %c0_67] : memref<1x4x1x8xf32, #tpu.memory_space<vmem>>, vector<1x1x1x8xf32>
    %76 = vector.shape_cast %75 : vector<1x1x1x8xf32> to vector<1x8xf32>
    %77 = vector.broadcast %76 : vector<1x8xf32> to vector<8x8xf32>
    %78 = arith.addf %74, %77 : vector<8x8xf32>
    %79 = arith.truncf %64 : vector<8x8xf32> to vector<8x8xbf16>
    %80 = arith.truncf %71 : vector<8x8xf32> to vector<8x8xbf16>
    %cst_68 = arith.constant dense<0.000000e+00> : vector<8x8xf32>
    %81 = tpu.matmul %79, %80, %cst_68 {dimension_numbers = #tpu.dot_dimension_numbers<[1], [1], [0], [0], [0, 0, 1, 0], [], []>} : vector<8x8xbf16>, vector<8x8xbf16>, vector<8x8xf32> -> vector<8x8xf32>
    %cst_69 = arith.constant 0.353553385 : f32
    %82 = vector.broadcast %cst_69 : f32 to vector<8x8xf32>
    %83 = arith.mulf %81, %82 : vector<8x8xf32>
    %84 = arith.addf %83, %11 : vector<8x8xf32>
    %cst_70 = arith.constant dense<0xFF800000> : vector<8xf32>
    %85 = vector.multi_reduction <maximumf>, %84, %cst_70 [1] : vector<8x8xf32> to vector<8xf32>
    %86 = vector.shape_cast %85 : vector<8xf32> to vector<8x1xf32>
    %87 = vector.broadcast %86 : vector<8x1xf32> to vector<8x8xf32>
    %88 = arith.subf %84, %87 : vector<8x8xf32>
    %89 = math.exp %88 : vector<8x8xf32>
    %cst_71 = arith.constant dense<0.000000e+00> : vector<8xf32>
    %90 = vector.multi_reduction <add>, %89, %cst_71 [1] : vector<8x8xf32> to vector<8xf32>
    %91 = vector.shape_cast %90 : vector<8xf32> to vector<8x1xf32>
    %92 = tpu.reciprocal %91 {approx = true} : vector<8x1xf32> -> vector<8x1xf32>
    %93 = vector.broadcast %92 : vector<8x1xf32> to vector<8x8xf32>
    %94 = arith.mulf %89, %93 : vector<8x8xf32>
    %95 = arith.truncf %94 : vector<8x8xf32> to vector<8x8xbf16>
    %96 = arith.truncf %78 : vector<8x8xf32> to vector<8x8xbf16>
    %cst_72 = arith.constant dense<0.000000e+00> : vector<8x8xf32>
    %97 = tpu.matmul %95, %96, %cst_72 {dimension_numbers = #tpu.dot_dimension_numbers<[1], [0], [0], [1], [0, 0, 1, 1], [], []>} : vector<8x8xbf16>, vector<8x8xbf16>, vector<8x8xf32> -> vector<8x8xf32>
    %98 = arith.truncf %97 : vector<8x8xf32> to vector<8x8xbf16>
    %c0_73 = arith.constant 0 : index
    %c1_74 = arith.constant 1 : index
    %c0_75 = arith.constant 0 : index
    %c0_76 = arith.constant 0 : index
    %99 = vector.load %arg13[%c0_73, %c1_74, %c0_75, %c0_76] : memref<1x4x8x32xbf16, #tpu.memory_space<vmem>>, vector<1x1x8x32xbf16>
    %100 = vector.shape_cast %99 : vector<1x1x8x32xbf16> to vector<8x32xbf16>
    %cst_77 = arith.constant dense<0.000000e+00> : vector<8x32xf32>
    %101 = tpu.matmul %98, %100, %cst_77 {dimension_numbers = #tpu.dot_dimension_numbers<[1], [0], [0], [1], [0, 0, 1, 1], [], []>} : vector<8x8xbf16>, vector<8x32xbf16>, vector<8x32xf32> -> vector<8x32xf32>
    %102 = arith.addf %57, %101 : vector<8x32xf32>
    %c0_78 = arith.constant 0 : index
    %c2 = arith.constant 2 : index
    %c0_79 = arith.constant 0 : index
    %c0_80 = arith.constant 0 : index
    %103 = vector.load %arg7[%c0_78, %c2, %c0_79, %c0_80] : memref<1x4x32x8xbf16, #tpu.memory_space<vmem>>, vector<1x1x32x8xbf16>
    %104 = vector.shape_cast %103 : vector<1x1x32x8xbf16> to vector<32x8xbf16>
    %cst_81 = arith.constant dense<0.000000e+00> : vector<8x8xf32>
    %105 = tpu.matmul %5, %104, %cst_81 {dimension_numbers = #tpu.dot_dimension_numbers<[1], [0], [0], [1], [0, 0, 1, 1], [], []>} : vector<8x32xbf16>, vector<32x8xbf16>, vector<8x8xf32> -> vector<8x8xf32>
    %c0_82 = arith.constant 0 : index
    %c2_83 = arith.constant 2 : index
    %c0_84 = arith.constant 0 : index
    %c0_85 = arith.constant 0 : index
    %106 = vector.load %arg10[%c0_82, %c2_83, %c0_84, %c0_85] : memref<1x4x1x8xf32, #tpu.memory_space<vmem>>, vector<1x1x1x8xf32>
    %107 = vector.shape_cast %106 : vector<1x1x1x8xf32> to vector<1x8xf32>
    %108 = vector.broadcast %107 : vector<1x8xf32> to vector<8x8xf32>
    %109 = arith.addf %105, %108 : vector<8x8xf32>
    %c0_86 = arith.constant 0 : index
    %c2_87 = arith.constant 2 : index
    %c0_88 = arith.constant 0 : index
    %c0_89 = arith.constant 0 : index
    %110 = vector.load %arg8[%c0_86, %c2_87, %c0_88, %c0_89] : memref<1x4x32x8xbf16, #tpu.memory_space<vmem>>, vector<1x1x32x8xbf16>
    %111 = vector.shape_cast %110 : vector<1x1x32x8xbf16> to vector<32x8xbf16>
    %cst_90 = arith.constant dense<0.000000e+00> : vector<8x8xf32>
    %112 = tpu.matmul %5, %111, %cst_90 {dimension_numbers = #tpu.dot_dimension_numbers<[1], [0], [0], [1], [0, 0, 1, 1], [], []>} : vector<8x32xbf16>, vector<32x8xbf16>, vector<8x8xf32> -> vector<8x8xf32>
    %c0_91 = arith.constant 0 : index
    %c2_92 = arith.constant 2 : index
    %c0_93 = arith.constant 0 : index
    %c0_94 = arith.constant 0 : index
    %113 = vector.load %arg11[%c0_91, %c2_92, %c0_93, %c0_94] : memref<1x4x1x8xf32, #tpu.memory_space<vmem>>, vector<1x1x1x8xf32>
    %114 = vector.shape_cast %113 : vector<1x1x1x8xf32> to vector<1x8xf32>
    %115 = vector.broadcast %114 : vector<1x8xf32> to vector<8x8xf32>
    %116 = arith.addf %112, %115 : vector<8x8xf32>
    %c0_95 = arith.constant 0 : index
    %c2_96 = arith.constant 2 : index
    %c0_97 = arith.constant 0 : index
    %c0_98 = arith.constant 0 : index
    %117 = vector.load %arg9[%c0_95, %c2_96, %c0_97, %c0_98] : memref<1x4x32x8xbf16, #tpu.memory_space<vmem>>, vector<1x1x32x8xbf16>
    %118 = vector.shape_cast %117 : vector<1x1x32x8xbf16> to vector<32x8xbf16>
    %cst_99 = arith.constant dense<0.000000e+00> : vector<8x8xf32>
    %119 = tpu.matmul %5, %118, %cst_99 {dimension_numbers = #tpu.dot_dimension_numbers<[1], [0], [0], [1], [0, 0, 1, 1], [], []>} : vector<8x32xbf16>, vector<32x8xbf16>, vector<8x8xf32> -> vector<8x8xf32>
    %c0_100 = arith.constant 0 : index
    %c2_101 = arith.constant 2 : index
    %c0_102 = arith.constant 0 : index
    %c0_103 = arith.constant 0 : index
    %120 = vector.load %arg12[%c0_100, %c2_101, %c0_102, %c0_103] : memref<1x4x1x8xf32, #tpu.memory_space<vmem>>, vector<1x1x1x8xf32>
    %121 = vector.shape_cast %120 : vector<1x1x1x8xf32> to vector<1x8xf32>
    %122 = vector.broadcast %121 : vector<1x8xf32> to vector<8x8xf32>
    %123 = arith.addf %119, %122 : vector<8x8xf32>
    %124 = arith.truncf %109 : vector<8x8xf32> to vector<8x8xbf16>
    %125 = arith.truncf %116 : vector<8x8xf32> to vector<8x8xbf16>
    %cst_104 = arith.constant dense<0.000000e+00> : vector<8x8xf32>
    %126 = tpu.matmul %124, %125, %cst_104 {dimension_numbers = #tpu.dot_dimension_numbers<[1], [1], [0], [0], [0, 0, 1, 0], [], []>} : vector<8x8xbf16>, vector<8x8xbf16>, vector<8x8xf32> -> vector<8x8xf32>
    %cst_105 = arith.constant 0.353553385 : f32
    %127 = vector.broadcast %cst_105 : f32 to vector<8x8xf32>
    %128 = arith.mulf %126, %127 : vector<8x8xf32>
    %129 = arith.addf %128, %11 : vector<8x8xf32>
    %cst_106 = arith.constant dense<0xFF800000> : vector<8xf32>
    %130 = vector.multi_reduction <maximumf>, %129, %cst_106 [1] : vector<8x8xf32> to vector<8xf32>
    %131 = vector.shape_cast %130 : vector<8xf32> to vector<8x1xf32>
    %132 = vector.broadcast %131 : vector<8x1xf32> to vector<8x8xf32>
    %133 = arith.subf %129, %132 : vector<8x8xf32>
    %134 = math.exp %133 : vector<8x8xf32>
    %cst_107 = arith.constant dense<0.000000e+00> : vector<8xf32>
    %135 = vector.multi_reduction <add>, %134, %cst_107 [1] : vector<8x8xf32> to vector<8xf32>
    %136 = vector.shape_cast %135 : vector<8xf32> to vector<8x1xf32>
    %137 = tpu.reciprocal %136 {approx = true} : vector<8x1xf32> -> vector<8x1xf32>
    %138 = vector.broadcast %137 : vector<8x1xf32> to vector<8x8xf32>
    %139 = arith.mulf %134, %138 : vector<8x8xf32>
    %140 = arith.truncf %139 : vector<8x8xf32> to vector<8x8xbf16>
    %141 = arith.truncf %123 : vector<8x8xf32> to vector<8x8xbf16>
    %cst_108 = arith.constant dense<0.000000e+00> : vector<8x8xf32>
    %142 = tpu.matmul %140, %141, %cst_108 {dimension_numbers = #tpu.dot_dimension_numbers<[1], [0], [0], [1], [0, 0, 1, 1], [], []>} : vector<8x8xbf16>, vector<8x8xbf16>, vector<8x8xf32> -> vector<8x8xf32>
    %143 = arith.truncf %142 : vector<8x8xf32> to vector<8x8xbf16>
    %c0_109 = arith.constant 0 : index
    %c2_110 = arith.constant 2 : index
    %c0_111 = arith.constant 0 : index
    %c0_112 = arith.constant 0 : index
    %144 = vector.load %arg13[%c0_109, %c2_110, %c0_111, %c0_112] : memref<1x4x8x32xbf16, #tpu.memory_space<vmem>>, vector<1x1x8x32xbf16>
    %145 = vector.shape_cast %144 : vector<1x1x8x32xbf16> to vector<8x32xbf16>
    %cst_113 = arith.constant dense<0.000000e+00> : vector<8x32xf32>
    %146 = tpu.matmul %143, %145, %cst_113 {dimension_numbers = #tpu.dot_dimension_numbers<[1], [0], [0], [1], [0, 0, 1, 1], [], []>} : vector<8x8xbf16>, vector<8x32xbf16>, vector<8x32xf32> -> vector<8x32xf32>
    %147 = arith.addf %102, %146 : vector<8x32xf32>
    %c0_114 = arith.constant 0 : index
    %c3 = arith.constant 3 : index
    %c0_115 = arith.constant 0 : index
    %c0_116 = arith.constant 0 : index
    %148 = vector.load %arg7[%c0_114, %c3, %c0_115, %c0_116] : memref<1x4x32x8xbf16, #tpu.memory_space<vmem>>, vector<1x1x32x8xbf16>
    %149 = vector.shape_cast %148 : vector<1x1x32x8xbf16> to vector<32x8xbf16>
    %cst_117 = arith.constant dense<0.000000e+00> : vector<8x8xf32>
    %150 = tpu.matmul %5, %149, %cst_117 {dimension_numbers = #tpu.dot_dimension_numbers<[1], [0], [0], [1], [0, 0, 1, 1], [], []>} : vector<8x32xbf16>, vector<32x8xbf16>, vector<8x8xf32> -> vector<8x8xf32>
    %c0_118 = arith.constant 0 : index
    %c3_119 = arith.constant 3 : index
    %c0_120 = arith.constant 0 : index
    %c0_121 = arith.constant 0 : index
    %151 = vector.load %arg10[%c0_118, %c3_119, %c0_120, %c0_121] : memref<1x4x1x8xf32, #tpu.memory_space<vmem>>, vector<1x1x1x8xf32>
    %152 = vector.shape_cast %151 : vector<1x1x1x8xf32> to vector<1x8xf32>
    %153 = vector.broadcast %152 : vector<1x8xf32> to vector<8x8xf32>
    %154 = arith.addf %150, %153 : vector<8x8xf32>
    %c0_122 = arith.constant 0 : index
    %c3_123 = arith.constant 3 : index
    %c0_124 = arith.constant 0 : index
    %c0_125 = arith.constant 0 : index
    %155 = vector.load %arg8[%c0_122, %c3_123, %c0_124, %c0_125] : memref<1x4x32x8xbf16, #tpu.memory_space<vmem>>, vector<1x1x32x8xbf16>
    %156 = vector.shape_cast %155 : vector<1x1x32x8xbf16> to vector<32x8xbf16>
    %cst_126 = arith.constant dense<0.000000e+00> : vector<8x8xf32>
    %157 = tpu.matmul %5, %156, %cst_126 {dimension_numbers = #tpu.dot_dimension_numbers<[1], [0], [0], [1], [0, 0, 1, 1], [], []>} : vector<8x32xbf16>, vector<32x8xbf16>, vector<8x8xf32> -> vector<8x8xf32>
    %c0_127 = arith.constant 0 : index
    %c3_128 = arith.constant 3 : index
    %c0_129 = arith.constant 0 : index
    %c0_130 = arith.constant 0 : index
    %158 = vector.load %arg11[%c0_127, %c3_128, %c0_129, %c0_130] : memref<1x4x1x8xf32, #tpu.memory_space<vmem>>, vector<1x1x1x8xf32>
    %159 = vector.shape_cast %158 : vector<1x1x1x8xf32> to vector<1x8xf32>
    %160 = vector.broadcast %159 : vector<1x8xf32> to vector<8x8xf32>
    %161 = arith.addf %157, %160 : vector<8x8xf32>
    %c0_131 = arith.constant 0 : index
    %c3_132 = arith.constant 3 : index
    %c0_133 = arith.constant 0 : index
    %c0_134 = arith.constant 0 : index
    %162 = vector.load %arg9[%c0_131, %c3_132, %c0_133, %c0_134] : memref<1x4x32x8xbf16, #tpu.memory_space<vmem>>, vector<1x1x32x8xbf16>
    %163 = vector.shape_cast %162 : vector<1x1x32x8xbf16> to vector<32x8xbf16>
    %cst_135 = arith.constant dense<0.000000e+00> : vector<8x8xf32>
    %164 = tpu.matmul %5, %163, %cst_135 {dimension_numbers = #tpu.dot_dimension_numbers<[1], [0], [0], [1], [0, 0, 1, 1], [], []>} : vector<8x32xbf16>, vector<32x8xbf16>, vector<8x8xf32> -> vector<8x8xf32>
    %c0_136 = arith.constant 0 : index
    %c3_137 = arith.constant 3 : index
    %c0_138 = arith.constant 0 : index
    %c0_139 = arith.constant 0 : index
    %165 = vector.load %arg12[%c0_136, %c3_137, %c0_138, %c0_139] : memref<1x4x1x8xf32, #tpu.memory_space<vmem>>, vector<1x1x1x8xf32>
    %166 = vector.shape_cast %165 : vector<1x1x1x8xf32> to vector<1x8xf32>
    %167 = vector.broadcast %166 : vector<1x8xf32> to vector<8x8xf32>
    %168 = arith.addf %164, %167 : vector<8x8xf32>
    %169 = arith.truncf %154 : vector<8x8xf32> to vector<8x8xbf16>
    %170 = arith.truncf %161 : vector<8x8xf32> to vector<8x8xbf16>
    %cst_140 = arith.constant dense<0.000000e+00> : vector<8x8xf32>
    %171 = tpu.matmul %169, %170, %cst_140 {dimension_numbers = #tpu.dot_dimension_numbers<[1], [1], [0], [0], [0, 0, 1, 0], [], []>} : vector<8x8xbf16>, vector<8x8xbf16>, vector<8x8xf32> -> vector<8x8xf32>
    %cst_141 = arith.constant 0.353553385 : f32
    %172 = vector.broadcast %cst_141 : f32 to vector<8x8xf32>
    %173 = arith.mulf %171, %172 : vector<8x8xf32>
    %174 = arith.addf %173, %11 : vector<8x8xf32>
    %cst_142 = arith.constant dense<0xFF800000> : vector<8xf32>
    %175 = vector.multi_reduction <maximumf>, %174, %cst_142 [1] : vector<8x8xf32> to vector<8xf32>
    %176 = vector.shape_cast %175 : vector<8xf32> to vector<8x1xf32>
    %177 = vector.broadcast %176 : vector<8x1xf32> to vector<8x8xf32>
    %178 = arith.subf %174, %177 : vector<8x8xf32>
    %179 = math.exp %178 : vector<8x8xf32>
    %cst_143 = arith.constant dense<0.000000e+00> : vector<8xf32>
    %180 = vector.multi_reduction <add>, %179, %cst_143 [1] : vector<8x8xf32> to vector<8xf32>
    %181 = vector.shape_cast %180 : vector<8xf32> to vector<8x1xf32>
    %182 = tpu.reciprocal %181 {approx = true} : vector<8x1xf32> -> vector<8x1xf32>
    %183 = vector.broadcast %182 : vector<8x1xf32> to vector<8x8xf32>
    %184 = arith.mulf %179, %183 : vector<8x8xf32>
    %185 = arith.truncf %184 : vector<8x8xf32> to vector<8x8xbf16>
    %186 = arith.truncf %168 : vector<8x8xf32> to vector<8x8xbf16>
    %cst_144 = arith.constant dense<0.000000e+00> : vector<8x8xf32>
    %187 = tpu.matmul %185, %186, %cst_144 {dimension_numbers = #tpu.dot_dimension_numbers<[1], [0], [0], [1], [0, 0, 1, 1], [], []>} : vector<8x8xbf16>, vector<8x8xbf16>, vector<8x8xf32> -> vector<8x8xf32>
    %188 = arith.truncf %187 : vector<8x8xf32> to vector<8x8xbf16>
    %c0_145 = arith.constant 0 : index
    %c3_146 = arith.constant 3 : index
    %c0_147 = arith.constant 0 : index
    %c0_148 = arith.constant 0 : index
    %189 = vector.load %arg13[%c0_145, %c3_146, %c0_147, %c0_148] : memref<1x4x8x32xbf16, #tpu.memory_space<vmem>>, vector<1x1x8x32xbf16>
    %190 = vector.shape_cast %189 : vector<1x1x8x32xbf16> to vector<8x32xbf16>
    %cst_149 = arith.constant dense<0.000000e+00> : vector<8x32xf32>
    %191 = tpu.matmul %188, %190, %cst_149 {dimension_numbers = #tpu.dot_dimension_numbers<[1], [0], [0], [1], [0, 0, 1, 1], [], []>} : vector<8x8xbf16>, vector<8x32xbf16>, vector<8x32xf32> -> vector<8x32xf32>
    %192 = arith.addf %147, %191 : vector<8x32xf32>
    %c0_150 = arith.constant 0 : index
    %c0_151 = arith.constant 0 : index
    %c0_152 = arith.constant 0 : index
    %193 = vector.load %arg14[%c0_150, %c0_151, %c0_152] : memref<1x1x32xf32, #tpu.memory_space<vmem>>, vector<1x1x32xf32>
    %194 = vector.shape_cast %193 : vector<1x1x32xf32> to vector<1x32xf32>
    %195 = vector.broadcast %194 : vector<1x32xf32> to vector<8x32xf32>
    %196 = arith.addf %192, %195 : vector<8x32xf32>
    %197 = arith.addf %4, %196 : vector<8x32xf32>
    %c0_153 = arith.constant 0 : index
    %c0_154 = arith.constant 0 : index
    %c0_155 = arith.constant 0 : index
    %198 = vector.load %arg15[%c0_153, %c0_154, %c0_155] : memref<1x1x32xf32, #tpu.memory_space<vmem>>, vector<1x1x32xf32>
    %199 = vector.shape_cast %198 : vector<1x1x32xf32> to vector<1x32xf32>
    %c0_156 = arith.constant 0 : index
    %c0_157 = arith.constant 0 : index
    %c0_158 = arith.constant 0 : index
    %200 = vector.load %arg16[%c0_156, %c0_157, %c0_158] : memref<1x1x32xf32, #tpu.memory_space<vmem>>, vector<1x1x32xf32>
    %201 = vector.shape_cast %200 : vector<1x1x32xf32> to vector<1x32xf32>
    %cst_159 = arith.constant dense<0.000000e+00> : vector<8xf32>
    %202 = vector.multi_reduction <add>, %197, %cst_159 [1] : vector<8x32xf32> to vector<8xf32>
    %203 = vector.shape_cast %202 : vector<8xf32> to vector<8x1xf32>
    %cst_160 = arith.constant 3.200000e+01 : f32
    %204 = vector.broadcast %cst_160 : f32 to vector<8x1xf32>
    %205 = arith.divf %203, %204 : vector<8x1xf32>
    %206 = vector.broadcast %205 : vector<8x1xf32> to vector<8x32xf32>
    %207 = arith.subf %197, %206 : vector<8x32xf32>
    %208 = arith.mulf %207, %207 : vector<8x32xf32>
    %cst_161 = arith.constant dense<0.000000e+00> : vector<8xf32>
    %209 = vector.multi_reduction <add>, %208, %cst_161 [1] : vector<8x32xf32> to vector<8xf32>
    %210 = vector.shape_cast %209 : vector<8xf32> to vector<8x1xf32>
    %cst_162 = arith.constant 3.200000e+01 : f32
    %211 = vector.broadcast %cst_162 : f32 to vector<8x1xf32>
    %212 = arith.divf %210, %211 : vector<8x1xf32>
    %cst_163 = arith.constant 9.99999974E-6 : f32
    %213 = vector.broadcast %cst_163 : f32 to vector<8x1xf32>
    %214 = arith.addf %212, %213 : vector<8x1xf32>
    %215 = math.rsqrt %214 : vector<8x1xf32>
    %216 = vector.broadcast %215 : vector<8x1xf32> to vector<8x32xf32>
    %217 = arith.mulf %207, %216 : vector<8x32xf32>
    %218 = vector.broadcast %199 : vector<1x32xf32> to vector<8x32xf32>
    %219 = arith.mulf %217, %218 : vector<8x32xf32>
    %220 = vector.broadcast %201 : vector<1x32xf32> to vector<8x32xf32>
    %221 = arith.addf %219, %220 : vector<8x32xf32>
    %c0_164 = arith.constant 0 : index
    %c0_165 = arith.constant 0 : index
    %c0_166 = arith.constant 0 : index
    %c0_167 = arith.constant 0 : index
    %222 = vector.load %arg6[%c0_164, %c0_165, %c0_166, %c0_167] : memref<1x1x1x32xf32, #tpu.memory_space<vmem>>, vector<1x1x1x32xf32>
    %223 = vector.shape_cast %222 : vector<1x1x1x32xf32> to vector<1x32xf32>
    %224 = vector.broadcast %223 : vector<1x32xf32> to vector<8x32xf32>
    %225 = arith.addf %221, %224 : vector<8x32xf32>
    %c0_168 = arith.constant 0 : index
    %c0_169 = arith.constant 0 : index
    %c0_170 = arith.constant 0 : index
    %226 = vector.load %arg17[%c0_168, %c0_169, %c0_170] : memref<1x1x32xf32, #tpu.memory_space<vmem>>, vector<1x1x32xf32>
    %227 = vector.shape_cast %226 : vector<1x1x32xf32> to vector<1x32xf32>
    %c0_171 = arith.constant 0 : index
    %c0_172 = arith.constant 0 : index
    %c0_173 = arith.constant 0 : index
    %228 = vector.load %arg18[%c0_171, %c0_172, %c0_173] : memref<1x1x32xf32, #tpu.memory_space<vmem>>, vector<1x1x32xf32>
    %229 = vector.shape_cast %228 : vector<1x1x32xf32> to vector<1x32xf32>
    %cst_174 = arith.constant dense<0.000000e+00> : vector<8xf32>
    %230 = vector.multi_reduction <add>, %225, %cst_174 [1] : vector<8x32xf32> to vector<8xf32>
    %231 = vector.shape_cast %230 : vector<8xf32> to vector<8x1xf32>
    %cst_175 = arith.constant 3.200000e+01 : f32
    %232 = vector.broadcast %cst_175 : f32 to vector<8x1xf32>
    %233 = arith.divf %231, %232 : vector<8x1xf32>
    %234 = vector.broadcast %233 : vector<8x1xf32> to vector<8x32xf32>
    %235 = arith.subf %225, %234 : vector<8x32xf32>
    %236 = arith.mulf %235, %235 : vector<8x32xf32>
    %cst_176 = arith.constant dense<0.000000e+00> : vector<8xf32>
    %237 = vector.multi_reduction <add>, %236, %cst_176 [1] : vector<8x32xf32> to vector<8xf32>
    %238 = vector.shape_cast %237 : vector<8xf32> to vector<8x1xf32>
    %cst_177 = arith.constant 3.200000e+01 : f32
    %239 = vector.broadcast %cst_177 : f32 to vector<8x1xf32>
    %240 = arith.divf %238, %239 : vector<8x1xf32>
    %cst_178 = arith.constant 9.99999974E-6 : f32
    %241 = vector.broadcast %cst_178 : f32 to vector<8x1xf32>
    %242 = arith.addf %240, %241 : vector<8x1xf32>
    %243 = math.rsqrt %242 : vector<8x1xf32>
    %244 = vector.broadcast %243 : vector<8x1xf32> to vector<8x32xf32>
    %245 = arith.mulf %235, %244 : vector<8x32xf32>
    %246 = vector.broadcast %227 : vector<1x32xf32> to vector<8x32xf32>
    %247 = arith.mulf %245, %246 : vector<8x32xf32>
    %248 = vector.broadcast %229 : vector<1x32xf32> to vector<8x32xf32>
    %249 = arith.addf %247, %248 : vector<8x32xf32>
    %250 = arith.truncf %249 : vector<8x32xf32> to vector<8x32xbf16>
    %c0_179 = arith.constant 0 : index
    %c0_180 = arith.constant 0 : index
    %c0_181 = arith.constant 0 : index
    %251 = vector.load %arg19[%c0_179, %c0_180, %c0_181] : memref<1x32x64xbf16, #tpu.memory_space<vmem>>, vector<1x32x64xbf16>
    %252 = vector.shape_cast %251 : vector<1x32x64xbf16> to vector<32x64xbf16>
    %cst_182 = arith.constant dense<0.000000e+00> : vector<8x64xf32>
    %253 = tpu.matmul %250, %252, %cst_182 {dimension_numbers = #tpu.dot_dimension_numbers<[1], [0], [0], [1], [0, 0, 1, 1], [], []>} : vector<8x32xbf16>, vector<32x64xbf16>, vector<8x64xf32> -> vector<8x64xf32>
    %c0_183 = arith.constant 0 : index
    %c0_184 = arith.constant 0 : index
    %c0_185 = arith.constant 0 : index
    %254 = vector.load %arg20[%c0_183, %c0_184, %c0_185] : memref<1x1x64xf32, #tpu.memory_space<vmem>>, vector<1x1x64xf32>
    %255 = vector.shape_cast %254 : vector<1x1x64xf32> to vector<1x64xf32>
    %256 = vector.broadcast %255 : vector<1x64xf32> to vector<8x64xf32>
    %257 = arith.addf %253, %256 : vector<8x64xf32>
    %cst_186 = arith.constant 0.000000e+00 : f32
    %258 = vector.broadcast %cst_186 : f32 to vector<8x64xf32>
    %259 = arith.maximumf %257, %258 : vector<8x64xf32>
    %260 = arith.truncf %259 : vector<8x64xf32> to vector<8x64xbf16>
    %c0_187 = arith.constant 0 : index
    %c0_188 = arith.constant 0 : index
    %c0_189 = arith.constant 0 : index
    %261 = vector.load %arg21[%c0_187, %c0_188, %c0_189] : memref<1x64x32xbf16, #tpu.memory_space<vmem>>, vector<1x64x32xbf16>
    %262 = vector.shape_cast %261 : vector<1x64x32xbf16> to vector<64x32xbf16>
    %cst_190 = arith.constant dense<0.000000e+00> : vector<8x32xf32>
    %263 = tpu.matmul %260, %262, %cst_190 {dimension_numbers = #tpu.dot_dimension_numbers<[1], [0], [0], [1], [0, 0, 1, 1], [], []>} : vector<8x64xbf16>, vector<64x32xbf16>, vector<8x32xf32> -> vector<8x32xf32>
    %c0_191 = arith.constant 0 : index
    %c0_192 = arith.constant 0 : index
    %c0_193 = arith.constant 0 : index
    %264 = vector.load %arg22[%c0_191, %c0_192, %c0_193] : memref<1x1x32xf32, #tpu.memory_space<vmem>>, vector<1x1x32xf32>
    %265 = vector.shape_cast %264 : vector<1x1x32xf32> to vector<1x32xf32>
    %266 = vector.broadcast %265 : vector<1x32xf32> to vector<8x32xf32>
    %267 = arith.addf %263, %266 : vector<8x32xf32>
    %268 = arith.addf %249, %267 : vector<8x32xf32>
    %c0_194 = arith.constant 0 : index
    %c0_195 = arith.constant 0 : index
    %c0_196 = arith.constant 0 : index
    %269 = vector.load %arg23[%c0_194, %c0_195, %c0_196] : memref<1x1x32xf32, #tpu.memory_space<vmem>>, vector<1x1x32xf32>
    %270 = vector.shape_cast %269 : vector<1x1x32xf32> to vector<1x32xf32>
    %c0_197 = arith.constant 0 : index
    %c0_198 = arith.constant 0 : index
    %c0_199 = arith.constant 0 : index
    %271 = vector.load %arg24[%c0_197, %c0_198, %c0_199] : memref<1x1x32xf32, #tpu.memory_space<vmem>>, vector<1x1x32xf32>
    %272 = vector.shape_cast %271 : vector<1x1x32xf32> to vector<1x32xf32>
    %cst_200 = arith.constant dense<0.000000e+00> : vector<8xf32>
    %273 = vector.multi_reduction <add>, %268, %cst_200 [1] : vector<8x32xf32> to vector<8xf32>
    %274 = vector.shape_cast %273 : vector<8xf32> to vector<8x1xf32>
    %cst_201 = arith.constant 3.200000e+01 : f32
    %275 = vector.broadcast %cst_201 : f32 to vector<8x1xf32>
    %276 = arith.divf %274, %275 : vector<8x1xf32>
    %277 = vector.broadcast %276 : vector<8x1xf32> to vector<8x32xf32>
    %278 = arith.subf %268, %277 : vector<8x32xf32>
    %279 = arith.mulf %278, %278 : vector<8x32xf32>
    %cst_202 = arith.constant dense<0.000000e+00> : vector<8xf32>
    %280 = vector.multi_reduction <add>, %279, %cst_202 [1] : vector<8x32xf32> to vector<8xf32>
    %281 = vector.shape_cast %280 : vector<8xf32> to vector<8x1xf32>
    %cst_203 = arith.constant 3.200000e+01 : f32
    %282 = vector.broadcast %cst_203 : f32 to vector<8x1xf32>
    %283 = arith.divf %281, %282 : vector<8x1xf32>
    %cst_204 = arith.constant 9.99999974E-6 : f32
    %284 = vector.broadcast %cst_204 : f32 to vector<8x1xf32>
    %285 = arith.addf %283, %284 : vector<8x1xf32>
    %286 = math.rsqrt %285 : vector<8x1xf32>
    %287 = vector.broadcast %286 : vector<8x1xf32> to vector<8x32xf32>
    %288 = arith.mulf %278, %287 : vector<8x32xf32>
    %289 = vector.broadcast %270 : vector<1x32xf32> to vector<8x32xf32>
    %290 = arith.mulf %288, %289 : vector<8x32xf32>
    %291 = vector.broadcast %272 : vector<1x32xf32> to vector<8x32xf32>
    %292 = arith.addf %290, %291 : vector<8x32xf32>
    %c0_205 = arith.constant 0 : index
    %c0_206 = arith.constant 0 : index
    %c0_207 = arith.constant 0 : index
    %293 = vector.load %arg25[%c0_205, %c0_206, %c0_207] : memref<1x8x32xf32, #tpu.memory_space<vmem>>, vector<1x8x32xf32>
    %294 = vector.shape_cast %293 : vector<1x8x32xf32> to vector<8x32xf32>
    %295 = vector.shape_cast %292 : vector<8x32xf32> to vector<1x8x32xf32>
    tpu.vector_store %arg25[%c0_205, %c0_206, %c0_207], %295 {strides = array<i32>} : memref<1x8x32xf32, #tpu.memory_space<vmem>>, vector<1x8x32xf32>,
    return
  }
  func.func @transform_0(%arg0: i32, %arg1: i32) -> (i32, i32, i32) {
    %c0_i32 = arith.constant 0 : i32
    %c0_i32_0 = arith.constant 0 : i32
    %c0_i32_1 = arith.constant 0 : i32
    return %arg0, %c0_i32, %c0_i32_0 : i32, i32, i32
  }
  func.func @transform_1(%arg0: i32, %arg1: i32) -> (i32, i32, i32) {
    %c0_i32 = arith.constant 0 : i32
    %c0_i32_0 = arith.constant 0 : i32
    %c0_i32_1 = arith.constant 0 : i32
    %c0_i32_2 = arith.constant 0 : i32
    return %c0_i32, %c0_i32_0, %c0_i32_1 : i32, i32, i32
  }
  func.func @transform_2(%arg0: i32, %arg1: i32) -> (i32, i32) {
    %c0_i32 = arith.constant 0 : i32
    %c0_i32_0 = arith.constant 0 : i32
    %c0_i32_1 = arith.constant 0 : i32
    return %c0_i32, %c0_i32_0 : i32, i32
  }
  func.func @transform_3(%arg0: i32, %arg1: i32) -> (i32, i32) {
    %c0_i32 = arith.constant 0 : i32
    %c0_i32_0 = arith.constant 0 : i32
    %c0_i32_1 = arith.constant 0 : i32
    return %c0_i32, %c0_i32_0 : i32, i32
  }
  func.func @transform_4(%arg0: i32, %arg1: i32) -> (i32, i32, i32, i32) {
    %c0_i32 = arith.constant 0 : i32
    %c0_i32_0 = arith.constant 0 : i32
    %c0_i32_1 = arith.constant 0 : i32
    return %arg1, %arg0, %c0_i32, %c0_i32_0 : i32, i32, i32, i32
  }
  func.func @transform_5(%arg0: i32, %arg1: i32) -> (i32, i32, i32, i32) {
    %c0_i32 = arith.constant 0 : i32
    %c0_i32_0 = arith.constant 0 : i32
    %c0_i32_1 = arith.constant 0 : i32
    %c0_i32_2 = arith.constant 0 : i32
    return %arg1, %c0_i32, %c0_i32_0, %c0_i32_1 : i32, i32, i32, i32
  }
  func.func @transform_6(%arg0: i32, %arg1: i32) -> (i32, i32, i32, i32) {
    %c0_i32 = arith.constant 0 : i32
    %c0_i32_0 = arith.constant 0 : i32
    %c0_i32_1 = arith.constant 0 : i32
    %c0_i32_2 = arith.constant 0 : i32
    return %arg1, %c0_i32, %c0_i32_0, %c0_i32_1 : i32, i32, i32, i32
  }
  func.func @transform_7(%arg0: i32, %arg1: i32) -> (i32, i32, i32, i32) {
    %c0_i32 = arith.constant 0 : i32
    %c0_i32_0 = arith.constant 0 : i32
    %c0_i32_1 = arith.constant 0 : i32
    %c0_i32_2 = arith.constant 0 : i32
    return %arg1, %c0_i32, %c0_i32_0, %c0_i32_1 : i32, i32, i32, i32
  }
  func.func @transform_8(%arg0: i32, %arg1: i32) -> (i32, i32, i32, i32) {
    %c0_i32 = arith.constant 0 : i32
    %c0_i32_0 = arith.constant 0 : i32
    %c0_i32_1 = arith.constant 0 : i32
    %c0_i32_2 = arith.constant 0 : i32
    return %arg1, %c0_i32, %c0_i32_0, %c0_i32_1 : i32, i32, i32, i32
  }
  func.func @transform_9(%arg0: i32, %arg1: i32) -> (i32, i32, i32, i32) {
    %c0_i32 = arith.constant 0 : i32
    %c0_i32_0 = arith.constant 0 : i32
    %c0_i32_1 = arith.constant 0 : i32
    %c0_i32_2 = arith.constant 0 : i32
    return %arg1, %c0_i32, %c0_i32_0, %c0_i32_1 : i32, i32, i32, i32
  }
  func.func @transform_10(%arg0: i32, %arg1: i32) -> (i32, i32, i32, i32) {
    %c0_i32 = arith.constant 0 : i32
    %c0_i32_0 = arith.constant 0 : i32
    %c0_i32_1 = arith.constant 0 : i32
    %c0_i32_2 = arith.constant 0 : i32
    return %arg1, %c0_i32, %c0_i32_0, %c0_i32_1 : i32, i32, i32, i32
  }
  func.func @transform_11(%arg0: i32, %arg1: i32) -> (i32, i32, i32, i32) {
    %c0_i32 = arith.constant 0 : i32
    %c0_i32_0 = arith.constant 0 : i32
    %c0_i32_1 = arith.constant 0 : i32
    %c0_i32_2 = arith.constant 0 : i32
    return %arg1, %c0_i32, %c0_i32_0, %c0_i32_1 : i32, i32, i32, i32
  }
  func.func @transform_12(%arg0: i32, %arg1: i32) -> (i32, i32, i32) {
    %c0_i32 = arith.constant 0 : i32
    %c0_i32_0 = arith.constant 0 : i32
    %c0_i32_1 = arith.constant 0 : i32
    return %arg1, %c0_i32, %c0_i32_0 : i32, i32, i32
  }
  func.func @transform_13(%arg0: i32, %arg1: i32) -> (i32, i32, i32) {
    %c0_i32 = arith.constant 0 : i32
    %c0_i32_0 = arith.constant 0 : i32
    %c0_i32_1 = arith.constant 0 : i32
    return %arg1, %c0_i32, %c0_i32_0 : i32, i32, i32
  }
  func.func @transform_14(%arg0: i32, %arg1: i32) -> (i32, i32, i32) {
    %c0_i32 = arith.constant 0 : i32
    %c0_i32_0 = arith.constant 0 : i32
    %c0_i32_1 = arith.constant 0 : i32
    return %arg1, %c0_i32, %c0_i32_0 : i32, i32, i32
  }
  func.func @transform_15(%arg0: i32, %arg1: i32) -> (i32, i32, i32) {
    %c0_i32 = arith.constant 0 : i32
    %c0_i32_0 = arith.constant 0 : i32
    %c0_i32_1 = arith.constant 0 : i32
    return %arg1, %c0_i32, %c0_i32_0 : i32, i32, i32
  }
  func.func @transform_16(%arg0: i32, %arg1: i32) -> (i32, i32, i32) {
    %c0_i32 = arith.constant 0 : i32
    %c0_i32_0 = arith.constant 0 : i32
    %c0_i32_1 = arith.constant 0 : i32
    return %arg1, %c0_i32, %c0_i32_0 : i32, i32, i32
  }
  func.func @transform_17(%arg0: i32, %arg1: i32) -> (i32, i32, i32) {
    %c0_i32 = arith.constant 0 : i32
    %c0_i32_0 = arith.constant 0 : i32
    %c0_i32_1 = arith.constant 0 : i32
    return %arg1, %c0_i32, %c0_i32_0 : i32, i32, i32
  }
  func.func @transform_18(%arg0: i32, %arg1: i32) -> (i32, i32, i32) {
    %c0_i32 = arith.constant 0 : i32
    %c0_i32_0 = arith.constant 0 : i32
    %c0_i32_1 = arith.constant 0 : i32
    return %arg1, %c0_i32, %c0_i32_0 : i32, i32, i32
  }
  func.func @transform_19(%arg0: i32, %arg1: i32) -> (i32, i32, i32) {
    %c0_i32 = arith.constant 0 : i32
    %c0_i32_0 = arith.constant 0 : i32
    %c0_i32_1 = arith.constant 0 : i32
    return %arg1, %c0_i32, %c0_i32_0 : i32, i32, i32
  }
  func.func @transform_20(%arg0: i32, %arg1: i32) -> (i32, i32, i32) {
    %c0_i32 = arith.constant 0 : i32
    %c0_i32_0 = arith.constant 0 : i32
    %c0_i32_1 = arith.constant 0 : i32
    return %arg1, %c0_i32, %c0_i32_0 : i32, i32, i32
  }
  func.func @transform_21(%arg0: i32, %arg1: i32) -> (i32, i32, i32) {
    %c0_i32 = arith.constant 0 : i32
    %c0_i32_0 = arith.constant 0 : i32
    %c0_i32_1 = arith.constant 0 : i32
    return %arg1, %c0_i32, %c0_i32_0 : i32, i32, i32
  }
  func.func @transform_22(%arg0: i32, %arg1: i32) -> (i32, i32, i32) {
    %c0_i32 = arith.constant 0 : i32
    %c0_i32_0 = arith.constant 0 : i32
    %c0_i32_1 = arith.constant 0 : i32
    return %arg1, %c0_i32, %c0_i32_0 : i32, i32, i32
  }
  func.func @transform_23(%arg0: i32, %arg1: i32) -> (i32, i32, i32) {
    %c0_i32 = arith.constant 0 : i32
    %c0_i32_0 = arith.constant 0 : i32
    %c0_i32_1 = arith.constant 0 : i32
    return %arg0, %c0_i32, %c0_i32_0 : i32, i32, i32
  }
}

</mosaic_0001>

<llo_original>
// kernel: squeeze.1
$region0: #{squeeze.1}
  %s0 = inlined_call_operand.vmem [shape: f32[2,1,8,8], index: 0, kind: input, shape index: {}]
  %s1 = inlined_call_operand.hbm [shape: f32[2,64], index: 1, kind: output, shape index: {}]
  $region1: #{squeeze.1} parent=0
    #allocation0 [shape = 'u8[1024]{0}', space=vmem, size = 0x400, scoped, tag = 'operand span for operand 1']
    #allocation1 [shape = 's32[1]{0}', space=sflag, size = 0x4, scoped, tag = 'scoped memory for squeeze.1']
    #allocation2 [shape = 'u8[4096]{0}', space=vmem, size = 0x1000, scoped, tag = 'scoped mem for output reshape']
    %2 = vsyncpa [#allocation1], 0
    %s3 = smov 3
    %v4 = vld [vmem:[%s0] ss:$8 sm:%s3]
    %vm5 = vcmask 64512
    %6 = vst.msk [vmem:[#allocation2] sm:$0x3] %vm5, %v4
    %s7 = scalar_lea.vmem %s0, 7
    %s8 = smov 3
    %v9 = vld [vmem:[%s7] ss:$8 sm:%s8]
    %10 = vrot.lane.b32.xlu0 %v9, 56
    %v11 = vpop.permute.xlu0 %10
    %vm12 = vcmask 523712
    %13 = vst.msk [vmem:[#allocation2] sm:$0x3] %vm12, %v11
    %s14 = scalar_lea.vmem %s0, 6
    %s15 = smov 3
    %v16 = vld [vmem:[%s14] ss:$8 sm:%s15]
    %17 = vrot.lane.b32.xlu0 %v16, 48
    %v18 = vpop.permute.xlu0 %17
    %vm19 = vcmask 458112
    %20 = vst.msk [vmem:[#allocation2] sm:$0x3] %vm19, %v18
    %s21 = scalar_lea.vmem %s0, 5
    %s22 = smov 3
    %v23 = vld [vmem:[%s21] ss:$8 sm:%s22]
    %24 = vrot.lane.b32.xlu0 %v23, 40
    %v25 = vpop.permute.xlu0 %24
    %vm26 = vcmask 392512
    %27 = vst.msk [vmem:[#allocation2] sm:$0x3] %vm26, %v25
    %s28 = scalar_lea.vmem %s0, 4
    %s29 = smov 3
    %v30 = vld [vmem:[%s28] ss:$8 sm:%s29]
    %31 = vrot.lane.b32.xlu0 %v30, 32
    %v32 = vpop.permute.xlu0 %31
    %vm33 = vcmask 326912
    %34 = vst.msk [vmem:[#allocation2] sm:$0x3] %vm33, %v32
    %s35 = scalar_lea.vmem %s0, 3
    %s36 = smov 3
    %v37 = vld [vmem:[%s35] ss:$8 sm:%s36]
    %38 = vrot.lane.b32.xlu0 %v37, 24
    %v39 = vpop.permute.xlu0 %38
    %vm40 = vcmask 261312
    %41 = vst.msk [vmem:[#allocation2] sm:$0x3] %vm40, %v39
    %s42 = scalar_lea.vmem %s0, 2
    %s43 = smov 3
    %v44 = vld [vmem:[%s42] ss:$8 sm:%s43]
    %45 = vrot.lane.b32.xlu0 %v44, 16
    %v46 = vpop.permute.xlu0 %45
    %vm47 = vcmask 195712
    %48 = vst.msk [vmem:[#allocation2] sm:$0x3] %vm47, %v46
    %s49 = scalar_lea.vmem %s0, 1
    %s50 = smov 3
    %v51 = vld [vmem:[%s49] ss:$8 sm:%s50]
    %52 = vrot.lane.b32.xlu0 %v51, 8
    %v53 = vpop.permute.xlu0 %52
    %vm54 = vcmask 130112
    %55 = vst.msk [vmem:[#allocation2] sm:$0x3] %vm54, %v53
    %s57 = sshllo.u32 0, 2
    %v59 = vld [vmem:[#allocation2] sm:%s57]
    %s60 = sshllo.u32 0, 2
    %61 = vst [vmem:[#allocation0] sm:%s60] %v59
    %s63 = ssub.s32 32, 32
    %64 = vsyncadd [#allocation1], %s63
    %s66 = sshll.u32 [#allocation0], 4
    %s67 = int_to_ptr.vmem [resolvable:$true] %s66
    %69 = dma.vmem_to_hbm [thread:$0]  %s67, 32, %s1, [#allocation1]
    %70 = dma.done [#allocation1], 32
    %71 = vsyncpa [#allocation1], 1

// kernel: output_interface_forward_training.5
$region0: #{output_interface_forward_training.5}
  #allocation0 [shape = 'u32[]', space=smem, size = 0x4, offset = 0x4, fixed_abs, tag = 'smem constant byte address 0x4 - core index']
  #allocation1 [shape = 'u32[144,128]{1,0:T(1,128)}', space=vmem, size = 0x12000, scoped, tag = 'internal scratch']
  %s0 = inlined_call_operand.hbm [shape: f32[16,32], index: 0, kind: input, shape index: {}]
  %s1 = inlined_call_operand.hbm [shape: bf16[32,32], index: 1, kind: input, shape index: {}]
  %s2 = inlined_call_operand.hbm [shape: f32[1,32], index: 2, kind: input, shape index: {}]
  %s3 = inlined_call_operand.hbm [shape: f32[16,32], index: 3, kind: output, shape index: {}]
  %s4 = sld [smem:[#allocation0]]
  $region34: #{output_interface_forward_training.5} parent=0
    _
  %s6 = ssub.s32 1, %s4
  %s7 = scalar_select 0, %s6, %s4
  $region1: #{output_interface_forward_training.5} parent=0
    #allocation2 [shape = 'u8[8192]{0}', space=vmem, size = 0x2000, scoped, tag = 'input window, operand 0, single buffered']
    #allocation3 [shape = 's32[1]{0}', space=sflag, size = 0x4, scoped, tag = 'scoped memory for output_interface_forward_training.5']
    #allocation4 [shape = 's32[1]{0}', space=sflag, size = 0x4, scoped, tag = 'scoped memory for output_interface_forward_training.5']
    #allocation5 [shape = 'u8[8192]{0}', space=vmem, size = 0x2000, scoped, tag = 'input window, operand 1, single buffered']
    #allocation6 [shape = 's32[1]{0}', space=sflag, size = 0x4, scoped, tag = 'scoped memory for output_interface_forward_training.5']
    #allocation7 [shape = 'u8[512]{0}', space=vmem, size = 0x400, scoped, tag = 'input window, operand 2, single buffered']
    #allocation8 [shape = 'u8[8192]{0}', space=vmem, size = 0x2000, scoped, tag = 'output window, operand 0, single buffered']
    %8 = vsyncpa [#allocation3], 0
    %9 = vsyncpa [#allocation6], 0
    %10 = vsyncpa [#allocation4], 0
    // Predicated region
    $region2: #{output_interface_forward_training.5} parent=1 // pred_check
      _
    $region3: #{output_interface_forward_training.5} parent=1 // pred_check_branch
      %12 = sbr.rel (0) target = $region5
    $region4: #{output_interface_forward_training.5} parent=1 // pred_region
      %s14 = ssub.s32 256, 256
      %15 = vsyncadd [#allocation3], %s14
      %s16 = sshll.u32 [#allocation2], 4
      %s17 = int_to_ptr.vmem [resolvable:$true] %s16
      %22 = dma.hbm_to_vmem [thread:$0]  %s0, 256, %s17, [#allocation3], 128, 128, 8
    $region5: #{output_interface_forward_training.5} parent=1 // pred_fallthru
      _
    // Predicated region
    $region6: #{output_interface_forward_training.5} parent=1 // pred_check
      _
    $region7: #{output_interface_forward_training.5} parent=1 // pred_check_branch
      %24 = sbr.rel (0) target = $region9
    $region8: #{output_interface_forward_training.5} parent=1 // pred_region
      %s26 = ssub.s32 256, 256
      %27 = vsyncadd [#allocation6], %s26
      %s28 = sshll.u32 [#allocation5], 4
      %s29 = int_to_ptr.vmem [resolvable:$true] %s28
      %34 = dma.hbm_to_vmem [thread:$0]  %s1, 256, %s29, [#allocation6], 64, 64, 4
    $region9: #{output_interface_forward_training.5} parent=1 // pred_fallthru
      _
    // Predicated region
    $region10: #{output_interface_forward_training.5} parent=1 // pred_check
      _
    $region11: #{output_interface_forward_training.5} parent=1 // pred_check_branch
      %36 = sbr.rel (0) target = $region13
    $region12: #{output_interface_forward_training.5} parent=1 // pred_region
      %s38 = ssub.s32 16, 16
      %39 = vsyncadd [#allocation6], %s38
      %s41 = sshll.u32 [#allocation7], 4
      %s42 = int_to_ptr.vmem [resolvable:$true] %s41
      %44 = dma.hbm_to_vmem [thread:$0]  %s2, 16, %s42, [#allocation6]
    $region13: #{output_interface_forward_training.5} parent=1 // pred_fallthru
      _
    // Predicated region
    $region14: #{output_interface_forward_training.5} parent=1 // pred_check
      _
    $region15: #{output_interface_forward_training.5} parent=1 // pred_check_branch
      %46 = sbr.rel (0) target = $region17
    $region16: #{output_interface_forward_training.5} parent=1 // pred_region
      %47 = dma.done [#allocation3], 256
    $region17: #{output_interface_forward_training.5} parent=1 // pred_fallthru
      _
    // Predicated region
    $region18: #{output_interface_forward_training.5} parent=1 // pred_check
      _
    $region19: #{output_interface_forward_training.5} parent=1 // pred_check_branch
      %49 = sbr.rel (0) target = $region21
    $region20: #{output_interface_forward_training.5} parent=1 // pred_region
      %50 = dma.done [#allocation6], 256
    $region21: #{output_interface_forward_training.5} parent=1 // pred_fallthru
      _
    // Predicated region
    $region22: #{output_interface_forward_training.5} parent=1 // pred_check
      _
    $region23: #{output_interface_forward_training.5} parent=1 // pred_check_branch
      %52 = sbr.rel (0) target = $region25
    $region24: #{output_interface_forward_training.5} parent=1 // pred_region
      %53 = dma.done [#allocation6], 16
    $region25: #{output_interface_forward_training.5} parent=1 // pred_fallthru
      _
    %v55 = vld [vmem:[#allocation2] sm:$0xff]
    %v56 = vld [vmem:[#allocation2 + $0x8] sm:$0xff]
    %v57 = vpack.c.bf16 %v56, %v55
    %v58 = vld [vmem:[#allocation5] sm:$0xf]
    %v59 = vld [vmem:[#allocation5 + $0x4] sm:$0xf]
    %v60 = vld [vmem:[#allocation5 + $0x8] sm:$0xf]
    %v61 = vld [vmem:[#allocation5 + $0xc] sm:$0xf]
    %v62 = vld [vmem:[#allocation7] sm:$0x1]
    %v64 = vlaneseq
    %v65 = vshrl.u32 %v64, 7
    %v66 = vsub.s32 0, %v65
    %v67 = vrot.slane %v62, %v66
    %v73 = vunpack.c.l.b16 %v58
    %v74 = vunpack.c.l.b16 %v59
    %v75 = vunpack.c.l.b16 %v60
    %v76 = vunpack.c.l.b16 %v61
    %v77 = vpack.c.b16 %v74, %v73
    %v78 = vpack.c.b16 %v76, %v75
    %vm81 = vcmask 261120
    %v83 = vsel %vm81, %v57, 0
    %85 = vmatprep.subr.bf16.mxu0 0
    %86 = vmatpush1.bf16.msra.mxu0 %v77
    %87 = vmatprep.subr.bf16.mxu0 0
    %88 = vmatpush1.bf16.msra.mxu0 %v78
    %89 = vmatprep.subr.bf16.mxu0 0
    %90 = vmatpush1.bf16.msra.mxu0 0
    %91 = vmatprep.subr.bf16.mxu0 0
    %92 = vmatpush1.bf16.msra.mxu0 0
    %93 = vmatprep.subr.bf16.mxu0 0
    %94 = vmatpush1.bf16.msra.mxu0 0
    %95 = vmatprep.subr.bf16.mxu0 0
    %96 = vmatpush1.bf16.msra.mxu0 0
    %97 = vmatprep.subr.bf16.mxu0 0
    %98 = vmatpush1.bf16.msra.mxu0 0
    %99 = vmatprep.subr.bf16.mxu0 0
    %100 = vmatpush1.bf16.msra.mxu0 0
    %101 = vmatprep.subr.bf16.mxu0 0
    %102 = vmatpush1.bf16.msra.mxu0 0
    %103 = vmatprep.subr.bf16.mxu0 0
    %104 = vmatpush1.bf16.msra.mxu0 0
    %105 = vmatprep.subr.bf16.mxu0 0
    %106 = vmatpush1.bf16.msra.mxu0 0
    %107 = vmatprep.subr.bf16.mxu0 0
    %108 = vmatpush1.bf16.msra.mxu0 0
    %109 = vmatprep.subr.bf16.mxu0 0
    %110 = vmatpush1.bf16.msra.mxu0 0
    %111 = vmatprep.subr.bf16.mxu0 0
    %112 = vmatpush1.bf16.msra.mxu0 0
    %113 = vmatprep.subr.bf16.mxu0 0
    %114 = vmatpush1.bf16.msra.mxu0 0
    %115 = vmatprep.subr.bf16.mxu0 0
    %116 = vmatpush1.bf16.msra.mxu0 0
    %117 = vmatprep.mubr.bf16.mxu0 0
    %118 = vmatmul.mubr.bf16.gmra.mrb[0].mxu0 %v83
    %v119 = vpop.f32.mrb[0].mxu0
    %v120 = vadd.f32 %v67, %v119
    %v121 = vpop.f32.mrb[0].mxu0
    %v122 = vpop.f32.mrb[0].mxu0
    %v123 = vadd.f32 %v67, %v122
    %v124 = vpop.f32.mrb[0].mxu0
    %125 = vdwg.mxu0
    %126 = vst.msk [vmem:[#allocation8] sm:$0xff] %vm81, %v120
    %127 = vst.msk [vmem:[#allocation8 + $0x8] sm:$0xff] %vm81, %v123
    // Predicated region
    $region26: #{output_interface_forward_training.5} parent=1 // pred_check
      _
    $region27: #{output_interface_forward_training.5} parent=1 // pred_check_branch
      %129 = sbr.rel (0) target = $region29
    $region28: #{output_interface_forward_training.5} parent=1 // pred_region
      %s131 = ssub.s32 256, 256
      %132 = vsyncadd [#allocation4], %s131
      %s133 = sshll.u32 [#allocation8], 4
      %s134 = int_to_ptr.vmem [resolvable:$true] %s133
      %139 = dma.vmem_to_hbm [thread:$0]  %s134, 256, %s3, [#allocation4], 128, 128, 8
    $region29: #{output_interface_forward_training.5} parent=1 // pred_fallthru
      _
    // Predicated region
    $region30: #{output_interface_forward_training.5} parent=1 // pred_check
      _
    $region31: #{output_interface_forward_training.5} parent=1 // pred_check_branch
      %141 = sbr.rel (0) target = $region33
    $region32: #{output_interface_forward_training.5} parent=1 // pred_region
      %142 = dma.done [#allocation4], 256
    $region33: #{output_interface_forward_training.5} parent=1 // pred_fallthru
      _
    %143 = vsyncpa [#allocation3], 1
    %144 = vsyncpa [#allocation6], 1
    %145 = vsyncpa [#allocation4], 1

// kernel: output_interface_forward_training.3
$region0: #{output_interface_forward_training.3}
  #allocation0 [shape = 'u32[]', space=smem, size = 0x4, offset = 0x4, fixed_abs, tag = 'smem constant byte address 0x4 - core index']
  #allocation1 [shape = 'u32[144,128]{1,0:T(1,128)}', space=vmem, size = 0x12000, scoped, tag = 'internal scratch']
  %s0 = inlined_call_operand.hbm [shape: f32[2,64], index: 0, kind: input, shape index: {}]
  %s1 = inlined_call_operand.hbm [shape: bf16[64,32], index: 1, kind: input, shape index: {}]
  %s2 = inlined_call_operand.hbm [shape: f32[1,32], index: 2, kind: input, shape index: {}]
  %s3 = inlined_call_operand.hbm [shape: f32[1,32], index: 3, kind: input, shape index: {}]
  %s4 = inlined_call_operand.hbm [shape: f32[1,32], index: 4, kind: input, shape index: {}]
  %s5 = inlined_call_operand.hbm [shape: bf16[2,32,32], index: 5, kind: input, shape index: {}]
  %s6 = inlined_call_operand.hbm [shape: f32[2,1,32], index: 6, kind: input, shape index: {}]
  %s7 = inlined_call_operand.hbm [shape: bf16[2,32,32], index: 7, kind: input, shape index: {}]
  %s8 = inlined_call_operand.hbm [shape: f32[2,1,32], index: 8, kind: input, shape index: {}]
  %s9 = inlined_call_operand.hbm [shape: f32[2,2,32], index: 9, kind: output, shape index: {}]
  %s10 = sld [smem:[#allocation0]]
  $region82: #{output_interface_forward_training.3} parent=0
    _
  %s12 = ssub.s32 1, %s10
  %s13 = scalar_select 0, %s12, %s10
  $region1: #{output_interface_forward_training.3} parent=0
    #allocation2 [shape = 'u8[1024]{0}', space=vmem, size = 0x400, scoped, tag = 'input window, operand 0, single buffered']
    #allocation3 [shape = 's32[1]{0}', space=sflag, size = 0x4, scoped, tag = 'scoped memory for output_interface_forward_training.3']
    #allocation4 [shape = 's32[1]{0}', space=sflag, size = 0x4, scoped, tag = 'scoped memory for output_interface_forward_training.3']
    #allocation5 [shape = 'u8[16384]{0}', space=vmem, size = 0x4000, scoped, tag = 'input window, operand 1, single buffered']
    #allocation6 [shape = 's32[1]{0}', space=sflag, size = 0x4, scoped, tag = 'scoped memory for output_interface_forward_training.3']
    #allocation7 [shape = 'u8[512]{0}', space=vmem, size = 0x400, scoped, tag = 'input window, operand 2, single buffered']
    #allocation8 [shape = 'u8[512]{0}', space=vmem, size = 0x400, scoped, tag = 'input window, operand 3, single buffered']
    #allocation9 [shape = 's32[1]{0}', space=sflag, size = 0x4, scoped, tag = 'scoped memory for output_interface_forward_training.3']
    #allocation10 [shape = 'u8[512]{0}', space=vmem, size = 0x400, scoped, tag = 'input window, operand 4, single buffered']
    #allocation11 [shape = 'u8[16384]{0}', space=vmem, size = 0x4000, scoped, tag = 'input window, operand 5, single buffered']
    #allocation12 [shape = 's32[1]{0}', space=sflag, size = 0x4, scoped, tag = 'scoped memory for output_interface_forward_training.3']
    #allocation13 [shape = 'u8[1024]{0}', space=vmem, size = 0x400, scoped, tag = 'input window, operand 6, single buffered']
    #allocation14 [shape = 'u8[16384]{0}', space=vmem, size = 0x4000, scoped, tag = 'input window, operand 7, single buffered']
    #allocation15 [shape = 's32[1]{0}', space=sflag, size = 0x4, scoped, tag = 'scoped memory for output_interface_forward_training.3']
    #allocation16 [shape = 'u8[1024]{0}', space=vmem, size = 0x400, scoped, tag = 'input window, operand 8, single buffered']
    #allocation17 [shape = 'u8[2048]{0}', space=vmem, size = 0x800, scoped, tag = 'output window, operand 0, single buffered']
    %14 = vsyncpa [#allocation3], 0
    %15 = vsyncpa [#allocation6], 0
    %16 = vsyncpa [#allocation9], 0
    %17 = vsyncpa [#allocation12], 0
    %18 = vsyncpa [#allocation15], 0
    %19 = vsyncpa [#allocation4], 0
    // Predicated region
    $region2: #{output_interface_forward_training.3} parent=1 // pred_check
      _
    $region3: #{output_interface_forward_training.3} parent=1 // pred_check_branch
      %21 = sbr.rel (0) target = $region5
    $region4: #{output_interface_forward_training.3} parent=1 // pred_region
      %s23 = ssub.s32 32, 32
      %24 = vsyncadd [#allocation3], %s23
      %s26 = sshll.u32 [#allocation2], 4
      %s27 = int_to_ptr.vmem [resolvable:$true] %s26
      %29 = dma.hbm_to_vmem [thread:$0]  %s0, 32, %s27, [#allocation3]
    $region5: #{output_interface_forward_training.3} parent=1 // pred_fallthru
      _
    // Predicated region
    $region6: #{output_interface_forward_training.3} parent=1 // pred_check
      _
    $region7: #{output_interface_forward_training.3} parent=1 // pred_check_branch
      %31 = sbr.rel (0) target = $region9
    $region8: #{output_interface_forward_training.3} parent=1 // pred_region
      %s33 = ssub.s32 512, 512
      %34 = vsyncadd [#allocation6], %s33
      %s35 = sshll.u32 [#allocation5], 4
      %s36 = int_to_ptr.vmem [resolvable:$true] %s35
      %41 = dma.hbm_to_vmem [thread:$0]  %s1, 512, %s36, [#allocation6], 64, 64, 4
    $region9: #{output_interface_forward_training.3} parent=1 // pred_fallthru
      _
    // Predicated region
    $region10: #{output_interface_forward_training.3} parent=1 // pred_check
      _
    $region11: #{output_interface_forward_training.3} parent=1 // pred_check_branch
      %43 = sbr.rel (0) target = $region13
    $region12: #{output_interface_forward_training.3} parent=1 // pred_region
      %s45 = ssub.s32 16, 16
      %46 = vsyncadd [#allocation6], %s45
      %s48 = sshll.u32 [#allocation7], 4
      %s49 = int_to_ptr.vmem [resolvable:$true] %s48
      %51 = dma.hbm_to_vmem [thread:$0]  %s2, 16, %s49, [#allocation6]
    $region13: #{output_interface_forward_training.3} parent=1 // pred_fallthru
      _
    // Predicated region
    $region14: #{output_interface_forward_training.3} parent=1 // pred_check
      _
    $region15: #{output_interface_forward_training.3} parent=1 // pred_check_branch
      %53 = sbr.rel (0) target = $region17
    $region16: #{output_interface_forward_training.3} parent=1 // pred_region
      %s55 = ssub.s32 16, 16
      %56 = vsyncadd [#allocation9], %s55
      %s58 = sshll.u32 [#allocation8], 4
      %s59 = int_to_ptr.vmem [resolvable:$true] %s58
      %61 = dma.hbm_to_vmem [thread:$0]  %s3, 16, %s59, [#allocation9]
    $region17: #{output_interface_forward_training.3} parent=1 // pred_fallthru
      _
    // Predicated region
    $region18: #{output_interface_forward_training.3} parent=1 // pred_check
      _
    $region19: #{output_interface_forward_training.3} parent=1 // pred_check_branch
      %63 = sbr.rel (0) target = $region21
    $region20: #{output_interface_forward_training.3} parent=1 // pred_region
      %s65 = ssub.s32 16, 16
      %66 = vsyncadd [#allocation9], %s65
      %s68 = sshll.u32 [#allocation10], 4
      %s69 = int_to_ptr.vmem [resolvable:$true] %s68
      %71 = dma.hbm_to_vmem [thread:$0]  %s4, 16, %s69, [#allocation9]
    $region21: #{output_interface_forward_training.3} parent=1 // pred_fallthru
      _
    // Predicated region
    $region22: #{output_interface_forward_training.3} parent=1 // pred_check
      _
    $region23: #{output_interface_forward_training.3} parent=1 // pred_check_branch
      %73 = sbr.rel (0) target = $region25
    $region24: #{output_interface_forward_training.3} parent=1 // pred_region
      %s75 = ssub.s32 512, 512
      %76 = vsyncadd [#allocation12], %s75
      %s77 = sshll.u32 [#allocation11], 4
      %s78 = int_to_ptr.vmem [resolvable:$true] %s77
      %83 = dma.hbm_to_vmem [thread:$0]  %s5, 512, %s78, [#allocation12], 64, 64, 4
    $region25: #{output_interface_forward_training.3} parent=1 // pred_fallthru
      _
    // Predicated region
    $region26: #{output_interface_forward_training.3} parent=1 // pred_check
      _
    $region27: #{output_interface_forward_training.3} parent=1 // pred_check_branch
      %85 = sbr.rel (0) target = $region29
    $region28: #{output_interface_forward_training.3} parent=1 // pred_region
      %s87 = ssub.s32 32, 32
      %88 = vsyncadd [#allocation12], %s87
      %s89 = sshll.u32 [#allocation13], 4
      %s90 = int_to_ptr.vmem [resolvable:$true] %s89
      %95 = dma.hbm_to_vmem [thread:$0]  %s6, 32, %s90, [#allocation12], 16, 16, 1
    $region29: #{output_interface_forward_training.3} parent=1 // pred_fallthru
      _
    // Predicated region
    $region30: #{output_interface_forward_training.3} parent=1 // pred_check
      _
    $region31: #{output_interface_forward_training.3} parent=1 // pred_check_branch
      %97 = sbr.rel (0) target = $region33
    $region32: #{output_interface_forward_training.3} parent=1 // pred_region
      %s99 = ssub.s32 512, 512
      %100 = vsyncadd [#allocation15], %s99
      %s101 = sshll.u32 [#allocation14], 4
      %s102 = int_to_ptr.vmem [resolvable:$true] %s101
      %107 = dma.hbm_to_vmem [thread:$0]  %s7, 512, %s102, [#allocation15], 64, 64, 4
    $region33: #{output_interface_forward_training.3} parent=1 // pred_fallthru
      _
    // Predicated region
    $region34: #{output_interface_forward_training.3} parent=1 // pred_check
      _
    $region35: #{output_interface_forward_training.3} parent=1 // pred_check_branch
      %109 = sbr.rel (0) target = $region37
    $region36: #{output_interface_forward_training.3} parent=1 // pred_region
      %s111 = ssub.s32 32, 32
      %112 = vsyncadd [#allocation15], %s111
      %s113 = sshll.u32 [#allocation16], 4
      %s114 = int_to_ptr.vmem [resolvable:$true] %s113
      %119 = dma.hbm_to_vmem [thread:$0]  %s8, 32, %s114, [#allocation15], 16, 16, 1
    $region37: #{output_interface_forward_training.3} parent=1 // pred_fallthru
      _
    // Predicated region
    $region38: #{output_interface_forward_training.3} parent=1 // pred_check
      _
    $region39: #{output_interface_forward_training.3} parent=1 // pred_check_branch
      %121 = sbr.rel (0) target = $region41
    $region40: #{output_interface_forward_training.3} parent=1 // pred_region
      %122 = dma.done [#allocation3], 32
    $region41: #{output_interface_forward_training.3} parent=1 // pred_fallthru
      _
    // Predicated region
    $region42: #{output_interface_forward_training.3} parent=1 // pred_check
      _
    $region43: #{output_interface_forward_training.3} parent=1 // pred_check_branch
      %124 = sbr.rel (0) target = $region45
    $region44: #{output_interface_forward_training.3} parent=1 // pred_region
      %125 = dma.done [#allocation6], 512
    $region45: #{output_interface_forward_training.3} parent=1 // pred_fallthru
      _
    // Predicated region
    $region46: #{output_interface_forward_training.3} parent=1 // pred_check
      _
    $region47: #{output_interface_forward_training.3} parent=1 // pred_check_branch
      %127 = sbr.rel (0) target = $region49
    $region48: #{output_interface_forward_training.3} parent=1 // pred_region
      %128 = dma.done [#allocation6], 16
    $region49: #{output_interface_forward_training.3} parent=1 // pred_fallthru
      _
    // Predicated region
    $region50: #{output_interface_forward_training.3} parent=1 // pred_check
      _
    $region51: #{output_interface_forward_training.3} parent=1 // pred_check_branch
      %130 = sbr.rel (0) target = $region53
    $region52: #{output_interface_forward_training.3} parent=1 // pred_region
      %131 = dma.done [#allocation9], 16
    $region53: #{output_interface_forward_training.3} parent=1 // pred_fallthru
      _
    // Predicated region
    $region54: #{output_interface_forward_training.3} parent=1 // pred_check
      _
    $region55: #{output_interface_forward_training.3} parent=1 // pred_check_branch
      %133 = sbr.rel (0) target = $region57
    $region56: #{output_interface_forward_training.3} parent=1 // pred_region
      %134 = dma.done [#allocation9], 16
    $region57: #{output_interface_forward_training.3} parent=1 // pred_fallthru
      _
    // Predicated region
    $region58: #{output_interface_forward_training.3} parent=1 // pred_check
      _
    $region59: #{output_interface_forward_training.3} parent=1 // pred_check_branch
      %136 = sbr.rel (0) target = $region61
    $region60: #{output_interface_forward_training.3} parent=1 // pred_region
      %137 = dma.done [#allocation12], 512
    $region61: #{output_interface_forward_training.3} parent=1 // pred_fallthru
      _
    // Predicated region
    $region62: #{output_interface_forward_training.3} parent=1 // pred_check
      _
    $region63: #{output_interface_forward_training.3} parent=1 // pred_check_branch
      %139 = sbr.rel (0) target = $region65
    $region64: #{output_interface_forward_training.3} parent=1 // pred_region
      %140 = dma.done [#allocation12], 32
    $region65: #{output_interface_forward_training.3} parent=1 // pred_fallthru
      _
    // Predicated region
    $region66: #{output_interface_forward_training.3} parent=1 // pred_check
      _
    $region67: #{output_interface_forward_training.3} parent=1 // pred_check_branch
      %142 = sbr.rel (0) target = $region69
    $region68: #{output_interface_forward_training.3} parent=1 // pred_region
      %143 = dma.done [#allocation15], 512
    $region69: #{output_interface_forward_training.3} parent=1 // pred_fallthru
      _
    // Predicated region
    $region70: #{output_interface_forward_training.3} parent=1 // pred_check
      _
    $region71: #{output_interface_forward_training.3} parent=1 // pred_check_branch
      %145 = sbr.rel (0) target = $region73
    $region72: #{output_interface_forward_training.3} parent=1 // pred_region
      %146 = dma.done [#allocation15], 32
    $region73: #{output_interface_forward_training.3} parent=1 // pred_fallthru
      _
    %v148 = vld [vmem:[#allocation2] sm:$0x3]
    %v149 = vpack.c.bf16 %v148, %v148
    %v150 = vld [vmem:[#allocation5] sm:$0xf]
    %v151 = vld [vmem:[#allocation5 + $0x4] sm:$0xf]
    %v152 = vld [vmem:[#allocation5 + $0x8] sm:$0xf]
    %v153 = vld [vmem:[#allocation5 + $0xc] sm:$0xf]
    %v154 = vld [vmem:[#allocation5 + $0x10] sm:$0xf]
    %v155 = vld [vmem:[#allocation5 + $0x14] sm:$0xf]
    %v156 = vld [vmem:[#allocation5 + $0x18] sm:$0xf]
    %v157 = vld [vmem:[#allocation5 + $0x1c] sm:$0xf]
    %v158 = vld [vmem:[#allocation7] sm:$0x1]
    %v160 = vlaneseq
    %v161 = vshrl.u32 %v160, 7
    %v162 = vsub.s32 0, %v161
    %v163 = vrot.slane %v158, %v162
    %v173 = vunpack.c.l.b16 %v150
    %v174 = vunpack.c.l.b16 %v151
    %v175 = vunpack.c.l.b16 %v152
    %v176 = vunpack.c.l.b16 %v153
    %v177 = vunpack.c.l.b16 %v154
    %v178 = vunpack.c.l.b16 %v155
    %v179 = vunpack.c.l.b16 %v156
    %v180 = vunpack.c.l.b16 %v157
    %v181 = vpack.c.b16 %v174, %v173
    %v182 = vpack.c.b16 %v176, %v175
    %v183 = vpack.c.b16 %v178, %v177
    %v184 = vpack.c.b16 %v180, %v179
    %vm189 = vcmask 523264
    %v191 = vsel %vm189, %v149, 0
    %193 = vmatprep.subr.bf16.mxu0 0
    %194 = vmatpush1.bf16.msra.mxu0 %v181
    %195 = vmatprep.subr.bf16.mxu0 0
    %196 = vmatpush1.bf16.msra.mxu0 %v182
    %197 = vmatprep.subr.bf16.mxu0 0
    %198 = vmatpush1.bf16.msra.mxu0 %v183
    %199 = vmatprep.subr.bf16.mxu0 0
    %200 = vmatpush1.bf16.msra.mxu0 %v184
    %201 = vmatprep.subr.bf16.mxu0 0
    %202 = vmatpush1.bf16.msra.mxu0 0
    %203 = vmatprep.subr.bf16.mxu0 0
    %204 = vmatpush1.bf16.msra.mxu0 0
    %205 = vmatprep.subr.bf16.mxu0 0
    %206 = vmatpush1.bf16.msra.mxu0 0
    %207 = vmatprep.subr.bf16.mxu0 0
    %208 = vmatpush1.bf16.msra.mxu0 0
    %209 = vmatprep.subr.bf16.mxu0 0
    %210 = vmatpush1.bf16.msra.mxu0 0
    %211 = vmatprep.subr.bf16.mxu0 0
    %212 = vmatpush1.bf16.msra.mxu0 0
    %213 = vmatprep.subr.bf16.mxu0 0
    %214 = vmatpush1.bf16.msra.mxu0 0
    %215 = vmatprep.subr.bf16.mxu0 0
    %216 = vmatpush1.bf16.msra.mxu0 0
    %217 = vmatprep.subr.bf16.mxu0 0
    %218 = vmatpush1.bf16.msra.mxu0 0
    %219 = vmatprep.subr.bf16.mxu0 0
    %220 = vmatpush1.bf16.msra.mxu0 0
    %221 = vmatprep.subr.bf16.mxu0 0
    %222 = vmatpush1.bf16.msra.mxu0 0
    %223 = vmatprep.subr.bf16.mxu0 0
    %224 = vmatpush1.bf16.msra.mxu0 0
    %225 = vmatprep.mubr.bf16.mxu0 0
    %226 = vmatmul.mubr.bf16.gmra.mrb[0].mxu0 %v191
    %v227 = vpop.f32.mrb[0].mxu0
    %v228 = vadd.f32 %v163, %v227
    %v229 = vpop.f32.mrb[0].mxu0
    %v230 = vpop.f32.mrb[0].mxu0
    %v231 = vpop.f32.mrb[0].mxu0
    %232 = vdwg.mxu0
    %v233 = vld [vmem:[#allocation8] sm:$0x1]
    %v234 = vld [vmem:[#allocation10] sm:$0x1]
    %vm235 = vcmask 254976
    %v236 = vsel %vm235, %v228, 0.0
    %237 = vadd.xlane.f32.xlu0 %v236
    %v238 = vpop.xlane.xlu0 %237
    %v239 = vrcp.pop 32.0
    %v240 = vmul.f32 %v238, %v239
    %v241 = vsub.f32 %v228, %v240
    %v242 = vmul.f32 %v241, %v241
    %v243 = vsel %vm235, %v242, 0.0
    %244 = vadd.xlane.f32.xlu0 %v243
    %v245 = vpop.xlane.xlu0 %244
    %v246 = vmul.f32 %v245, %v239
    %v247 = vadd.f32 %v246, 1e-05
    %v248 = vrsqrt.pop %v247
    %v249 = vmul.f32 %v241, %v248
    %v251 = vlaneseq
    %v252 = vshrl.u32 %v251, 7
    %v253 = vsub.s32 0, %v252
    %v254 = vrot.slane %v233, %v253
    %v256 = vmul.f32 %v249, %v254
    %v258 = vlaneseq
    %v259 = vshrl.u32 %v258, 7
    %v260 = vsub.s32 0, %v259
    %v261 = vrot.slane %v234, %v260
    %v263 = vadd.f32 %v256, %v261
    %v264 = vpack.c.bf16 %v263, %v263
    %v265 = vld [vmem:[#allocation11] sm:$0xf]
    %v266 = vld [vmem:[#allocation11 + $0x4] sm:$0xf]
    %v267 = vld [vmem:[#allocation11 + $0x8] sm:$0xf]
    %v268 = vld [vmem:[#allocation11 + $0xc] sm:$0xf]
    %v269 = vld [vmem:[#allocation13] sm:$0x1]
    %v271 = vlaneseq
    %v272 = vshrl.u32 %v271, 7
    %v273 = vsub.s32 0, %v272
    %v274 = vrot.slane %v269, %v273
    %v280 = vunpack.c.l.b16 %v265
    %v281 = vunpack.c.l.b16 %v266
    %v282 = vunpack.c.l.b16 %v267
    %v283 = vunpack.c.l.b16 %v268
    %v284 = vpack.c.b16 %v281, %v280
    %v285 = vpack.c.b16 %v283, %v282
    %vm288 = vcmask 261120
    %v290 = vsel %vm288, %v264, 0
    %292 = vmatprep.subr.bf16.mxu0 0
    %293 = vmatpush1.bf16.msra.mxu0 %v284
    %294 = vmatprep.subr.bf16.mxu0 0
    %295 = vmatpush1.bf16.msra.mxu0 %v285
    %296 = vmatprep.subr.bf16.mxu0 0
    %297 = vmatpush1.bf16.msra.mxu0 0
    %298 = vmatprep.subr.bf16.mxu0 0
    %299 = vmatpush1.bf16.msra.mxu0 0
    %300 = vmatprep.subr.bf16.mxu0 0
    %301 = vmatpush1.bf16.msra.mxu0 0
    %302 = vmatprep.subr.bf16.mxu0 0
    %303 = vmatpush1.bf16.msra.mxu0 0
    %304 = vmatprep.subr.bf16.mxu0 0
    %305 = vmatpush1.bf16.msra.mxu0 0
    %306 = vmatprep.subr.bf16.mxu0 0
    %307 = vmatpush1.bf16.msra.mxu0 0
    %308 = vmatprep.subr.bf16.mxu0 0
    %309 = vmatpush1.bf16.msra.mxu0 0
    %310 = vmatprep.subr.bf16.mxu0 0
    %311 = vmatpush1.bf16.msra.mxu0 0
    %312 = vmatprep.subr.bf16.mxu0 0
    %313 = vmatpush1.bf16.msra.mxu0 0
    %314 = vmatprep.subr.bf16.mxu0 0
    %315 = vmatpush1.bf16.msra.mxu0 0
    %316 = vmatprep.subr.bf16.mxu0 0
    %317 = vmatpush1.bf16.msra.mxu0 0
    %318 = vmatprep.subr.bf16.mxu0 0
    %319 = vmatpush1.bf16.msra.mxu0 0
    %320 = vmatprep.subr.bf16.mxu0 0
    %321 = vmatpush1.bf16.msra.mxu0 0
    %322 = vmatprep.subr.bf16.mxu0 0
    %323 = vmatpush1.bf16.msra.mxu0 0
    %324 = vmatprep.mubr.bf16.mxu0 0
    %325 = vmatmul.mubr.bf16.gmra.mrb[0].mxu0 %v290
    %v326 = vpop.f32.mrb[0].mxu0
    %v327 = vadd.f32 %v274, %v326
    %v328 = vpop.f32.mrb[0].mxu0
    %v329 = vpop.f32.mrb[0].mxu0
    %v330 = vpop.f32.mrb[0].mxu0
    %331 = vdwg.mxu0
    %v332 = vpack.c.bf16 %v327, %v327
    %v333 = vld [vmem:[#allocation14] sm:$0xf]
    %v334 = vld [vmem:[#allocation14 + $0x4] sm:$0xf]
    %v335 = vld [vmem:[#allocation14 + $0x8] sm:$0xf]
    %v336 = vld [vmem:[#allocation14 + $0xc] sm:$0xf]
    %v337 = vld [vmem:[#allocation16] sm:$0x1]
    %v339 = vlaneseq
    %v340 = vshrl.u32 %v339, 7
    %v341 = vsub.s32 0, %v340
    %v342 = vrot.slane %v337, %v341
    %v348 = vunpack.c.l.b16 %v333
    %v349 = vunpack.c.l.b16 %v334
    %v350 = vunpack.c.l.b16 %v335
    %v351 = vunpack.c.l.b16 %v336
    %v352 = vpack.c.b16 %v349, %v348
    %v353 = vpack.c.b16 %v351, %v350
    %v357 = vsel %vm288, %v332, 0
    %359 = vmatprep.subr.bf16.mxu0 0
    %360 = vmatpush1.bf16.msra.mxu0 %v352
    %361 = vmatprep.subr.bf16.mxu0 0
    %362 = vmatpush1.bf16.msra.mxu0 %v353
    %363 = vmatprep.subr.bf16.mxu0 0
    %364 = vmatpush1.bf16.msra.mxu0 0
    %365 = vmatprep.subr.bf16.mxu0 0
    %366 = vmatpush1.bf16.msra.mxu0 0
    %367 = vmatprep.subr.bf16.mxu0 0
    %368 = vmatpush1.bf16.msra.mxu0 0
    %369 = vmatprep.subr.bf16.mxu0 0
    %370 = vmatpush1.bf16.msra.mxu0 0
    %371 = vmatprep.subr.bf16.mxu0 0
    %372 = vmatpush1.bf16.msra.mxu0 0
    %373 = vmatprep.subr.bf16.mxu0 0
    %374 = vmatpush1.bf16.msra.mxu0 0
    %375 = vmatprep.subr.bf16.mxu0 0
    %376 = vmatpush1.bf16.msra.mxu0 0
    %377 = vmatprep.subr.bf16.mxu0 0
    %378 = vmatpush1.bf16.msra.mxu0 0
    %379 = vmatprep.subr.bf16.mxu0 0
    %380 = vmatpush1.bf16.msra.mxu0 0
    %381 = vmatprep.subr.bf16.mxu0 0
    %382 = vmatpush1.bf16.msra.mxu0 0
    %383 = vmatprep.subr.bf16.mxu0 0
    %384 = vmatpush1.bf16.msra.mxu0 0
    %385 = vmatprep.subr.bf16.mxu0 0
    %386 = vmatpush1.bf16.msra.mxu0 0
    %387 = vmatprep.subr.bf16.mxu0 0
    %388 = vmatpush1.bf16.msra.mxu0 0
    %389 = vmatprep.subr.bf16.mxu0 0
    %390 = vmatpush1.bf16.msra.mxu0 0
    %391 = vmatprep.mubr.bf16.mxu0 0
    %392 = vmatmul.mubr.bf16.gmra.mrb[0].mxu0 %v357
    %v393 = vpop.f32.mrb[0].mxu0
    %v394 = vadd.f32 %v342, %v393
    %v395 = vpop.f32.mrb[0].mxu0
    %v396 = vpop.f32.mrb[0].mxu0
    %v397 = vpop.f32.mrb[0].mxu0
    %398 = vdwg.mxu0
    %399 = vst.msk [vmem:[#allocation17] sm:$0x3] %vm235, %v394
    %s400 = scalar_lea.vmem [#allocation11], 16
    %v401 = vld [vmem:[%s400] sm:$0xf]
    %v402 = vld [vmem:[%s400 + $0x4] sm:$0xf]
    %v403 = vld [vmem:[%s400 + $0x8] sm:$0xf]
    %v404 = vld [vmem:[%s400 + $0xc] sm:$0xf]
    %s405 = scalar_lea.vmem [#allocation13], 1
    %v406 = vld [vmem:[%s405] sm:$0x1]
    %v408 = vlaneseq
    %v409 = vshrl.u32 %v408, 7
    %v410 = vsub.s32 0, %v409
    %v411 = vrot.slane %v406, %v410
    %v417 = vunpack.c.l.b16 %v401
    %v418 = vunpack.c.l.b16 %v402
    %v419 = vunpack.c.l.b16 %v403
    %v420 = vunpack.c.l.b16 %v404
    %v421 = vpack.c.b16 %v418, %v417
    %v422 = vpack.c.b16 %v420, %v419
    %425 = vmatprep.subr.bf16.mxu0 0
    %426 = vmatpush1.bf16.msra.mxu0 %v421
    %427 = vmatprep.subr.bf16.mxu0 0
    %428 = vmatpush1.bf16.msra.mxu0 %v422
    %429 = vmatprep.subr.bf16.mxu0 0
    %430 = vmatpush1.bf16.msra.mxu0 0
    %431 = vmatprep.subr.bf16.mxu0 0
    %432 = vmatpush1.bf16.msra.mxu0 0
    %433 = vmatprep.subr.bf16.mxu0 0
    %434 = vmatpush1.bf16.msra.mxu0 0
    %435 = vmatprep.subr.bf16.mxu0 0
    %436 = vmatpush1.bf16.msra.mxu0 0
    %437 = vmatprep.subr.bf16.mxu0 0
    %438 = vmatpush1.bf16.msra.mxu0 0
    %439 = vmatprep.subr.bf16.mxu0 0
    %440 = vmatpush1.bf16.msra.mxu0 0
    %441 = vmatprep.subr.bf16.mxu0 0
    %442 = vmatpush1.bf16.msra.mxu0 0
    %443 = vmatprep.subr.bf16.mxu0 0
    %444 = vmatpush1.bf16.msra.mxu0 0
    %445 = vmatprep.subr.bf16.mxu0 0
    %446 = vmatpush1.bf16.msra.mxu0 0
    %447 = vmatprep.subr.bf16.mxu0 0
    %448 = vmatpush1.bf16.msra.mxu0 0
    %449 = vmatprep.subr.bf16.mxu0 0
    %450 = vmatpush1.bf16.msra.mxu0 0
    %451 = vmatprep.subr.bf16.mxu0 0
    %452 = vmatpush1.bf16.msra.mxu0 0
    %453 = vmatprep.subr.bf16.mxu0 0
    %454 = vmatpush1.bf16.msra.mxu0 0
    %455 = vmatprep.subr.bf16.mxu0 0
    %456 = vmatpush1.bf16.msra.mxu0 0
    %457 = vmatprep.mubr.bf16.mxu0 0
    %458 = vmatmul.mubr.bf16.gmra.mrb[0].mxu0 %v290
    %v459 = vpop.f32.mrb[0].mxu0
    %v460 = vadd.f32 %v411, %v459
    %v461 = vpop.f32.mrb[0].mxu0
    %v462 = vpop.f32.mrb[0].mxu0
    %v463 = vpop.f32.mrb[0].mxu0
    %464 = vdwg.mxu0
    %v465 = vpack.c.bf16 %v460, %v460
    %s466 = scalar_lea.vmem [#allocation14], 16
    %v467 = vld [vmem:[%s466] sm:$0xf]
    %v468 = vld [vmem:[%s466 + $0x4] sm:$0xf]
    %v469 = vld [vmem:[%s466 + $0x8] sm:$0xf]
    %v470 = vld [vmem:[%s466 + $0xc] sm:$0xf]
    %s471 = scalar_lea.vmem [#allocation16], 1
    %v472 = vld [vmem:[%s471] sm:$0x1]
    %v474 = vlaneseq
    %v475 = vshrl.u32 %v474, 7
    %v476 = vsub.s32 0, %v475
    %v477 = vrot.slane %v472, %v476
    %v483 = vunpack.c.l.b16 %v467
    %v484 = vunpack.c.l.b16 %v468
    %v485 = vunpack.c.l.b16 %v469
    %v486 = vunpack.c.l.b16 %v470
    %v487 = vpack.c.b16 %v484, %v483
    %v488 = vpack.c.b16 %v486, %v485
    %v492 = vsel %vm288, %v465, 0
    %494 = vmatprep.subr.bf16.mxu0 0
    %495 = vmatpush1.bf16.msra.mxu0 %v487
    %496 = vmatprep.subr.bf16.mxu0 0
    %497 = vmatpush1.bf16.msra.mxu0 %v488
    %498 = vmatprep.subr.bf16.mxu0 0
    %499 = vmatpush1.bf16.msra.mxu0 0
    %500 = vmatprep.subr.bf16.mxu0 0
    %501 = vmatpush1.bf16.msra.mxu0 0
    %502 = vmatprep.subr.bf16.mxu0 0
    %503 = vmatpush1.bf16.msra.mxu0 0
    %504 = vmatprep.subr.bf16.mxu0 0
    %505 = vmatpush1.bf16.msra.mxu0 0
    %506 = vmatprep.subr.bf16.mxu0 0
    %507 = vmatpush1.bf16.msra.mxu0 0
    %508 = vmatprep.subr.bf16.mxu0 0
    %509 = vmatpush1.bf16.msra.mxu0 0
    %510 = vmatprep.subr.bf16.mxu0 0
    %511 = vmatpush1.bf16.msra.mxu0 0
    %512 = vmatprep.subr.bf16.mxu0 0
    %513 = vmatpush1.bf16.msra.mxu0 0
    %514 = vmatprep.subr.bf16.mxu0 0
    %515 = vmatpush1.bf16.msra.mxu0 0
    %516 = vmatprep.subr.bf16.mxu0 0
    %517 = vmatpush1.bf16.msra.mxu0 0
    %518 = vmatprep.subr.bf16.mxu0 0
    %519 = vmatpush1.bf16.msra.mxu0 0
    %520 = vmatprep.subr.bf16.mxu0 0
    %521 = vmatpush1.bf16.msra.mxu0 0
    %522 = vmatprep.subr.bf16.mxu0 0
    %523 = vmatpush1.bf16.msra.mxu0 0
    %524 = vmatprep.subr.bf16.mxu0 0
    %525 = vmatpush1.bf16.msra.mxu0 0
    %526 = vmatprep.mubr.bf16.mxu0 0
    %527 = vmatmul.mubr.bf16.gmra.mrb[0].mxu0 %v492
    %v528 = vpop.f32.mrb[0].mxu0
    %v529 = vadd.f32 %v477, %v528
    %v530 = vpop.f32.mrb[0].mxu0
    %v531 = vpop.f32.mrb[0].mxu0
    %v532 = vpop.f32.mrb[0].mxu0
    %533 = vdwg.mxu0
    %s534 = scalar_lea.vmem [#allocation17], 2
    %535 = vst.msk [vmem:[%s534] sm:$0x3] %vm235, %v529
    // Predicated region
    $region74: #{output_interface_forward_training.3} parent=1 // pred_check
      _
    $region75: #{output_interface_forward_training.3} parent=1 // pred_check_branch
      %537 = sbr.rel (0) target = $region77
    $region76: #{output_interface_forward_training.3} parent=1 // pred_region
      %s539 = ssub.s32 64, 64
      %540 = vsyncadd [#allocation4], %s539
      %s541 = sshll.u32 [#allocation17], 4
      %s542 = int_to_ptr.vmem [resolvable:$true] %s541
      %547 = dma.vmem_to_hbm [thread:$0]  %s542, 64, %s9, [#allocation4], 32, 32, 2
    $region77: #{output_interface_forward_training.3} parent=1 // pred_fallthru
      _
    // Predicated region
    $region78: #{output_interface_forward_training.3} parent=1 // pred_check
      _
    $region79: #{output_interface_forward_training.3} parent=1 // pred_check_branch
      %549 = sbr.rel (0) target = $region81
    $region80: #{output_interface_forward_training.3} parent=1 // pred_region
      %550 = dma.done [#allocation4], 64
    $region81: #{output_interface_forward_training.3} parent=1 // pred_fallthru
      _
    %551 = vsyncpa [#allocation3], 1
    %552 = vsyncpa [#allocation6], 1
    %553 = vsyncpa [#allocation9], 1
    %554 = vsyncpa [#allocation12], 1
    %555 = vsyncpa [#allocation15], 1
    %556 = vsyncpa [#allocation4], 1

// kernel: output_interface_forward_training.4
$region0: #{output_interface_forward_training.4}
  #allocation0 [shape = 'u32[]', space=smem, size = 0x4, offset = 0x4, fixed_abs, tag = 'smem constant byte address 0x4 - core index']
  #allocation1 [shape = 'u32[144,128]{1,0:T(1,128)}', space=vmem, size = 0x12000, scoped, tag = 'internal scratch']
  %s0 = inlined_call_operand.hbm [shape: f32[2,8,32], index: 0, kind: input, shape index: {}]
  %s1 = inlined_call_operand.hbm [shape: f32[1,8,32], index: 1, kind: input, shape index: {}]
  %s2 = inlined_call_operand.hbm [shape: f32[1,32], index: 2, kind: input, shape index: {}]
  %s3 = inlined_call_operand.hbm [shape: f32[1,32], index: 3, kind: input, shape index: {}]
  %s4 = inlined_call_operand.hbm [shape: f32[2,2,1,32], index: 4, kind: input, shape index: {}]
  %s5 = inlined_call_operand.hbm [shape: bf16[2,4,32,8], index: 5, kind: input, shape index: {}]
  %s6 = inlined_call_operand.hbm [shape: bf16[2,4,32,8], index: 6, kind: input, shape index: {}]
  %s7 = inlined_call_operand.hbm [shape: bf16[2,4,32,8], index: 7, kind: input, shape index: {}]
  %s8 = inlined_call_operand.hbm [shape: f32[2,4,1,8], index: 8, kind: input, shape index: {}]
  %s9 = inlined_call_operand.hbm [shape: f32[2,4,1,8], index: 9, kind: input, shape index: {}]
  %s10 = inlined_call_operand.hbm [shape: f32[2,4,1,8], index: 10, kind: input, shape index: {}]
  %s11 = inlined_call_operand.hbm [shape: bf16[2,4,8,32], index: 11, kind: input, shape index: {}]
  %s12 = inlined_call_operand.hbm [shape: f32[2,1,32], index: 12, kind: input, shape index: {}]
  %s13 = inlined_call_operand.hbm [shape: f32[2,1,32], index: 13, kind: input, shape index: {}]
  %s14 = inlined_call_operand.hbm [shape: f32[2,1,32], index: 14, kind: input, shape index: {}]
  %s15 = inlined_call_operand.hbm [shape: f32[2,1,32], index: 15, kind: input, shape index: {}]
  %s16 = inlined_call_operand.hbm [shape: f32[2,1,32], index: 16, kind: input, shape index: {}]
  %s17 = inlined_call_operand.hbm [shape: bf16[2,32,64], index: 17, kind: input, shape index: {}]
  %s18 = inlined_call_operand.hbm [shape: f32[2,1,64], index: 18, kind: input, shape index: {}]
  %s19 = inlined_call_operand.hbm [shape: bf16[2,64,32], index: 19, kind: input, shape index: {}]
  %s20 = inlined_call_operand.hbm [shape: f32[2,1,32], index: 20, kind: input, shape index: {}]
  %s21 = inlined_call_operand.hbm [shape: f32[2,1,32], index: 21, kind: input, shape index: {}]
  %s22 = inlined_call_operand.hbm [shape: f32[2,1,32], index: 22, kind: input, shape index: {}]
  %s23 = inlined_call_operand.hbm [shape: f32[2,8,32], index: 23, kind: output, shape index: {}]
  %s24 = sld [smem:[#allocation0]]
  $region221: #{output_interface_forward_training.4} parent=0
    _
  %s26 = ssub.s32 1, %s24
  %s27 = scalar_select 0, %s26, %s24
  $region1: #{output_interface_forward_training.4} parent=0
    #allocation2 [shape = 'u8[8192]{0}', space=vmem, size = 0x2000, scoped, tag = 'input window, operand 0']
    #allocation3 [shape = 's32[2]{0}', space=sflag, size = 0x8, scoped, tag = 'scoped memory for output_interface_forward_training.4']
    #allocation4 [shape = 's32[2]{0}', space=sflag, size = 0x8, scoped, tag = 'scoped memory for output_interface_forward_training.4']
    #allocation5 [shape = 'u8[4096]{0}', space=vmem, size = 0x1000, scoped, tag = 'input window, operand 1, single buffered']
    #allocation6 [shape = 's32[1]{0}', space=sflag, size = 0x4, scoped, tag = 'scoped memory for output_interface_forward_training.4']
    #allocation7 [shape = 'u8[512]{0}', space=vmem, size = 0x400, scoped, tag = 'input window, operand 2, single buffered']
    #allocation8 [shape = 'u8[512]{0}', space=vmem, size = 0x400, scoped, tag = 'input window, operand 3, single buffered']
    #allocation9 [shape = 's32[1]{0}', space=sflag, size = 0x4, scoped, tag = 'scoped memory for output_interface_forward_training.4']
    #allocation10 [shape = 'u8[1024]{0}', space=vmem, size = 0x400, scoped, tag = 'input window, operand 4']
    #allocation11 [shape = 'u8[65536]{0}', space=vmem, size = 0x10000, scoped, tag = 'input window, operand 5']
    #allocation12 [shape = 'u8[65536]{0}', space=vmem, size = 0x10000, scoped, tag = 'input window, operand 6']
    #allocation13 [shape = 'u8[65536]{0}', space=vmem, size = 0x10000, scoped, tag = 'input window, operand 7']
    #allocation14 [shape = 'u8[4096]{0}', space=vmem, size = 0x1000, scoped, tag = 'input window, operand 8']
    #allocation15 [shape = 'u8[4096]{0}', space=vmem, size = 0x1000, scoped, tag = 'input window, operand 9']
    #allocation16 [shape = 'u8[4096]{0}', space=vmem, size = 0x1000, scoped, tag = 'input window, operand 10']
    #allocation17 [shape = 'u8[16384]{0}', space=vmem, size = 0x4000, scoped, tag = 'input window, operand 11']
    #allocation18 [shape = 'u8[1024]{0}', space=vmem, size = 0x400, scoped, tag = 'input window, operand 12']
    #allocation19 [shape = 'u8[1024]{0}', space=vmem, size = 0x400, scoped, tag = 'input window, operand 13']
    #allocation20 [shape = 'u8[1024]{0}', space=vmem, size = 0x400, scoped, tag = 'input window, operand 14']
    #allocation21 [shape = 'u8[1024]{0}', space=vmem, size = 0x400, scoped, tag = 'input window, operand 15']
    #allocation22 [shape = 'u8[1024]{0}', space=vmem, size = 0x400, scoped, tag = 'input window, operand 16']
    #allocation23 [shape = 'u8[16384]{0}', space=vmem, size = 0x4000, scoped, tag = 'input window, operand 17']
    #allocation24 [shape = 'u8[1024]{0}', space=vmem, size = 0x400, scoped, tag = 'input window, operand 18']
    #allocation25 [shape = 'u8[32768]{0}', space=vmem, size = 0x8000, scoped, tag = 'input window, operand 19']
    #allocation26 [shape = 'u8[1024]{0}', space=vmem, size = 0x400, scoped, tag = 'input window, operand 20']
    #allocation27 [shape = 'u8[1024]{0}', space=vmem, size = 0x400, scoped, tag = 'input window, operand 21']
    #allocation28 [shape = 'u8[1024]{0}', space=vmem, size = 0x400, scoped, tag = 'input window, operand 22']
    #allocation29 [shape = 'u8[8192]{0}', space=vmem, size = 0x2000, scoped, tag = 'output window, operand 0']
    %28 = vsyncpa [#allocation3], 0
    %s29 = scalar_lea.sflag [#allocation3], 1
    %30 = vsyncpa %s29, 0
    %31 = vsyncpa [#allocation6], 0
    %32 = vsyncpa [#allocation9], 0
    %33 = vsyncpa [#allocation4], 0
    %s34 = scalar_lea.sflag [#allocation4], 1
    %35 = vsyncpa %s34, 0
    loop: start=0, step=1, limit=6
    $region2: #{output_interface_forward_training.4} parent=1 // loop_pre_header
      _
    $region3: #{output_interface_forward_training.4} parent=1 // loop_header
      %s37 = sphi 0, %s41
      %p38 = scmp.ge.s32.totalorder %s37, 6
      %s44 = sphi 0, %s56
      %s45 = sphi 0, %s52
      %s46 = sphi 0, %s44
      %s47 = sphi 0, %s45
      %s48 = sphi 0, %s46
      %s49 = sphi 0, %s47
      %s59 = sphi 0, %s61
      %s62 = sphi 0, %s59
      %s63 = sphi 0, %s62
      %s79 = sphi 0, %s63
      %s83 = sphi 0, %s83
      %s85 = sphi 0, %s83
      %s86 = sphi 0, %s85
      %s100 = sphi 0, %s86
      %s104 = sphi 0, %s104
      %s106 = sphi 0, %s104
      %s107 = sphi 0, %s106
      %s121 = sphi 0, %s107
      %s125 = sphi 0, %s125
      %s127 = sphi 0, %s125
      %s128 = sphi 0, %s127
      %s142 = sphi 0, %s128
      %s150 = sphi 0, %s152
      %s153 = sphi 0, %s150
      %s154 = sphi 0, %s153
      %s170 = sphi 0, %s154
      %s176 = sphi 0, %s178
      %s179 = sphi 0, %s176
      %s180 = sphi 0, %s179
      %s196 = sphi 0, %s180
      %s202 = sphi 0, %s204
      %s205 = sphi 0, %s202
      %s206 = sphi 0, %s205
      %s222 = sphi 0, %s206
      %s228 = sphi 0, %s230
      %s231 = sphi 0, %s228
      %s232 = sphi 0, %s231
      %s248 = sphi 0, %s232
      %s254 = sphi 0, %s256
      %s257 = sphi 0, %s254
      %s258 = sphi 0, %s257
      %s274 = sphi 0, %s258
      %s280 = sphi 0, %s282
      %s283 = sphi 0, %s280
      %s284 = sphi 0, %s283
      %s300 = sphi 0, %s284
      %s306 = sphi 0, %s308
      %s309 = sphi 0, %s306
      %s310 = sphi 0, %s309
      %s326 = sphi 0, %s310
      %s332 = sphi 0, %s334
      %s335 = sphi 0, %s332
      %s336 = sphi 0, %s335
      %s352 = sphi 0, %s336
      %s358 = sphi 0, %s360
      %s361 = sphi 0, %s358
      %s362 = sphi 0, %s361
      %s378 = sphi 0, %s362
      %s384 = sphi 0, %s386
      %s387 = sphi 0, %s384
      %s388 = sphi 0, %s387
      %s404 = sphi 0, %s388
      %s410 = sphi 0, %s412
      %s413 = sphi 0, %s410
      %s414 = sphi 0, %s413
      %s430 = sphi 0, %s414
      %s436 = sphi 0, %s438
      %s439 = sphi 0, %s436
      %s440 = sphi 0, %s439
      %s456 = sphi 0, %s440
      %s462 = sphi 0, %s464
      %s465 = sphi 0, %s462
      %s466 = sphi 0, %s465
      %s482 = sphi 0, %s466
      %s488 = sphi 0, %s490
      %s491 = sphi 0, %s488
      %s492 = sphi 0, %s491
      %s508 = sphi 0, %s492
      %s514 = sphi 0, %s516
      %s517 = sphi 0, %s514
      %s518 = sphi 0, %s517
      %s534 = sphi 0, %s518
      %s540 = sphi 0, %s542
      %s543 = sphi 0, %s540
      %s544 = sphi 0, %s543
      %s560 = sphi 0, %s544
      %s566 = sphi 0, %s568
      %s569 = sphi 0, %s566
      %s570 = sphi 0, %s569
      %s586 = sphi 0, %s570
      %s592 = sphi 0, %s594
      %s595 = sphi 0, %s592
      %s596 = sphi 0, %s595
      %s612 = sphi 0, %s596
      %s618 = sphi 0, %s620
      %s621 = sphi 0, %s618
      %s622 = sphi 0, %s621
      %s638 = sphi 0, %s622
      %s644 = sphi 0, %s646
      %s647 = sphi 0, %s644
      %s648 = sphi 0, %s647
      %s664 = sphi 0, %s648
    $region4: #{output_interface_forward_training.4} parent=1 // loop_header_branch
      %40 = sbr.rel (%p38) target = $region8
    $region5: #{output_interface_forward_training.4} parent=1 // loop_body
      %s42 = ssub.s32 %s37, 1
      %s43 = ssub.s32 %s37, 2
      %s50 = sadd.s32 1, %s45
      %p51 = scmp.ge.s32.totalorder %s50, 2
      %s52 = scalar_select %p51, 0, %s50
      %s53 = sadd.s32 1, %s44
      %s54 = scalar_select %p51, %s53, %s44
      %p55 = scmp.ge.s32.totalorder %s54, 2
      %s56 = scalar_select %p55, 0, %s54
      %s57 = ssub.s32 %s44, %s56
      %p58 = scmp.eq.s32.totalorder %s57, 0
      %s60 = sadd.s32 %s59, 1
      %s61 = scalar_select %p58, %s59, %s60
      %p64 = pneg %p58
      %p65 = scmp.eq.s32.totalorder %s37, 3
      %p66 = por %p64, %p65
      %p67 = scmp.ne.s32.totalorder %s59, %s62
      %p68 = scmp.eq.s32.totalorder %s37, 0
      %p69 = por %p67, %p68
      %p70 = scmp.ne.s32.totalorder %s59, %s62
      %p71 = scmp.eq.s32.totalorder %s42, 3
      %p72 = por %p70, %p71
      %p73 = scmp.ne.s32.totalorder %s62, %s63
      %p74 = scmp.eq.s32.totalorder %s42, 0
      %p75 = por %p73, %p74
      %p76 = scmp.ne.s32.totalorder %s62, %s63
      %p77 = scmp.eq.s32.totalorder %s43, 3
      %p78 = por %p76, %p77
      %p80 = scmp.ne.s32.totalorder %s63, %s79
      %p81 = scmp.eq.s32.totalorder %s43, 0
      %p82 = por %p80, %p81
      %s84 = sadd.s32 %s83, 1
      %p87 = scmp.eq.s32.totalorder %s37, 3
      %p88 = scmp.ne.s32.totalorder %s83, %s85
      %p89 = scmp.eq.s32.totalorder %s37, 0
      %p90 = por %p88, %p89
      %p91 = scmp.ne.s32.totalorder %s83, %s85
      %p92 = scmp.eq.s32.totalorder %s42, 3
      %p93 = por %p91, %p92
      %p94 = scmp.ne.s32.totalorder %s85, %s86
      %p95 = scmp.eq.s32.totalorder %s42, 0
      %p96 = por %p94, %p95
      %p97 = scmp.ne.s32.totalorder %s85, %s86
      %p98 = scmp.eq.s32.totalorder %s43, 3
      %p99 = por %p97, %p98
      %p101 = scmp.ne.s32.totalorder %s86, %s100
      %p102 = scmp.eq.s32.totalorder %s43, 0
      %p103 = por %p101, %p102
      %s105 = sadd.s32 %s104, 1
      %p108 = scmp.eq.s32.totalorder %s37, 3
      %p109 = scmp.ne.s32.totalorder %s104, %s106
      %p110 = scmp.eq.s32.totalorder %s37, 0
      %p111 = por %p109, %p110
      %p112 = scmp.ne.s32.totalorder %s104, %s106
      %p113 = scmp.eq.s32.totalorder %s42, 3
      %p114 = por %p112, %p113
      %p115 = scmp.ne.s32.totalorder %s106, %s107
      %p116 = scmp.eq.s32.totalorder %s42, 0
      %p117 = por %p115, %p116
      %p118 = scmp.ne.s32.totalorder %s106, %s107
      %p119 = scmp.eq.s32.totalorder %s43, 3
      %p120 = por %p118, %p119
      %p122 = scmp.ne.s32.totalorder %s107, %s121
      %p123 = scmp.eq.s32.totalorder %s43, 0
      %p124 = por %p122, %p123
      %s126 = sadd.s32 %s125, 1
      %p129 = scmp.eq.s32.totalorder %s37, 3
      %p130 = scmp.ne.s32.totalorder %s125, %s127
      %p131 = scmp.eq.s32.totalorder %s37, 0
      %p132 = por %p130, %p131
      %p133 = scmp.ne.s32.totalorder %s125, %s127
      %p134 = scmp.eq.s32.totalorder %s42, 3
      %p135 = por %p133, %p134
      %p136 = scmp.ne.s32.totalorder %s127, %s128
      %p137 = scmp.eq.s32.totalorder %s42, 0
      %p138 = por %p136, %p137
      %p139 = scmp.ne.s32.totalorder %s127, %s128
      %p140 = scmp.eq.s32.totalorder %s43, 3
      %p141 = por %p139, %p140
      %p143 = scmp.ne.s32.totalorder %s128, %s142
      %p144 = scmp.eq.s32.totalorder %s43, 0
      %p145 = por %p143, %p144
      %s146 = ssub.s32 %s45, %s52
      %s147 = ssub.s32 %s44, %s56
      %s148 = sor.u32 %s146, %s147
      %p149 = scmp.eq.s32.totalorder %s148, 0
      %s151 = sadd.s32 %s150, 1
      %s152 = scalar_select %p149, %s150, %s151
      %p155 = pneg %p149
      %p156 = scmp.eq.s32.totalorder %s37, 3
      %p157 = por %p155, %p156
      %p158 = scmp.ne.s32.totalorder %s150, %s153
      %p159 = scmp.eq.s32.totalorder %s37, 0
      %p160 = por %p158, %p159
      %p161 = scmp.ne.s32.totalorder %s150, %s153
      %p162 = scmp.eq.s32.totalorder %s42, 3
      %p163 = por %p161, %p162
      %p164 = scmp.ne.s32.totalorder %s153, %s154
      %p165 = scmp.eq.s32.totalorder %s42, 0
      %p166 = por %p164, %p165
      %p167 = scmp.ne.s32.totalorder %s153, %s154
      %p168 = scmp.eq.s32.totalorder %s43, 3
      %p169 = por %p167, %p168
      %p171 = scmp.ne.s32.totalorder %s154, %s170
      %p172 = scmp.eq.s32.totalorder %s43, 0
      %p173 = por %p171, %p172
      %s174 = ssub.s32 %s45, %s52
      %p175 = scmp.eq.s32.totalorder %s174, 0
      %s177 = sadd.s32 %s176, 1
      %s178 = scalar_select %p175, %s176, %s177
      %p181 = pneg %p175
      %p182 = scmp.eq.s32.totalorder %s37, 3
      %p183 = por %p181, %p182
      %p184 = scmp.ne.s32.totalorder %s176, %s179
      %p185 = scmp.eq.s32.totalorder %s37, 0
      %p186 = por %p184, %p185
      %p187 = scmp.ne.s32.totalorder %s176, %s179
      %p188 = scmp.eq.s32.totalorder %s42, 3
      %p189 = por %p187, %p188
      %p190 = scmp.ne.s32.totalorder %s179, %s180
      %p191 = scmp.eq.s32.totalorder %s42, 0
      %p192 = por %p190, %p191
      %p193 = scmp.ne.s32.totalorder %s179, %s180
      %p194 = scmp.eq.s32.totalorder %s43, 3
      %p195 = por %p193, %p194
      %p197 = scmp.ne.s32.totalorder %s180, %s196
      %p198 = scmp.eq.s32.totalorder %s43, 0
      %p199 = por %p197, %p198
      %s200 = ssub.s32 %s45, %s52
      %p201 = scmp.eq.s32.totalorder %s200, 0
      %s203 = sadd.s32 %s202, 1
      %s204 = scalar_select %p201, %s202, %s203
      %p207 = pneg %p201
      %p208 = scmp.eq.s32.totalorder %s37, 3
      %p209 = por %p207, %p208
      %p210 = scmp.ne.s32.totalorder %s202, %s205
      %p211 = scmp.eq.s32.totalorder %s37, 0
      %p212 = por %p210, %p211
      %p213 = scmp.ne.s32.totalorder %s202, %s205
      %p214 = scmp.eq.s32.totalorder %s42, 3
      %p215 = por %p213, %p214
      %p216 = scmp.ne.s32.totalorder %s205, %s206
      %p217 = scmp.eq.s32.totalorder %s42, 0
      %p218 = por %p216, %p217
      %p219 = scmp.ne.s32.totalorder %s205, %s206
      %p220 = scmp.eq.s32.totalorder %s43, 3
      %p221 = por %p219, %p220
      %p223 = scmp.ne.s32.totalorder %s206, %s222
      %p224 = scmp.eq.s32.totalorder %s43, 0
      %p225 = por %p223, %p224
      %s226 = ssub.s32 %s45, %s52
      %p227 = scmp.eq.s32.totalorder %s226, 0
      %s229 = sadd.s32 %s228, 1
      %s230 = scalar_select %p227, %s228, %s229
      %p233 = pneg %p227
      %p234 = scmp.eq.s32.totalorder %s37, 3
      %p235 = por %p233, %p234
      %p236 = scmp.ne.s32.totalorder %s228, %s231
      %p237 = scmp.eq.s32.totalorder %s37, 0
      %p238 = por %p236, %p237
      %p239 = scmp.ne.s32.totalorder %s228, %s231
      %p240 = scmp.eq.s32.totalorder %s42, 3
      %p241 = por %p239, %p240
      %p242 = scmp.ne.s32.totalorder %s231, %s232
      %p243 = scmp.eq.s32.totalorder %s42, 0
      %p244 = por %p242, %p243
      %p245 = scmp.ne.s32.totalorder %s231, %s232
      %p246 = scmp.eq.s32.totalorder %s43, 3
      %p247 = por %p245, %p246
      %p249 = scmp.ne.s32.totalorder %s232, %s248
      %p250 = scmp.eq.s32.totalorder %s43, 0
      %p251 = por %p249, %p250
      %s252 = ssub.s32 %s45, %s52
      %p253 = scmp.eq.s32.totalorder %s252, 0
      %s255 = sadd.s32 %s254, 1
      %s256 = scalar_select %p253, %s254, %s255
      %p259 = pneg %p253
      %p260 = scmp.eq.s32.totalorder %s37, 3
      %p261 = por %p259, %p260
      %p262 = scmp.ne.s32.totalorder %s254, %s257
      %p263 = scmp.eq.s32.totalorder %s37, 0
      %p264 = por %p262, %p263
      %p265 = scmp.ne.s32.totalorder %s254, %s257
      %p266 = scmp.eq.s32.totalorder %s42, 3
      %p267 = por %p265, %p266
      %p268 = scmp.ne.s32.totalorder %s257, %s258
      %p269 = scmp.eq.s32.totalorder %s42, 0
      %p270 = por %p268, %p269
      %p271 = scmp.ne.s32.totalorder %s257, %s258
      %p272 = scmp.eq.s32.totalorder %s43, 3
      %p273 = por %p271, %p272
      %p275 = scmp.ne.s32.totalorder %s258, %s274
      %p276 = scmp.eq.s32.totalorder %s43, 0
      %p277 = por %p275, %p276
      %s278 = ssub.s32 %s45, %s52
      %p279 = scmp.eq.s32.totalorder %s278, 0
      %s281 = sadd.s32 %s280, 1
      %s282 = scalar_select %p279, %s280, %s281
      %p285 = pneg %p279
      %p286 = scmp.eq.s32.totalorder %s37, 3
      %p287 = por %p285, %p286
      %p288 = scmp.ne.s32.totalorder %s280, %s283
      %p289 = scmp.eq.s32.totalorder %s37, 0
      %p290 = por %p288, %p289
      %p291 = scmp.ne.s32.totalorder %s280, %s283
      %p292 = scmp.eq.s32.totalorder %s42, 3
      %p293 = por %p291, %p292
      %p294 = scmp.ne.s32.totalorder %s283, %s284
      %p295 = scmp.eq.s32.totalorder %s42, 0
      %p296 = por %p294, %p295
      %p297 = scmp.ne.s32.totalorder %s283, %s284
      %p298 = scmp.eq.s32.totalorder %s43, 3
      %p299 = por %p297, %p298
      %p301 = scmp.ne.s32.totalorder %s284, %s300
      %p302 = scmp.eq.s32.totalorder %s43, 0
      %p303 = por %p301, %p302
      %s304 = ssub.s32 %s45, %s52
      %p305 = scmp.eq.s32.totalorder %s304, 0
      %s307 = sadd.s32 %s306, 1
      %s308 = scalar_select %p305, %s306, %s307
      %p311 = pneg %p305
      %p312 = scmp.eq.s32.totalorder %s37, 3
      %p313 = por %p311, %p312
      %p314 = scmp.ne.s32.totalorder %s306, %s309
      %p315 = scmp.eq.s32.totalorder %s37, 0
      %p316 = por %p314, %p315
      %p317 = scmp.ne.s32.totalorder %s306, %s309
      %p318 = scmp.eq.s32.totalorder %s42, 3
      %p319 = por %p317, %p318
      %p320 = scmp.ne.s32.totalorder %s309, %s310
      %p321 = scmp.eq.s32.totalorder %s42, 0
      %p322 = por %p320, %p321
      %p323 = scmp.ne.s32.totalorder %s309, %s310
      %p324 = scmp.eq.s32.totalorder %s43, 3
      %p325 = por %p323, %p324
      %p327 = scmp.ne.s32.totalorder %s310, %s326
      %p328 = scmp.eq.s32.totalorder %s43, 0
      %p329 = por %p327, %p328
      %s330 = ssub.s32 %s45, %s52
      %p331 = scmp.eq.s32.totalorder %s330, 0
      %s333 = sadd.s32 %s332, 1
      %s334 = scalar_select %p331, %s332, %s333
      %p337 = pneg %p331
      %p338 = scmp.eq.s32.totalorder %s37, 3
      %p339 = por %p337, %p338
      %p340 = scmp.ne.s32.totalorder %s332, %s335
      %p341 = scmp.eq.s32.totalorder %s37, 0
      %p342 = por %p340, %p341
      %p343 = scmp.ne.s32.totalorder %s332, %s335
      %p344 = scmp.eq.s32.totalorder %s42, 3
      %p345 = por %p343, %p344
      %p346 = scmp.ne.s32.totalorder %s335, %s336
      %p347 = scmp.eq.s32.totalorder %s42, 0
      %p348 = por %p346, %p347
      %p349 = scmp.ne.s32.totalorder %s335, %s336
      %p350 = scmp.eq.s32.totalorder %s43, 3
      %p351 = por %p349, %p350
      %p353 = scmp.ne.s32.totalorder %s336, %s352
      %p354 = scmp.eq.s32.totalorder %s43, 0
      %p355 = por %p353, %p354
      %s356 = ssub.s32 %s45, %s52
      %p357 = scmp.eq.s32.totalorder %s356, 0
      %s359 = sadd.s32 %s358, 1
      %s360 = scalar_select %p357, %s358, %s359
      %p363 = pneg %p357
      %p364 = scmp.eq.s32.totalorder %s37, 3
      %p365 = por %p363, %p364
      %p366 = scmp.ne.s32.totalorder %s358, %s361
      %p367 = scmp.eq.s32.totalorder %s37, 0
      %p368 = por %p366, %p367
      %p369 = scmp.ne.s32.totalorder %s358, %s361
      %p370 = scmp.eq.s32.totalorder %s42, 3
      %p371 = por %p369, %p370
      %p372 = scmp.ne.s32.totalorder %s361, %s362
      %p373 = scmp.eq.s32.totalorder %s42, 0
      %p374 = por %p372, %p373
      %p375 = scmp.ne.s32.totalorder %s361, %s362
      %p376 = scmp.eq.s32.totalorder %s43, 3
      %p377 = por %p375, %p376
      %p379 = scmp.ne.s32.totalorder %s362, %s378
      %p380 = scmp.eq.s32.totalorder %s43, 0
      %p381 = por %p379, %p380
      %s382 = ssub.s32 %s45, %s52
      %p383 = scmp.eq.s32.totalorder %s382, 0
      %s385 = sadd.s32 %s384, 1
      %s386 = scalar_select %p383, %s384, %s385
      %p389 = pneg %p383
      %p390 = scmp.eq.s32.totalorder %s37, 3
      %p391 = por %p389, %p390
      %p392 = scmp.ne.s32.totalorder %s384, %s387
      %p393 = scmp.eq.s32.totalorder %s37, 0
      %p394 = por %p392, %p393
      %p395 = scmp.ne.s32.totalorder %s384, %s387
      %p396 = scmp.eq.s32.totalorder %s42, 3
      %p397 = por %p395, %p396
      %p398 = scmp.ne.s32.totalorder %s387, %s388
      %p399 = scmp.eq.s32.totalorder %s42, 0
      %p400 = por %p398, %p399
      %p401 = scmp.ne.s32.totalorder %s387, %s388
      %p402 = scmp.eq.s32.totalorder %s43, 3
      %p403 = por %p401, %p402
      %p405 = scmp.ne.s32.totalorder %s388, %s404
      %p406 = scmp.eq.s32.totalorder %s43, 0
      %p407 = por %p405, %p406
      %s408 = ssub.s32 %s45, %s52
      %p409 = scmp.eq.s32.totalorder %s408, 0
      %s411 = sadd.s32 %s410, 1
      %s412 = scalar_select %p409, %s410, %s411
      %p415 = pneg %p409
      %p416 = scmp.eq.s32.totalorder %s37, 3
      %p417 = por %p415, %p416
      %p418 = scmp.ne.s32.totalorder %s410, %s413
      %p419 = scmp.eq.s32.totalorder %s37, 0
      %p420 = por %p418, %p419
      %p421 = scmp.ne.s32.totalorder %s410, %s413
      %p422 = scmp.eq.s32.totalorder %s42, 3
      %p423 = por %p421, %p422
      %p424 = scmp.ne.s32.totalorder %s413, %s414
      %p425 = scmp.eq.s32.totalorder %s42, 0
      %p426 = por %p424, %p425
      %p427 = scmp.ne.s32.totalorder %s413, %s414
      %p428 = scmp.eq.s32.totalorder %s43, 3
      %p429 = por %p427, %p428
      %p431 = scmp.ne.s32.totalorder %s414, %s430
      %p432 = scmp.eq.s32.totalorder %s43, 0
      %p433 = por %p431, %p432
      %s434 = ssub.s32 %s45, %s52
      %p435 = scmp.eq.s32.totalorder %s434, 0
      %s437 = sadd.s32 %s436, 1
      %s438 = scalar_select %p435, %s436, %s437
      %p441 = pneg %p435
      %p442 = scmp.eq.s32.totalorder %s37, 3
      %p443 = por %p441, %p442
      %p444 = scmp.ne.s32.totalorder %s436, %s439
      %p445 = scmp.eq.s32.totalorder %s37, 0
      %p446 = por %p444, %p445
      %p447 = scmp.ne.s32.totalorder %s436, %s439
      %p448 = scmp.eq.s32.totalorder %s42, 3
      %p449 = por %p447, %p448
      %p450 = scmp.ne.s32.totalorder %s439, %s440
      %p451 = scmp.eq.s32.totalorder %s42, 0
      %p452 = por %p450, %p451
      %p453 = scmp.ne.s32.totalorder %s439, %s440
      %p454 = scmp.eq.s32.totalorder %s43, 3
      %p455 = por %p453, %p454
      %p457 = scmp.ne.s32.totalorder %s440, %s456
      %p458 = scmp.eq.s32.totalorder %s43, 0
      %p459 = por %p457, %p458
      %s460 = ssub.s32 %s45, %s52
      %p461 = scmp.eq.s32.totalorder %s460, 0
      %s463 = sadd.s32 %s462, 1
      %s464 = scalar_select %p461, %s462, %s463
      %p467 = pneg %p461
      %p468 = scmp.eq.s32.totalorder %s37, 3
      %p469 = por %p467, %p468
      %p470 = scmp.ne.s32.totalorder %s462, %s465
      %p471 = scmp.eq.s32.totalorder %s37, 0
      %p472 = por %p470, %p471
      %p473 = scmp.ne.s32.totalorder %s462, %s465
      %p474 = scmp.eq.s32.totalorder %s42, 3
      %p475 = por %p473, %p474
      %p476 = scmp.ne.s32.totalorder %s465, %s466
      %p477 = scmp.eq.s32.totalorder %s42, 0
      %p478 = por %p476, %p477
      %p479 = scmp.ne.s32.totalorder %s465, %s466
      %p480 = scmp.eq.s32.totalorder %s43, 3
      %p481 = por %p479, %p480
      %p483 = scmp.ne.s32.totalorder %s466, %s482
      %p484 = scmp.eq.s32.totalorder %s43, 0
      %p485 = por %p483, %p484
      %s486 = ssub.s32 %s45, %s52
      %p487 = scmp.eq.s32.totalorder %s486, 0
      %s489 = sadd.s32 %s488, 1
      %s490 = scalar_select %p487, %s488, %s489
      %p493 = pneg %p487
      %p494 = scmp.eq.s32.totalorder %s37, 3
      %p495 = por %p493, %p494
      %p496 = scmp.ne.s32.totalorder %s488, %s491
      %p497 = scmp.eq.s32.totalorder %s37, 0
      %p498 = por %p496, %p497
      %p499 = scmp.ne.s32.totalorder %s488, %s491
      %p500 = scmp.eq.s32.totalorder %s42, 3
      %p501 = por %p499, %p500
      %p502 = scmp.ne.s32.totalorder %s491, %s492
      %p503 = scmp.eq.s32.totalorder %s42, 0
      %p504 = por %p502, %p503
      %p505 = scmp.ne.s32.totalorder %s491, %s492
      %p506 = scmp.eq.s32.totalorder %s43, 3
      %p507 = por %p505, %p506
      %p509 = scmp.ne.s32.totalorder %s492, %s508
      %p510 = scmp.eq.s32.totalorder %s43, 0
      %p511 = por %p509, %p510
      %s512 = ssub.s32 %s45, %s52
      %p513 = scmp.eq.s32.totalorder %s512, 0
      %s515 = sadd.s32 %s514, 1
      %s516 = scalar_select %p513, %s514, %s515
      %p519 = pneg %p513
      %p520 = scmp.eq.s32.totalorder %s37, 3
      %p521 = por %p519, %p520
      %p522 = scmp.ne.s32.totalorder %s514, %s517
      %p523 = scmp.eq.s32.totalorder %s37, 0
      %p524 = por %p522, %p523
      %p525 = scmp.ne.s32.totalorder %s514, %s517
      %p526 = scmp.eq.s32.totalorder %s42, 3
      %p527 = por %p525, %p526
      %p528 = scmp.ne.s32.totalorder %s517, %s518
      %p529 = scmp.eq.s32.totalorder %s42, 0
      %p530 = por %p528, %p529
      %p531 = scmp.ne.s32.totalorder %s517, %s518
      %p532 = scmp.eq.s32.totalorder %s43, 3
      %p533 = por %p531, %p532
      %p535 = scmp.ne.s32.totalorder %s518, %s534
      %p536 = scmp.eq.s32.totalorder %s43, 0
      %p537 = por %p535, %p536
      %s538 = ssub.s32 %s45, %s52
      %p539 = scmp.eq.s32.totalorder %s538, 0
      %s541 = sadd.s32 %s540, 1
      %s542 = scalar_select %p539, %s540, %s541
      %p545 = pneg %p539
      %p546 = scmp.eq.s32.totalorder %s37, 3
      %p547 = por %p545, %p546
      %p548 = scmp.ne.s32.totalorder %s540, %s543
      %p549 = scmp.eq.s32.totalorder %s37, 0
      %p550 = por %p548, %p549
      %p551 = scmp.ne.s32.totalorder %s540, %s543
      %p552 = scmp.eq.s32.totalorder %s42, 3
      %p553 = por %p551, %p552
      %p554 = scmp.ne.s32.totalorder %s543, %s544
      %p555 = scmp.eq.s32.totalorder %s42, 0
      %p556 = por %p554, %p555
      %p557 = scmp.ne.s32.totalorder %s543, %s544
      %p558 = scmp.eq.s32.totalorder %s43, 3
      %p559 = por %p557, %p558
      %p561 = scmp.ne.s32.totalorder %s544, %s560
      %p562 = scmp.eq.s32.totalorder %s43, 0
      %p563 = por %p561, %p562
      %s564 = ssub.s32 %s45, %s52
      %p565 = scmp.eq.s32.totalorder %s564, 0
      %s567 = sadd.s32 %s566, 1
      %s568 = scalar_select %p565, %s566, %s567
      %p571 = pneg %p565
      %p572 = scmp.eq.s32.totalorder %s37, 3
      %p573 = por %p571, %p572
      %p574 = scmp.ne.s32.totalorder %s566, %s569
      %p575 = scmp.eq.s32.totalorder %s37, 0
      %p576 = por %p574, %p575
      %p577 = scmp.ne.s32.totalorder %s566, %s569
      %p578 = scmp.eq.s32.totalorder %s42, 3
      %p579 = por %p577, %p578
      %p580 = scmp.ne.s32.totalorder %s569, %s570
      %p581 = scmp.eq.s32.totalorder %s42, 0
      %p582 = por %p580, %p581
      %p583 = scmp.ne.s32.totalorder %s569, %s570
      %p584 = scmp.eq.s32.totalorder %s43, 3
      %p585 = por %p583, %p584
      %p587 = scmp.ne.s32.totalorder %s570, %s586
      %p588 = scmp.eq.s32.totalorder %s43, 0
      %p589 = por %p587, %p588
      %s590 = ssub.s32 %s45, %s52
      %p591 = scmp.eq.s32.totalorder %s590, 0
      %s593 = sadd.s32 %s592, 1
      %s594 = scalar_select %p591, %s592, %s593
      %p597 = pneg %p591
      %p598 = scmp.eq.s32.totalorder %s37, 3
      %p599 = por %p597, %p598
      %p600 = scmp.ne.s32.totalorder %s592, %s595
      %p601 = scmp.eq.s32.totalorder %s37, 0
      %p602 = por %p600, %p601
      %p603 = scmp.ne.s32.totalorder %s592, %s595
      %p604 = scmp.eq.s32.totalorder %s42, 3
      %p605 = por %p603, %p604
      %p606 = scmp.ne.s32.totalorder %s595, %s596
      %p607 = scmp.eq.s32.totalorder %s42, 0
      %p608 = por %p606, %p607
      %p609 = scmp.ne.s32.totalorder %s595, %s596
      %p610 = scmp.eq.s32.totalorder %s43, 3
      %p611 = por %p609, %p610
      %p613 = scmp.ne.s32.totalorder %s596, %s612
      %p614 = scmp.eq.s32.totalorder %s43, 0
      %p615 = por %p613, %p614
      %s616 = ssub.s32 %s45, %s52
      %p617 = scmp.eq.s32.totalorder %s616, 0
      %s619 = sadd.s32 %s618, 1
      %s620 = scalar_select %p617, %s618, %s619
      %p623 = pneg %p617
      %p624 = scmp.eq.s32.totalorder %s37, 3
      %p625 = por %p623, %p624
      %p626 = scmp.ne.s32.totalorder %s618, %s621
      %p627 = scmp.eq.s32.totalorder %s37, 0
      %p628 = por %p626, %p627
      %p629 = scmp.ne.s32.totalorder %s618, %s621
      %p630 = scmp.eq.s32.totalorder %s42, 3
      %p631 = por %p629, %p630
      %p632 = scmp.ne.s32.totalorder %s621, %s622
      %p633 = scmp.eq.s32.totalorder %s42, 0
      %p634 = por %p632, %p633
      %p635 = scmp.ne.s32.totalorder %s621, %s622
      %p636 = scmp.eq.s32.totalorder %s43, 3
      %p637 = por %p635, %p636
      %p639 = scmp.ne.s32.totalorder %s622, %s638
      %p640 = scmp.eq.s32.totalorder %s43, 0
      %p641 = por %p639, %p640
      %s642 = ssub.s32 %s44, %s56
      %p643 = scmp.eq.s32.totalorder %s642, 0
      %s645 = sadd.s32 %s644, 1
      %s646 = scalar_select %p643, %s644, %s645
      %p649 = pneg %p643
      %p650 = scmp.eq.s32.totalorder %s37, 3
      %p651 = por %p649, %p650
      %p652 = scmp.ne.s32.totalorder %s644, %s647
      %p653 = scmp.eq.s32.totalorder %s37, 0
      %p654 = por %p652, %p653
      %p655 = scmp.ne.s32.totalorder %s644, %s647
      %p656 = scmp.eq.s32.totalorder %s42, 3
      %p657 = por %p655, %p656
      %p658 = scmp.ne.s32.totalorder %s647, %s648
      %p659 = scmp.eq.s32.totalorder %s42, 0
      %p660 = por %p658, %p659
      %p661 = scmp.ne.s32.totalorder %s647, %s648
      %p662 = scmp.eq.s32.totalorder %s43, 3
      %p663 = por %p661, %p662
      %p665 = scmp.ne.s32.totalorder %s648, %s664
      %p666 = scmp.eq.s32.totalorder %s43, 0
      %p667 = por %p665, %p666
      %p668 = scmp.le.s32.totalorder 1, %s37
      %p669 = scmp.lt.s32.totalorder %s37, 5
      %p670 = pnand %p668, %p669
      %p671 = pneg %p670
      // Predicated region
      $region9: #{output_interface_forward_training.4} parent=5 // pred_check
        _
      $region10: #{output_interface_forward_training.4} parent=5 // pred_check_branch
        %673 = sbr.rel (%p670) target = $region12
      $region11: #{output_interface_forward_training.4} parent=5 // pred_region
        %s674 = ssub.s32 %s37, 1
        // Predicated region
        $region13: #{output_interface_forward_training.4} parent=11 // pred_check
          %p675 = pneg %p96
        $region14: #{output_interface_forward_training.4} parent=11 // pred_check_branch
          %677 = sbr.rel (%p675) target = $region16
        $region15: #{output_interface_forward_training.4} parent=11 // pred_region
          %s679 = ssub.s32 128, 128
          %680 = vsyncadd [#allocation6], %s679
          %s682 = sshll.u32 [#allocation5], 4
          %s683 = int_to_ptr.vmem [resolvable:$true] %s682
          %685 = dma.hbm_to_vmem [thread:$0]  %s1, 128, %s683, [#allocation6]
        $region16: #{output_interface_forward_training.4} parent=11 // pred_fallthru
          _
        // Predicated region
        $region17: #{output_interface_forward_training.4} parent=11 // pred_check
          %p686 = pneg %p117
        $region18: #{output_interface_forward_training.4} parent=11 // pred_check_branch
          %688 = sbr.rel (%p686) target = $region20
        $region19: #{output_interface_forward_training.4} parent=11 // pred_region
          %s690 = ssub.s32 16, 16
          %691 = vsyncadd [#allocation6], %s690
          %s693 = sshll.u32 [#allocation7], 4
          %s694 = int_to_ptr.vmem [resolvable:$true] %s693
          %696 = dma.hbm_to_vmem [thread:$0]  %s2, 16, %s694, [#allocation6]
        $region20: #{output_interface_forward_training.4} parent=11 // pred_fallthru
          _
        // Predicated region
        $region21: #{output_interface_forward_training.4} parent=11 // pred_check
          %p697 = pneg %p138
        $region22: #{output_interface_forward_training.4} parent=11 // pred_check_branch
          %699 = sbr.rel (%p697) target = $region24
        $region23: #{output_interface_forward_training.4} parent=11 // pred_region
          %s701 = ssub.s32 16, 16
          %702 = vsyncadd [#allocation9], %s701
          %s704 = sshll.u32 [#allocation8], 4
          %s705 = int_to_ptr.vmem [resolvable:$true] %s704
          %707 = dma.hbm_to_vmem [thread:$0]  %s3, 16, %s705, [#allocation9]
        $region24: #{output_interface_forward_training.4} parent=11 // pred_fallthru
          _
      $region12: #{output_interface_forward_training.4} parent=5 // pred_fallthru
        _
      %p708 = scmp.lt.s32.totalorder %s37, 4
      // Predicated region
      $region25: #{output_interface_forward_training.4} parent=5 // pred_check
        %p709 = pneg %p708
      $region26: #{output_interface_forward_training.4} parent=5 // pred_check_branch
        %711 = sbr.rel (%p709) target = $region28
      $region27: #{output_interface_forward_training.4} parent=5 // pred_region
        // Predicated region
        $region29: #{output_interface_forward_training.4} parent=27 // pred_check
          %p712 = pneg %p69
        $region30: #{output_interface_forward_training.4} parent=27 // pred_check_branch
          %714 = sbr.rel (%p712) target = $region32
        $region31: #{output_interface_forward_training.4} parent=27 // pred_region
          %s715 = sand.u32 %s37, 1
          %s716 = scalar_lea.sflag [#allocation3], %s715
          %s717 = sand.u32 %s59, 1
          %s718 = smul.addr %s717, 8
          %s719 = scalar_lea.vmem [#allocation2], %s718
          %s721 = ssub.s32 128, 128
          %722 = vsyncadd %s716, %s721
          %s723 = smul.addr %s44, 128
          %s724 = scalar_lea.hbm %s0, %s723
          %s726 = sshll.u32 %s719, 4
          %s727 = int_to_ptr.vmem [resolvable:$true] %s726
          %729 = dma.hbm_to_vmem [thread:$0]  %s724, 128, %s727, %s716
        $region32: #{output_interface_forward_training.4} parent=27 // pred_fallthru
          _
        // Predicated region
        $region33: #{output_interface_forward_training.4} parent=27 // pred_check
          %p730 = pneg %p160
        $region34: #{output_interface_forward_training.4} parent=27 // pred_check_branch
          %732 = sbr.rel (%p730) target = $region36
        $region35: #{output_interface_forward_training.4} parent=27 // pred_region
          %s733 = sand.u32 %s37, 1
          %s734 = scalar_lea.sflag [#allocation3], %s733
          %s735 = sand.u32 %s150, 1
          %s736 = scalar_lea.vmem [#allocation10], %s735
          %s738 = ssub.s32 16, 16
          %739 = vsyncadd %s734, %s738
          %s740 = smul.addr %s45, 2
          %s741 = sadd.s32 %s44, %s740
          %s742 = smul.addr %s741, 16
          %s743 = scalar_lea.hbm %s4, %s742
          %s745 = sshll.u32 %s736, 4
          %s746 = int_to_ptr.vmem [resolvable:$true] %s745
          %748 = dma.hbm_to_vmem [thread:$0]  %s743, 16, %s746, %s734
        $region36: #{output_interface_forward_training.4} parent=27 // pred_fallthru
          _
        // Predicated region
        $region37: #{output_interface_forward_training.4} parent=27 // pred_check
          %p749 = pneg %p186
        $region38: #{output_interface_forward_training.4} parent=27 // pred_check_branch
          %751 = sbr.rel (%p749) target = $region40
        $region39: #{output_interface_forward_training.4} parent=27 // pred_region
          %s752 = sand.u32 %s37, 1
          %s753 = scalar_lea.sflag [#allocation3], %s752
          %s754 = sand.u32 %s176, 1
          %s755 = smul.addr %s754, 64
          %s756 = scalar_lea.vmem [#allocation11], %s755
          %s758 = ssub.s32 1024, 1024
          %759 = vsyncadd %s753, %s758
          %s760 = smul.addr %s45, 16
          %s761 = smul.addr %s760, 64
          %s762 = scalar_lea.hbm %s5, %s761
          %s763 = sshll.u32 %s756, 4
          %s764 = int_to_ptr.vmem [resolvable:$true] %s763
          %769 = dma.hbm_to_vmem [thread:$0]  %s762, 1024, %s764, %s753, 64, 64, 4
        $region40: #{output_interface_forward_training.4} parent=27 // pred_fallthru
          _
        // Predicated region
        $region41: #{output_interface_forward_training.4} parent=27 // pred_check
          %p770 = pneg %p212
        $region42: #{output_interface_forward_training.4} parent=27 // pred_check_branch
          %772 = sbr.rel (%p770) target = $region44
        $region43: #{output_interface_forward_training.4} parent=27 // pred_region
          %s773 = sand.u32 %s37, 1
          %s774 = scalar_lea.sflag [#allocation3], %s773
          %s775 = sand.u32 %s202, 1
          %s776 = smul.addr %s775, 64
          %s777 = scalar_lea.vmem [#allocation12], %s776
          %s779 = ssub.s32 1024, 1024
          %780 = vsyncadd %s774, %s779
          %s781 = smul.addr %s45, 16
          %s782 = smul.addr %s781, 64
          %s783 = scalar_lea.hbm %s6, %s782
          %s784 = sshll.u32 %s777, 4
          %s785 = int_to_ptr.vmem [resolvable:$true] %s784
          %790 = dma.hbm_to_vmem [thread:$0]  %s783, 1024, %s785, %s774, 64, 64, 4
        $region44: #{output_interface_forward_training.4} parent=27 // pred_fallthru
          _
        // Predicated region
        $region45: #{output_interface_forward_training.4} parent=27 // pred_check
          %p791 = pneg %p238
        $region46: #{output_interface_forward_training.4} parent=27 // pred_check_branch
          %793 = sbr.rel (%p791) target = $region48
        $region47: #{output_interface_forward_training.4} parent=27 // pred_region
          %s794 = sand.u32 %s37, 1
          %s795 = scalar_lea.sflag [#allocation3], %s794
          %s796 = sand.u32 %s228, 1
          %s797 = smul.addr %s796, 64
          %s798 = scalar_lea.vmem [#allocation13], %s797
          %s800 = ssub.s32 1024, 1024
          %801 = vsyncadd %s795, %s800
          %s802 = smul.addr %s45, 16
          %s803 = smul.addr %s802, 64
          %s804 = scalar_lea.hbm %s7, %s803
          %s805 = sshll.u32 %s798, 4
          %s806 = int_to_ptr.vmem [resolvable:$true] %s805
          %811 = dma.hbm_to_vmem [thread:$0]  %s804, 1024, %s806, %s795, 64, 64, 4
        $region48: #{output_interface_forward_training.4} parent=27 // pred_fallthru
          _
        // Predicated region
        $region49: #{output_interface_forward_training.4} parent=27 // pred_check
          %p812 = pneg %p264
        $region50: #{output_interface_forward_training.4} parent=27 // pred_check_branch
          %814 = sbr.rel (%p812) target = $region52
        $region51: #{output_interface_forward_training.4} parent=27 // pred_region
          %s815 = sand.u32 %s37, 1
          %s816 = scalar_lea.sflag [#allocation3], %s815
          %s817 = sand.u32 %s254, 1
          %s818 = smul.addr %s817, 4
          %s819 = scalar_lea.vmem [#allocation14], %s818
          %s821 = ssub.s32 64, 64
          %822 = vsyncadd %s816, %s821
          %s823 = smul.addr %s45, 4
          %s824 = smul.addr %s823, 16
          %s825 = scalar_lea.hbm %s8, %s824
          %s826 = sshll.u32 %s819, 4
          %s827 = int_to_ptr.vmem [resolvable:$true] %s826
          %832 = dma.hbm_to_vmem [thread:$0]  %s825, 64, %s827, %s816, 16, 16, 1
        $region52: #{output_interface_forward_training.4} parent=27 // pred_fallthru
          _
        // Predicated region
        $region53: #{output_interface_forward_training.4} parent=27 // pred_check
          %p833 = pneg %p290
        $region54: #{output_interface_forward_training.4} parent=27 // pred_check_branch
          %835 = sbr.rel (%p833) target = $region56
        $region55: #{output_interface_forward_training.4} parent=27 // pred_region
          %s836 = sand.u32 %s37, 1
          %s837 = scalar_lea.sflag [#allocation3], %s836
          %s838 = sand.u32 %s280, 1
          %s839 = smul.addr %s838, 4
          %s840 = scalar_lea.vmem [#allocation15], %s839
          %s842 = ssub.s32 64, 64
          %843 = vsyncadd %s837, %s842
          %s844 = smul.addr %s45, 4
          %s845 = smul.addr %s844, 16
          %s846 = scalar_lea.hbm %s9, %s845
          %s847 = sshll.u32 %s840, 4
          %s848 = int_to_ptr.vmem [resolvable:$true] %s847
          %853 = dma.hbm_to_vmem [thread:$0]  %s846, 64, %s848, %s837, 16, 16, 1
        $region56: #{output_interface_forward_training.4} parent=27 // pred_fallthru
          _
        // Predicated region
        $region57: #{output_interface_forward_training.4} parent=27 // pred_check
          %p854 = pneg %p316
        $region58: #{output_interface_forward_training.4} parent=27 // pred_check_branch
          %856 = sbr.rel (%p854) target = $region60
        $region59: #{output_interface_forward_training.4} parent=27 // pred_region
          %s857 = sand.u32 %s37, 1
          %s858 = scalar_lea.sflag [#allocation3], %s857
          %s859 = sand.u32 %s306, 1
          %s860 = smul.addr %s859, 4
          %s861 = scalar_lea.vmem [#allocation16], %s860
          %s863 = ssub.s32 64, 64
          %864 = vsyncadd %s858, %s863
          %s865 = smul.addr %s45, 4
          %s866 = smul.addr %s865, 16
          %s867 = scalar_lea.hbm %s10, %s866
          %s868 = sshll.u32 %s861, 4
          %s869 = int_to_ptr.vmem [resolvable:$true] %s868
          %874 = dma.hbm_to_vmem [thread:$0]  %s867, 64, %s869, %s858, 16, 16, 1
        $region60: #{output_interface_forward_training.4} parent=27 // pred_fallthru
          _
        // Predicated region
        $region61: #{output_interface_forward_training.4} parent=27 // pred_check
          %p875 = pneg %p342
        $region62: #{output_interface_forward_training.4} parent=27 // pred_check_branch
          %877 = sbr.rel (%p875) target = $region64
        $region63: #{output_interface_forward_training.4} parent=27 // pred_region
          %s878 = sand.u32 %s37, 1
          %s879 = scalar_lea.sflag [#allocation3], %s878
          %s880 = sand.u32 %s332, 1
          %s881 = smul.addr %s880, 16
          %s882 = scalar_lea.vmem [#allocation17], %s881
          %s884 = ssub.s32 256, 256
          %885 = vsyncadd %s879, %s884
          %s886 = smul.addr %s45, 4
          %s887 = smul.addr %s886, 64
          %s888 = scalar_lea.hbm %s11, %s887
          %s889 = sshll.u32 %s882, 4
          %s890 = int_to_ptr.vmem [resolvable:$true] %s889
          %895 = dma.hbm_to_vmem [thread:$0]  %s888, 256, %s890, %s879, 64, 64, 4
        $region64: #{output_interface_forward_training.4} parent=27 // pred_fallthru
          _
        // Predicated region
        $region65: #{output_interface_forward_training.4} parent=27 // pred_check
          %p896 = pneg %p368
        $region66: #{output_interface_forward_training.4} parent=27 // pred_check_branch
          %898 = sbr.rel (%p896) target = $region68
        $region67: #{output_interface_forward_training.4} parent=27 // pred_region
          %s899 = sand.u32 %s37, 1
          %s900 = scalar_lea.sflag [#allocation3], %s899
          %s901 = sand.u32 %s358, 1
          %s902 = scalar_lea.vmem [#allocation18], %s901
          %s904 = ssub.s32 16, 16
          %905 = vsyncadd %s900, %s904
          %s906 = smul.addr %s45, 16
          %s907 = scalar_lea.hbm %s12, %s906
          %s909 = sshll.u32 %s902, 4
          %s910 = int_to_ptr.vmem [resolvable:$true] %s909
          %912 = dma.hbm_to_vmem [thread:$0]  %s907, 16, %s910, %s900
        $region68: #{output_interface_forward_training.4} parent=27 // pred_fallthru
          _
        // Predicated region
        $region69: #{output_interface_forward_training.4} parent=27 // pred_check
          %p913 = pneg %p394
        $region70: #{output_interface_forward_training.4} parent=27 // pred_check_branch
          %915 = sbr.rel (%p913) target = $region72
        $region71: #{output_interface_forward_training.4} parent=27 // pred_region
          %s916 = sand.u32 %s37, 1
          %s917 = scalar_lea.sflag [#allocation3], %s916
          %s918 = sand.u32 %s384, 1
          %s919 = scalar_lea.vmem [#allocation19], %s918
          %s921 = ssub.s32 16, 16
          %922 = vsyncadd %s917, %s921
          %s923 = smul.addr %s45, 16
          %s924 = scalar_lea.hbm %s13, %s923
          %s926 = sshll.u32 %s919, 4
          %s927 = int_to_ptr.vmem [resolvable:$true] %s926
          %929 = dma.hbm_to_vmem [thread:$0]  %s924, 16, %s927, %s917
        $region72: #{output_interface_forward_training.4} parent=27 // pred_fallthru
          _
        // Predicated region
        $region73: #{output_interface_forward_training.4} parent=27 // pred_check
          %p930 = pneg %p420
        $region74: #{output_interface_forward_training.4} parent=27 // pred_check_branch
          %932 = sbr.rel (%p930) target = $region76
        $region75: #{output_interface_forward_training.4} parent=27 // pred_region
          %s933 = sand.u32 %s37, 1
          %s934 = scalar_lea.sflag [#allocation3], %s933
          %s935 = sand.u32 %s410, 1
          %s936 = scalar_lea.vmem [#allocation20], %s935
          %s938 = ssub.s32 16, 16
          %939 = vsyncadd %s934, %s938
          %s940 = smul.addr %s45, 16
          %s941 = scalar_lea.hbm %s14, %s940
          %s943 = sshll.u32 %s936, 4
          %s944 = int_to_ptr.vmem [resolvable:$true] %s943
          %946 = dma.hbm_to_vmem [thread:$0]  %s941, 16, %s944, %s934
        $region76: #{output_interface_forward_training.4} parent=27 // pred_fallthru
          _
        // Predicated region
        $region77: #{output_interface_forward_training.4} parent=27 // pred_check
          %p947 = pneg %p446
        $region78: #{output_interface_forward_training.4} parent=27 // pred_check_branch
          %949 = sbr.rel (%p947) target = $region80
        $region79: #{output_interface_forward_training.4} parent=27 // pred_region
          %s950 = sand.u32 %s37, 1
          %s951 = scalar_lea.sflag [#allocation3], %s950
          %s952 = sand.u32 %s436, 1
          %s953 = scalar_lea.vmem [#allocation21], %s952
          %s955 = ssub.s32 16, 16
          %956 = vsyncadd %s951, %s955
          %s957 = smul.addr %s45, 16
          %s958 = scalar_lea.hbm %s15, %s957
          %s960 = sshll.u32 %s953, 4
          %s961 = int_to_ptr.vmem [resolvable:$true] %s960
          %963 = dma.hbm_to_vmem [thread:$0]  %s958, 16, %s961, %s951
        $region80: #{output_interface_forward_training.4} parent=27 // pred_fallthru
          _
        // Predicated region
        $region81: #{output_interface_forward_training.4} parent=27 // pred_check
          %p964 = pneg %p472
        $region82: #{output_interface_forward_training.4} parent=27 // pred_check_branch
          %966 = sbr.rel (%p964) target = $region84
        $region83: #{output_interface_forward_training.4} parent=27 // pred_region
          %s967 = sand.u32 %s37, 1
          %s968 = scalar_lea.sflag [#allocation3], %s967
          %s969 = sand.u32 %s462, 1
          %s970 = scalar_lea.vmem [#allocation22], %s969
          %s972 = ssub.s32 16, 16
          %973 = vsyncadd %s968, %s972
          %s974 = smul.addr %s45, 16
          %s975 = scalar_lea.hbm %s16, %s974
          %s977 = sshll.u32 %s970, 4
          %s978 = int_to_ptr.vmem [resolvable:$true] %s977
          %980 = dma.hbm_to_vmem [thread:$0]  %s975, 16, %s978, %s968
        $region84: #{output_interface_forward_training.4} parent=27 // pred_fallthru
          _
        // Predicated region
        $region85: #{output_interface_forward_training.4} parent=27 // pred_check
          %p981 = pneg %p498
        $region86: #{output_interface_forward_training.4} parent=27 // pred_check_branch
          %983 = sbr.rel (%p981) target = $region88
        $region87: #{output_interface_forward_training.4} parent=27 // pred_region
          %s984 = sand.u32 %s37, 1
          %s985 = scalar_lea.sflag [#allocation3], %s984
          %s986 = sand.u32 %s488, 1
          %s987 = smul.addr %s986, 16
          %s988 = scalar_lea.vmem [#allocation23], %s987
          %s990 = ssub.s32 256, 256
          %991 = vsyncadd %s985, %s990
          %s992 = smul.addr %s45, 4
          %s993 = smul.addr %s992, 64
          %s994 = scalar_lea.hbm %s17, %s993
          %s995 = sshll.u32 %s988, 4
          %s996 = int_to_ptr.vmem [resolvable:$true] %s995
          %1001 = dma.hbm_to_vmem [thread:$0]  %s994, 256, %s996, %s985, 64, 64, 4
        $region88: #{output_interface_forward_training.4} parent=27 // pred_fallthru
          _
        // Predicated region
        $region89: #{output_interface_forward_training.4} parent=27 // pred_check
          %p1002 = pneg %p524
        $region90: #{output_interface_forward_training.4} parent=27 // pred_check_branch
          %1004 = sbr.rel (%p1002) target = $region92
        $region91: #{output_interface_forward_training.4} parent=27 // pred_region
          %s1005 = sand.u32 %s37, 1
          %s1006 = scalar_lea.sflag [#allocation3], %s1005
          %s1007 = sand.u32 %s514, 1
          %s1008 = scalar_lea.vmem [#allocation24], %s1007
          %s1010 = ssub.s32 16, 16
          %1011 = vsyncadd %s1006, %s1010
          %s1012 = smul.addr %s45, 16
          %s1013 = scalar_lea.hbm %s18, %s1012
          %s1015 = sshll.u32 %s1008, 4
          %s1016 = int_to_ptr.vmem [resolvable:$true] %s1015
          %1018 = dma.hbm_to_vmem [thread:$0]  %s1013, 16, %s1016, %s1006
        $region92: #{output_interface_forward_training.4} parent=27 // pred_fallthru
          _
        // Predicated region
        $region93: #{output_interface_forward_training.4} parent=27 // pred_check
          %p1019 = pneg %p550
        $region94: #{output_interface_forward_training.4} parent=27 // pred_check_branch
          %1021 = sbr.rel (%p1019) target = $region96
        $region95: #{output_interface_forward_training.4} parent=27 // pred_region
          %s1022 = sand.u32 %s37, 1
          %s1023 = scalar_lea.sflag [#allocation3], %s1022
          %s1024 = sand.u32 %s540, 1
          %s1025 = smul.addr %s1024, 32
          %s1026 = scalar_lea.vmem [#allocation25], %s1025
          %s1028 = ssub.s32 512, 512
          %1029 = vsyncadd %s1023, %s1028
          %s1030 = smul.addr %s45, 8
          %s1031 = smul.addr %s1030, 64
          %s1032 = scalar_lea.hbm %s19, %s1031
          %s1033 = sshll.u32 %s1026, 4
          %s1034 = int_to_ptr.vmem [resolvable:$true] %s1033
          %1039 = dma.hbm_to_vmem [thread:$0]  %s1032, 512, %s1034, %s1023, 64, 64, 4
        $region96: #{output_interface_forward_training.4} parent=27 // pred_fallthru
          _
        // Predicated region
        $region97: #{output_interface_forward_training.4} parent=27 // pred_check
          %p1040 = pneg %p576
        $region98: #{output_interface_forward_training.4} parent=27 // pred_check_branch
          %1042 = sbr.rel (%p1040) target = $region100
        $region99: #{output_interface_forward_training.4} parent=27 // pred_region
          %s1043 = sand.u32 %s37, 1
          %s1044 = scalar_lea.sflag [#allocation3], %s1043
          %s1045 = sand.u32 %s566, 1
          %s1046 = scalar_lea.vmem [#allocation26], %s1045
          %s1048 = ssub.s32 16, 16
          %1049 = vsyncadd %s1044, %s1048
          %s1050 = smul.addr %s45, 16
          %s1051 = scalar_lea.hbm %s20, %s1050
          %s1053 = sshll.u32 %s1046, 4
          %s1054 = int_to_ptr.vmem [resolvable:$true] %s1053
          %1056 = dma.hbm_to_vmem [thread:$0]  %s1051, 16, %s1054, %s1044
        $region100: #{output_interface_forward_training.4} parent=27 // pred_fallthru
          _
        // Predicated region
        $region101: #{output_interface_forward_training.4} parent=27 // pred_check
          %p1057 = pneg %p602
        $region102: #{output_interface_forward_training.4} parent=27 // pred_check_branch
          %1059 = sbr.rel (%p1057) target = $region104
        $region103: #{output_interface_forward_training.4} parent=27 // pred_region
          %s1060 = sand.u32 %s37, 1
          %s1061 = scalar_lea.sflag [#allocation3], %s1060
          %s1062 = sand.u32 %s592, 1
          %s1063 = scalar_lea.vmem [#allocation27], %s1062
          %s1065 = ssub.s32 16, 16
          %1066 = vsyncadd %s1061, %s1065
          %s1067 = smul.addr %s45, 16
          %s1068 = scalar_lea.hbm %s21, %s1067
          %s1070 = sshll.u32 %s1063, 4
          %s1071 = int_to_ptr.vmem [resolvable:$true] %s1070
          %1073 = dma.hbm_to_vmem [thread:$0]  %s1068, 16, %s1071, %s1061
        $region104: #{output_interface_forward_training.4} parent=27 // pred_fallthru
          _
        // Predicated region
        $region105: #{output_interface_forward_training.4} parent=27 // pred_check
          %p1074 = pneg %p628
        $region106: #{output_interface_forward_training.4} parent=27 // pred_check_branch
          %1076 = sbr.rel (%p1074) target = $region108
        $region107: #{output_interface_forward_training.4} parent=27 // pred_region
          %s1077 = sand.u32 %s37, 1
          %s1078 = scalar_lea.sflag [#allocation3], %s1077
          %s1079 = sand.u32 %s618, 1
          %s1080 = scalar_lea.vmem [#allocation28], %s1079
          %s1082 = ssub.s32 16, 16
          %1083 = vsyncadd %s1078, %s1082
          %s1084 = smul.addr %s45, 16
          %s1085 = scalar_lea.hbm %s22, %s1084
          %s1087 = sshll.u32 %s1080, 4
          %s1088 = int_to_ptr.vmem [resolvable:$true] %s1087
          %1090 = dma.hbm_to_vmem [thread:$0]  %s1085, 16, %s1088, %s1078
        $region108: #{output_interface_forward_training.4} parent=27 // pred_fallthru
          _
      $region28: #{output_interface_forward_training.4} parent=5 // pred_fallthru
        _
      %p1091 = scmp.le.s32.totalorder 1, %s37
      %p1092 = scmp.lt.s32.totalorder %s37, 5
      %p1093 = pnand %p1091, %p1092
      %p1094 = pneg %p1093
      // Predicated region
      $region109: #{output_interface_forward_training.4} parent=5 // pred_check
        _
      $region110: #{output_interface_forward_training.4} parent=5 // pred_check_branch
        %1096 = sbr.rel (%p1093) target = $region112
      $region111: #{output_interface_forward_training.4} parent=5 // pred_region
        %s1097 = ssub.s32 %s37, 1
        %s1098 = sand.u32 %s42, 1
        %s1099 = scalar_lea.sflag [#allocation3], %s1098
        %s1100 = sand.u32 %s62, 1
        %s1101 = smul.addr %s1100, 8
        %s1102 = scalar_lea.vmem [#allocation2], %s1101
        // Predicated region
        $region113: #{output_interface_forward_training.4} parent=111 // pred_check
          %p1103 = pneg %p75
        $region114: #{output_interface_forward_training.4} parent=111 // pred_check_branch
          %1105 = sbr.rel (%p1103) target = $region116
        $region115: #{output_interface_forward_training.4} parent=111 // pred_region
          %1106 = dma.done %s1099, 128
        $region116: #{output_interface_forward_training.4} parent=111 // pred_fallthru
          _
        // Predicated region
        $region117: #{output_interface_forward_training.4} parent=111 // pred_check
          %p1107 = pneg %p96
        $region118: #{output_interface_forward_training.4} parent=111 // pred_check_branch
          %1109 = sbr.rel (%p1107) target = $region120
        $region119: #{output_interface_forward_training.4} parent=111 // pred_region
          %1110 = dma.done [#allocation6], 128
        $region120: #{output_interface_forward_training.4} parent=111 // pred_fallthru
          _
        // Predicated region
        $region121: #{output_interface_forward_training.4} parent=111 // pred_check
          %p1111 = pneg %p117
        $region122: #{output_interface_forward_training.4} parent=111 // pred_check_branch
          %1113 = sbr.rel (%p1111) target = $region124
        $region123: #{output_interface_forward_training.4} parent=111 // pred_region
          %1114 = dma.done [#allocation6], 16
        $region124: #{output_interface_forward_training.4} parent=111 // pred_fallthru
          _
        // Predicated region
        $region125: #{output_interface_forward_training.4} parent=111 // pred_check
          %p1115 = pneg %p138
        $region126: #{output_interface_forward_training.4} parent=111 // pred_check_branch
          %1117 = sbr.rel (%p1115) target = $region128
        $region127: #{output_interface_forward_training.4} parent=111 // pred_region
          %1118 = dma.done [#allocation9], 16
        $region128: #{output_interface_forward_training.4} parent=111 // pred_fallthru
          _
        %s1119 = sand.u32 %s42, 1
        %s1120 = scalar_lea.sflag [#allocation3], %s1119
        %s1121 = sand.u32 %s153, 1
        %s1122 = scalar_lea.vmem [#allocation10], %s1121
        // Predicated region
        $region129: #{output_interface_forward_training.4} parent=111 // pred_check
          %p1123 = pneg %p166
        $region130: #{output_interface_forward_training.4} parent=111 // pred_check_branch
          %1125 = sbr.rel (%p1123) target = $region132
        $region131: #{output_interface_forward_training.4} parent=111 // pred_region
          %1126 = dma.done %s1120, 16
        $region132: #{output_interface_forward_training.4} parent=111 // pred_fallthru
          _
        %s1127 = sand.u32 %s42, 1
        %s1128 = scalar_lea.sflag [#allocation3], %s1127
        %s1129 = sand.u32 %s179, 1
        %s1130 = smul.addr %s1129, 64
        %s1131 = scalar_lea.vmem [#allocation11], %s1130
        // Predicated region
        $region133: #{output_interface_forward_training.4} parent=111 // pred_check
          %p1132 = pneg %p192
        $region134: #{output_interface_forward_training.4} parent=111 // pred_check_branch
          %1134 = sbr.rel (%p1132) target = $region136
        $region135: #{output_interface_forward_training.4} parent=111 // pred_region
          %1135 = dma.done %s1128, 1024
        $region136: #{output_interface_forward_training.4} parent=111 // pred_fallthru
          _
        %s1136 = sand.u32 %s42, 1
        %s1137 = scalar_lea.sflag [#allocation3], %s1136
        %s1138 = sand.u32 %s205, 1
        %s1139 = smul.addr %s1138, 64
        %s1140 = scalar_lea.vmem [#allocation12], %s1139
        // Predicated region
        $region137: #{output_interface_forward_training.4} parent=111 // pred_check
          %p1141 = pneg %p218
        $region138: #{output_interface_forward_training.4} parent=111 // pred_check_branch
          %1143 = sbr.rel (%p1141) target = $region140
        $region139: #{output_interface_forward_training.4} parent=111 // pred_region
          %1144 = dma.done %s1137, 1024
        $region140: #{output_interface_forward_training.4} parent=111 // pred_fallthru
          _
        %s1145 = sand.u32 %s42, 1
        %s1146 = scalar_lea.sflag [#allocation3], %s1145
        %s1147 = sand.u32 %s231, 1
        %s1148 = smul.addr %s1147, 64
        %s1149 = scalar_lea.vmem [#allocation13], %s1148
        // Predicated region
        $region141: #{output_interface_forward_training.4} parent=111 // pred_check
          %p1150 = pneg %p244
        $region142: #{output_interface_forward_training.4} parent=111 // pred_check_branch
          %1152 = sbr.rel (%p1150) target = $region144
        $region143: #{output_interface_forward_training.4} parent=111 // pred_region
          %1153 = dma.done %s1146, 1024
        $region144: #{output_interface_forward_training.4} parent=111 // pred_fallthru
          _
        %s1154 = sand.u32 %s42, 1
        %s1155 = scalar_lea.sflag [#allocation3], %s1154
        %s1156 = sand.u32 %s257, 1
        %s1157 = smul.addr %s1156, 4
        %s1158 = scalar_lea.vmem [#allocation14], %s1157
        // Predicated region
        $region145: #{output_interface_forward_training.4} parent=111 // pred_check
          %p1159 = pneg %p270
        $region146: #{output_interface_forward_training.4} parent=111 // pred_check_branch
          %1161 = sbr.rel (%p1159) target = $region148
        $region147: #{output_interface_forward_training.4} parent=111 // pred_region
          %1162 = dma.done %s1155, 64
        $region148: #{output_interface_forward_training.4} parent=111 // pred_fallthru
          _
        %s1163 = sand.u32 %s42, 1
        %s1164 = scalar_lea.sflag [#allocation3], %s1163
        %s1165 = sand.u32 %s283, 1
        %s1166 = smul.addr %s1165, 4
        %s1167 = scalar_lea.vmem [#allocation15], %s1166
        // Predicated region
        $region149: #{output_interface_forward_training.4} parent=111 // pred_check
          %p1168 = pneg %p296
        $region150: #{output_interface_forward_training.4} parent=111 // pred_check_branch
          %1170 = sbr.rel (%p1168) target = $region152
        $region151: #{output_interface_forward_training.4} parent=111 // pred_region
          %1171 = dma.done %s1164, 64
        $region152: #{output_interface_forward_training.4} parent=111 // pred_fallthru
          _
        %s1172 = sand.u32 %s42, 1
        %s1173 = scalar_lea.sflag [#allocation3], %s1172
        %s1174 = sand.u32 %s309, 1
        %s1175 = smul.addr %s1174, 4
        %s1176 = scalar_lea.vmem [#allocation16], %s1175
        // Predicated region
        $region153: #{output_interface_forward_training.4} parent=111 // pred_check
          %p1177 = pneg %p322
        $region154: #{output_interface_forward_training.4} parent=111 // pred_check_branch
          %1179 = sbr.rel (%p1177) target = $region156
        $region155: #{output_interface_forward_training.4} parent=111 // pred_region
          %1180 = dma.done %s1173, 64
        $region156: #{output_interface_forward_training.4} parent=111 // pred_fallthru
          _
        %s1181 = sand.u32 %s42, 1
        %s1182 = scalar_lea.sflag [#allocation3], %s1181
        %s1183 = sand.u32 %s335, 1
        %s1184 = smul.addr %s1183, 16
        %s1185 = scalar_lea.vmem [#allocation17], %s1184
        // Predicated region
        $region157: #{output_interface_forward_training.4} parent=111 // pred_check
          %p1186 = pneg %p348
        $region158: #{output_interface_forward_training.4} parent=111 // pred_check_branch
          %1188 = sbr.rel (%p1186) target = $region160
        $region159: #{output_interface_forward_training.4} parent=111 // pred_region
          %1189 = dma.done %s1182, 256
        $region160: #{output_interface_forward_training.4} parent=111 // pred_fallthru
          _
        %s1190 = sand.u32 %s42, 1
        %s1191 = scalar_lea.sflag [#allocation3], %s1190
        %s1192 = sand.u32 %s361, 1
        %s1193 = scalar_lea.vmem [#allocation18], %s1192
        // Predicated region
        $region161: #{output_interface_forward_training.4} parent=111 // pred_check
          %p1194 = pneg %p374
        $region162: #{output_interface_forward_training.4} parent=111 // pred_check_branch
          %1196 = sbr.rel (%p1194) target = $region164
        $region163: #{output_interface_forward_training.4} parent=111 // pred_region
          %1197 = dma.done %s1191, 16
        $region164: #{output_interface_forward_training.4} parent=111 // pred_fallthru
          _
        %s1198 = sand.u32 %s42, 1
        %s1199 = scalar_lea.sflag [#allocation3], %s1198
        %s1200 = sand.u32 %s387, 1
        %s1201 = scalar_lea.vmem [#allocation19], %s1200
        // Predicated region
        $region165: #{output_interface_forward_training.4} parent=111 // pred_check
          %p1202 = pneg %p400
        $region166: #{output_interface_forward_training.4} parent=111 // pred_check_branch
          %1204 = sbr.rel (%p1202) target = $region168
        $region167: #{output_interface_forward_training.4} parent=111 // pred_region
          %1205 = dma.done %s1199, 16
        $region168: #{output_interface_forward_training.4} parent=111 // pred_fallthru
          _
        %s1206 = sand.u32 %s42, 1
        %s1207 = scalar_lea.sflag [#allocation3], %s1206
        %s1208 = sand.u32 %s413, 1
        %s1209 = scalar_lea.vmem [#allocation20], %s1208
        // Predicated region
        $region169: #{output_interface_forward_training.4} parent=111 // pred_check
          %p1210 = pneg %p426
        $region170: #{output_interface_forward_training.4} parent=111 // pred_check_branch
          %1212 = sbr.rel (%p1210) target = $region172
        $region171: #{output_interface_forward_training.4} parent=111 // pred_region
          %1213 = dma.done %s1207, 16
        $region172: #{output_interface_forward_training.4} parent=111 // pred_fallthru
          _
        %s1214 = sand.u32 %s42, 1
        %s1215 = scalar_lea.sflag [#allocation3], %s1214
        %s1216 = sand.u32 %s439, 1
        %s1217 = scalar_lea.vmem [#allocation21], %s1216
        // Predicated region
        $region173: #{output_interface_forward_training.4} parent=111 // pred_check
          %p1218 = pneg %p452
        $region174: #{output_interface_forward_training.4} parent=111 // pred_check_branch
          %1220 = sbr.rel (%p1218) target = $region176
        $region175: #{output_interface_forward_training.4} parent=111 // pred_region
          %1221 = dma.done %s1215, 16
        $region176: #{output_interface_forward_training.4} parent=111 // pred_fallthru
          _
        %s1222 = sand.u32 %s42, 1
        %s1223 = scalar_lea.sflag [#allocation3], %s1222
        %s1224 = sand.u32 %s465, 1
        %s1225 = scalar_lea.vmem [#allocation22], %s1224
        // Predicated region
        $region177: #{output_interface_forward_training.4} parent=111 // pred_check
          %p1226 = pneg %p478
        $region178: #{output_interface_forward_training.4} parent=111 // pred_check_branch
          %1228 = sbr.rel (%p1226) target = $region180
        $region179: #{output_interface_forward_training.4} parent=111 // pred_region
          %1229 = dma.done %s1223, 16
        $region180: #{output_interface_forward_training.4} parent=111 // pred_fallthru
          _
        %s1230 = sand.u32 %s42, 1
        %s1231 = scalar_lea.sflag [#allocation3], %s1230
        %s1232 = sand.u32 %s491, 1
        %s1233 = smul.addr %s1232, 16
        %s1234 = scalar_lea.vmem [#allocation23], %s1233
        // Predicated region
        $region181: #{output_interface_forward_training.4} parent=111 // pred_check
          %p1235 = pneg %p504
        $region182: #{output_interface_forward_training.4} parent=111 // pred_check_branch
          %1237 = sbr.rel (%p1235) target = $region184
        $region183: #{output_interface_forward_training.4} parent=111 // pred_region
          %1238 = dma.done %s1231, 256
        $region184: #{output_interface_forward_training.4} parent=111 // pred_fallthru
          _
        %s1239 = sand.u32 %s42, 1
        %s1240 = scalar_lea.sflag [#allocation3], %s1239
        %s1241 = sand.u32 %s517, 1
        %s1242 = scalar_lea.vmem [#allocation24], %s1241
        // Predicated region
        $region185: #{output_interface_forward_training.4} parent=111 // pred_check
          %p1243 = pneg %p530
        $region186: #{output_interface_forward_training.4} parent=111 // pred_check_branch
          %1245 = sbr.rel (%p1243) target = $region188
        $region187: #{output_interface_forward_training.4} parent=111 // pred_region
          %1246 = dma.done %s1240, 16
        $region188: #{output_interface_forward_training.4} parent=111 // pred_fallthru
          _
        %s1247 = sand.u32 %s42, 1
        %s1248 = scalar_lea.sflag [#allocation3], %s1247
        %s1249 = sand.u32 %s543, 1
        %s1250 = smul.addr %s1249, 32
        %s1251 = scalar_lea.vmem [#allocation25], %s1250
        // Predicated region
        $region189: #{output_interface_forward_training.4} parent=111 // pred_check
          %p1252 = pneg %p556
        $region190: #{output_interface_forward_training.4} parent=111 // pred_check_branch
          %1254 = sbr.rel (%p1252) target = $region192
        $region191: #{output_interface_forward_training.4} parent=111 // pred_region
          %1255 = dma.done %s1248, 512
        $region192: #{output_interface_forward_training.4} parent=111 // pred_fallthru
          _
        %s1256 = sand.u32 %s42, 1
        %s1257 = scalar_lea.sflag [#allocation3], %s1256
        %s1258 = sand.u32 %s569, 1
        %s1259 = scalar_lea.vmem [#allocation26], %s1258
        // Predicated region
        $region193: #{output_interface_forward_training.4} parent=111 // pred_check
          %p1260 = pneg %p582
        $region194: #{output_interface_forward_training.4} parent=111 // pred_check_branch
          %1262 = sbr.rel (%p1260) target = $region196
        $region195: #{output_interface_forward_training.4} parent=111 // pred_region
          %1263 = dma.done %s1257, 16
        $region196: #{output_interface_forward_training.4} parent=111 // pred_fallthru
          _
        %s1264 = sand.u32 %s42, 1
        %s1265 = scalar_lea.sflag [#allocation3], %s1264
        %s1266 = sand.u32 %s595, 1
        %s1267 = scalar_lea.vmem [#allocation27], %s1266
        // Predicated region
        $region197: #{output_interface_forward_training.4} parent=111 // pred_check
          %p1268 = pneg %p608
        $region198: #{output_interface_forward_training.4} parent=111 // pred_check_branch
          %1270 = sbr.rel (%p1268) target = $region200
        $region199: #{output_interface_forward_training.4} parent=111 // pred_region
          %1271 = dma.done %s1265, 16
        $region200: #{output_interface_forward_training.4} parent=111 // pred_fallthru
          _
        %s1272 = sand.u32 %s42, 1
        %s1273 = scalar_lea.sflag [#allocation3], %s1272
        %s1274 = sand.u32 %s621, 1
        %s1275 = scalar_lea.vmem [#allocation28], %s1274
        // Predicated region
        $region201: #{output_interface_forward_training.4} parent=111 // pred_check
          %p1276 = pneg %p634
        $region202: #{output_interface_forward_training.4} parent=111 // pred_check_branch
          %1278 = sbr.rel (%p1276) target = $region204
        $region203: #{output_interface_forward_training.4} parent=111 // pred_region
          %1279 = dma.done %s1273, 16
        $region204: #{output_interface_forward_training.4} parent=111 // pred_fallthru
          _
        %s1280 = sand.u32 %s42, 1
        %s1281 = scalar_lea.sflag [#allocation3], %s1280
        %s1282 = sand.u32 %s62, 1
        %s1283 = smul.addr %s1282, 8
        %s1284 = scalar_lea.vmem [#allocation2], %s1283
        %p1285 = pneg %p75
        %p1286 = pneg %p72
        %p1287 = pneg %p96
        %p1288 = pneg %p93
        %p1289 = pneg %p117
        %p1290 = pneg %p114
        %p1291 = pneg %p138
        %p1292 = pneg %p135
        %s1293 = sand.u32 %s42, 1
        %s1294 = scalar_lea.sflag [#allocation3], %s1293
        %s1295 = sand.u32 %s153, 1
        %s1296 = scalar_lea.vmem [#allocation10], %s1295
        %p1297 = pneg %p166
        %p1298 = pneg %p163
        %s1299 = sand.u32 %s42, 1
        %s1300 = scalar_lea.sflag [#allocation3], %s1299
        %s1301 = sand.u32 %s179, 1
        %s1302 = smul.addr %s1301, 64
        %s1303 = scalar_lea.vmem [#allocation11], %s1302
        %p1304 = pneg %p192
        %p1305 = pneg %p189
        %s1306 = sand.u32 %s42, 1
        %s1307 = scalar_lea.sflag [#allocation3], %s1306
        %s1308 = sand.u32 %s205, 1
        %s1309 = smul.addr %s1308, 64
        %s1310 = scalar_lea.vmem [#allocation12], %s1309
        %p1311 = pneg %p218
        %p1312 = pneg %p215
        %s1313 = sand.u32 %s42, 1
        %s1314 = scalar_lea.sflag [#allocation3], %s1313
        %s1315 = sand.u32 %s231, 1
        %s1316 = smul.addr %s1315, 64
        %s1317 = scalar_lea.vmem [#allocation13], %s1316
        %p1318 = pneg %p244
        %p1319 = pneg %p241
        %s1320 = sand.u32 %s42, 1
        %s1321 = scalar_lea.sflag [#allocation3], %s1320
        %s1322 = sand.u32 %s257, 1
        %s1323 = smul.addr %s1322, 4
        %s1324 = scalar_lea.vmem [#allocation14], %s1323
        %p1325 = pneg %p270
        %p1326 = pneg %p267
        %s1327 = sand.u32 %s42, 1
        %s1328 = scalar_lea.sflag [#allocation3], %s1327
        %s1329 = sand.u32 %s283, 1
        %s1330 = smul.addr %s1329, 4
        %s1331 = scalar_lea.vmem [#allocation15], %s1330
        %p1332 = pneg %p296
        %p1333 = pneg %p293
        %s1334 = sand.u32 %s42, 1
        %s1335 = scalar_lea.sflag [#allocation3], %s1334
        %s1336 = sand.u32 %s309, 1
        %s1337 = smul.addr %s1336, 4
        %s1338 = scalar_lea.vmem [#allocation16], %s1337
        %p1339 = pneg %p322
        %p1340 = pneg %p319
        %s1341 = sand.u32 %s42, 1
        %s1342 = scalar_lea.sflag [#allocation3], %s1341
        %s1343 = sand.u32 %s335, 1
        %s1344 = smul.addr %s1343, 16
        %s1345 = scalar_lea.vmem [#allocation17], %s1344
        %p1346 = pneg %p348
        %p1347 = pneg %p345
        %s1348 = sand.u32 %s42, 1
        %s1349 = scalar_lea.sflag [#allocation3], %s1348
        %s1350 = sand.u32 %s361, 1
        %s1351 = scalar_lea.vmem [#allocation18], %s1350
        %p1352 = pneg %p374
        %p1353 = pneg %p371
        %s1354 = sand.u32 %s42, 1
        %s1355 = scalar_lea.sflag [#allocation3], %s1354
        %s1356 = sand.u32 %s387, 1
        %s1357 = scalar_lea.vmem [#allocation19], %s1356
        %p1358 = pneg %p400
        %p1359 = pneg %p397
        %s1360 = sand.u32 %s42, 1
        %s1361 = scalar_lea.sflag [#allocation3], %s1360
        %s1362 = sand.u32 %s413, 1
        %s1363 = scalar_lea.vmem [#allocation20], %s1362
        %p1364 = pneg %p426
        %p1365 = pneg %p423
        %s1366 = sand.u32 %s42, 1
        %s1367 = scalar_lea.sflag [#allocation3], %s1366
        %s1368 = sand.u32 %s439, 1
        %s1369 = scalar_lea.vmem [#allocation21], %s1368
        %p1370 = pneg %p452
        %p1371 = pneg %p449
        %s1372 = sand.u32 %s42, 1
        %s1373 = scalar_lea.sflag [#allocation3], %s1372
        %s1374 = sand.u32 %s465, 1
        %s1375 = scalar_lea.vmem [#allocation22], %s1374
        %p1376 = pneg %p478
        %p1377 = pneg %p475
        %s1378 = sand.u32 %s42, 1
        %s1379 = scalar_lea.sflag [#allocation3], %s1378
        %s1380 = sand.u32 %s491, 1
        %s1381 = smul.addr %s1380, 16
        %s1382 = scalar_lea.vmem [#allocation23], %s1381
        %p1383 = pneg %p504
        %p1384 = pneg %p501
        %s1385 = sand.u32 %s42, 1
        %s1386 = scalar_lea.sflag [#allocation3], %s1385
        %s1387 = sand.u32 %s517, 1
        %s1388 = scalar_lea.vmem [#allocation24], %s1387
        %p1389 = pneg %p530
        %p1390 = pneg %p527
        %s1391 = sand.u32 %s42, 1
        %s1392 = scalar_lea.sflag [#allocation3], %s1391
        %s1393 = sand.u32 %s543, 1
        %s1394 = smul.addr %s1393, 32
        %s1395 = scalar_lea.vmem [#allocation25], %s1394
        %p1396 = pneg %p556
        %p1397 = pneg %p553
        %s1398 = sand.u32 %s42, 1
        %s1399 = scalar_lea.sflag [#allocation3], %s1398
        %s1400 = sand.u32 %s569, 1
        %s1401 = scalar_lea.vmem [#allocation26], %s1400
        %p1402 = pneg %p582
        %p1403 = pneg %p579
        %s1404 = sand.u32 %s42, 1
        %s1405 = scalar_lea.sflag [#allocation3], %s1404
        %s1406 = sand.u32 %s595, 1
        %s1407 = scalar_lea.vmem [#allocation27], %s1406
        %p1408 = pneg %p608
        %p1409 = pneg %p605
        %s1410 = sand.u32 %s42, 1
        %s1411 = scalar_lea.sflag [#allocation3], %s1410
        %s1412 = sand.u32 %s621, 1
        %s1413 = scalar_lea.vmem [#allocation28], %s1412
        %p1414 = pneg %p634
        %p1415 = pneg %p631
        %p1416 = pneg %p660
        %p1417 = pneg %p657
        %s1418 = sand.u32 %s647, 1
        %s1419 = scalar_lea.sflag [#allocation4], %s1418
        %s1420 = sand.u32 %s647, 1
        %s1421 = smul.addr %s1420, 8
        %s1422 = scalar_lea.vmem [#allocation29], %s1421
        %p1424 = scmp.eq.s32.totalorder %s47, 0
        // Predicated region
        $region205: #{output_interface_forward_training.4} parent=111 // pred_check
          %p1425 = pneg %p1424
        $region206: #{output_interface_forward_training.4} parent=111 // pred_check_branch
          %1427 = sbr.rel (%p1425) target = $region208
        $region207: #{output_interface_forward_training.4} parent=111 // pred_region
          %v1428 = vld [vmem:[%s1102] sm:$0xff]
          %v1429 = vld [vmem:[#allocation5] sm:$0xff]
          %v1430 = vadd.f32 %v1428, %v1429
          %v1431 = vld [vmem:[#allocation7] sm:$0x1]
          %v1432 = vld [vmem:[#allocation8] sm:$0x1]
          %vm1433 = vcmask 261120
          %v1434 = vsel %vm1433, %v1430, 0.0
          %1435 = vadd.xlane.f32.xlu0 %v1434
          %v1436 = vpop.xlane.xlu0 %1435
          %v1437 = vrcp.pop 32.0
          %v1438 = vmul.f32 %v1436, %v1437
          %v1439 = vsub.f32 %v1430, %v1438
          %v1440 = vmul.f32 %v1439, %v1439
          %v1441 = vsel %vm1433, %v1440, 0.0
          %1442 = vadd.xlane.f32.xlu0 %v1441
          %v1443 = vpop.xlane.xlu0 %1442
          %v1444 = vmul.f32 %v1443, %v1437
          %v1445 = vadd.f32 %v1444, 1e-05
          %v1446 = vrsqrt.pop %v1445
          %v1447 = vmul.f32 %v1439, %v1446
          %v1449 = vlaneseq
          %v1450 = vshrl.u32 %v1449, 7
          %v1451 = vsub.s32 0, %v1450
          %v1452 = vrot.slane %v1431, %v1451
          %v1454 = vmul.f32 %v1447, %v1452
          %v1456 = vlaneseq
          %v1457 = vshrl.u32 %v1456, 7
          %v1458 = vsub.s32 0, %v1457
          %v1459 = vrot.slane %v1432, %v1458
          %v1461 = vadd.f32 %v1454, %v1459
          %1462 = vst.msk [vmem:[%s1422] sm:$0xff] %vm1433, %v1461
        $region208: #{output_interface_forward_training.4} parent=111 // pred_fallthru
          _
        %v1463 = vld [vmem:[%s1422] sm:$0xff]
        %v1464 = vpack.c.bf16 %v1463, %v1463
        %v1465 = vlaneseq
        %v1466 = vshrl.u32 %v1465, 7
        %v1467 = vlaneseq
        %v1468 = vand.u32 %v1467, 127
        %vm1469 = vcmp.gt.s32.totalorder %v1468, %v1466
        %v1470 = vsel %vm1469, -1e+30, 0.0
        %v1471 = vld [vmem:[%s1131] sm:$0xf]
        %v1472 = vld [vmem:[%s1131 + $0x4] sm:$0xf]
        %v1473 = vld [vmem:[%s1131 + $0x8] sm:$0xf]
        %v1474 = vld [vmem:[%s1131 + $0xc] sm:$0xf]
        %v1475 = vld [vmem:[%s1158] sm:$0x1]
        %v1477 = vlaneseq
        %v1478 = vshrl.u32 %v1477, 7
        %v1479 = vsub.s32 0, %v1478
        %v1480 = vrot.slane %v1475, %v1479
        %v1486 = vunpack.c.l.b16 %v1471
        %v1487 = vunpack.c.l.b16 %v1472
        %v1488 = vunpack.c.l.b16 %v1473
        %v1489 = vunpack.c.l.b16 %v1474
        %v1490 = vpack.c.b16 %v1487, %v1486
        %v1491 = vpack.c.b16 %v1489, %v1488
        %vm1494 = vcmask 261120
        %v1496 = vsel %vm1494, %v1464, 0
        %1498 = vmatprep.subr.bf16.mxu0 0
        %1499 = vmatpush1.bf16.msra.mxu0 %v1490
        %1500 = vmatprep.subr.bf16.mxu0 0
        %1501 = vmatpush1.bf16.msra.mxu0 %v1491
        %1502 = vmatprep.subr.bf16.mxu0 0
        %1503 = vmatpush1.bf16.msra.mxu0 0
        %1504 = vmatprep.subr.bf16.mxu0 0
        %1505 = vmatpush1.bf16.msra.mxu0 0
        %1506 = vmatprep.subr.bf16.mxu0 0
        %1507 = vmatpush1.bf16.msra.mxu0 0
        %1508 = vmatprep.subr.bf16.mxu0 0
        %1509 = vmatpush1.bf16.msra.mxu0 0
        %1510 = vmatprep.subr.bf16.mxu0 0
        %1511 = vmatpush1.bf16.msra.mxu0 0
        %1512 = vmatprep.subr.bf16.mxu0 0
        %1513 = vmatpush1.bf16.msra.mxu0 0
        %1514 = vmatprep.subr.bf16.mxu0 0
        %1515 = vmatpush1.bf16.msra.mxu0 0
        %1516 = vmatprep.subr.bf16.mxu0 0
        %1517 = vmatpush1.bf16.msra.mxu0 0
        %1518 = vmatprep.subr.bf16.mxu0 0
        %1519 = vmatpush1.bf16.msra.mxu0 0
        %1520 = vmatprep.subr.bf16.mxu0 0
        %1521 = vmatpush1.bf16.msra.mxu0 0
        %1522 = vmatprep.subr.bf16.mxu0 0
        %1523 = vmatpush1.bf16.msra.mxu0 0
        %1524 = vmatprep.subr.bf16.mxu0 0
        %1525 = vmatpush1.bf16.msra.mxu0 0
        %1526 = vmatprep.subr.bf16.mxu0 0
        %1527 = vmatpush1.bf16.msra.mxu0 0
        %1528 = vmatprep.subr.bf16.mxu0 0
        %1529 = vmatpush1.bf16.msra.mxu0 0
        %1530 = vmatprep.mubr.bf16.mxu0 0
        %1531 = vmatmul.mubr.bf16.gmra.mrb[0].mxu0 %v1496
        %v1532 = vpop.f32.mrb[0].mxu0
        %v1533 = vadd.f32 %v1480, %v1532
        %v1534 = vpop.f32.mrb[0].mxu0
        %v1535 = vpop.f32.mrb[0].mxu0
        %v1536 = vpop.f32.mrb[0].mxu0
        %1537 = vdwg.mxu0
        %v1538 = vld [vmem:[%s1140] sm:$0xf]
        %v1539 = vld [vmem:[%s1140 + $0x4] sm:$0xf]
        %v1540 = vld [vmem:[%s1140 + $0x8] sm:$0xf]
        %v1541 = vld [vmem:[%s1140 + $0xc] sm:$0xf]
        %v1542 = vld [vmem:[%s1167] sm:$0x1]
        %v1544 = vlaneseq
        %v1545 = vshrl.u32 %v1544, 7
        %v1546 = vsub.s32 0, %v1545
        %v1547 = vrot.slane %v1542, %v1546
        %v1553 = vunpack.c.l.b16 %v1538
        %v1554 = vunpack.c.l.b16 %v1539
        %v1555 = vunpack.c.l.b16 %v1540
        %v1556 = vunpack.c.l.b16 %v1541
        %v1557 = vpack.c.b16 %v1554, %v1553
        %v1558 = vpack.c.b16 %v1556, %v1555
        %1561 = vmatprep.subr.bf16.mxu0 0
        %1562 = vmatpush1.bf16.msra.mxu0 %v1557
        %1563 = vmatprep.subr.bf16.mxu0 0
        %1564 = vmatpush1.bf16.msra.mxu0 %v1558
        %1565 = vmatprep.subr.bf16.mxu0 0
        %1566 = vmatpush1.bf16.msra.mxu0 0
        %1567 = vmatprep.subr.bf16.mxu0 0
        %1568 = vmatpush1.bf16.msra.mxu0 0
        %1569 = vmatprep.subr.bf16.mxu0 0
        %1570 = vmatpush1.bf16.msra.mxu0 0
        %1571 = vmatprep.subr.bf16.mxu0 0
        %1572 = vmatpush1.bf16.msra.mxu0 0
        %1573 = vmatprep.subr.bf16.mxu0 0
        %1574 = vmatpush1.bf16.msra.mxu0 0
        %1575 = vmatprep.subr.bf16.mxu0 0
        %1576 = vmatpush1.bf16.msra.mxu0 0
        %1577 = vmatprep.subr.bf16.mxu0 0
        %1578 = vmatpush1.bf16.msra.mxu0 0
        %1579 = vmatprep.subr.bf16.mxu0 0
        %1580 = vmatpush1.bf16.msra.mxu0 0
        %1581 = vmatprep.subr.bf16.mxu0 0
        %1582 = vmatpush1.bf16.msra.mxu0 0
        %1583 = vmatprep.subr.bf16.mxu0 0
        %1584 = vmatpush1.bf16.msra.mxu0 0
        %1585 = vmatprep.subr.bf16.mxu0 0
        %1586 = vmatpush1.bf16.msra.mxu0 0
        %1587 = vmatprep.subr.bf16.mxu0 0
        %1588 = vmatpush1.bf16.msra.mxu0 0
        %1589 = vmatprep.subr.bf16.mxu0 0
        %1590 = vmatpush1.bf16.msra.mxu0 0
        %1591 = vmatprep.subr.bf16.mxu0 0
        %1592 = vmatpush1.bf16.msra.mxu0 0
        %1593 = vmatprep.mubr.bf16.mxu0 0
        %1594 = vmatmul.mubr.bf16.gmra.mrb[0].mxu0 %v1496
        %v1595 = vpop.f32.mrb[0].mxu0
        %v1596 = vadd.f32 %v1547, %v1595
        %v1597 = vpop.f32.mrb[0].mxu0
        %v1598 = vpop.f32.mrb[0].mxu0
        %v1599 = vpop.f32.mrb[0].mxu0
        %1600 = vdwg.mxu0
        %v1601 = vld [vmem:[%s1149] sm:$0xf]
        %v1602 = vld [vmem:[%s1149 + $0x4] sm:$0xf]
        %v1603 = vld [vmem:[%s1149 + $0x8] sm:$0xf]
        %v1604 = vld [vmem:[%s1149 + $0xc] sm:$0xf]
        %v1605 = vld [vmem:[%s1176] sm:$0x1]
        %v1607 = vlaneseq
        %v1608 = vshrl.u32 %v1607, 7
        %v1609 = vsub.s32 0, %v1608
        %v1610 = vrot.slane %v1605, %v1609
        %v1616 = vunpack.c.l.b16 %v1601
        %v1617 = vunpack.c.l.b16 %v1602
        %v1618 = vunpack.c.l.b16 %v1603
        %v1619 = vunpack.c.l.b16 %v1604
        %v1620 = vpack.c.b16 %v1617, %v1616
        %v1621 = vpack.c.b16 %v1619, %v1618
        %1624 = vmatprep.subr.bf16.mxu0 0
        %1625 = vmatpush1.bf16.msra.mxu0 %v1620
        %1626 = vmatprep.subr.bf16.mxu0 0
        %1627 = vmatpush1.bf16.msra.mxu0 %v1621
        %1628 = vmatprep.subr.bf16.mxu0 0
        %1629 = vmatpush1.bf16.msra.mxu0 0
        %1630 = vmatprep.subr.bf16.mxu0 0
        %1631 = vmatpush1.bf16.msra.mxu0 0
        %1632 = vmatprep.subr.bf16.mxu0 0
        %1633 = vmatpush1.bf16.msra.mxu0 0
        %1634 = vmatprep.subr.bf16.mxu0 0
        %1635 = vmatpush1.bf16.msra.mxu0 0
        %1636 = vmatprep.subr.bf16.mxu0 0
        %1637 = vmatpush1.bf16.msra.mxu0 0
        %1638 = vmatprep.subr.bf16.mxu0 0
        %1639 = vmatpush1.bf16.msra.mxu0 0
        %1640 = vmatprep.subr.bf16.mxu0 0
        %1641 = vmatpush1.bf16.msra.mxu0 0
        %1642 = vmatprep.subr.bf16.mxu0 0
        %1643 = vmatpush1.bf16.msra.mxu0 0
        %1644 = vmatprep.subr.bf16.mxu0 0
        %1645 = vmatpush1.bf16.msra.mxu0 0
        %1646 = vmatprep.subr.bf16.mxu0 0
        %1647 = vmatpush1.bf16.msra.mxu0 0
        %1648 = vmatprep.subr.bf16.mxu0 0
        %1649 = vmatpush1.bf16.msra.mxu0 0
        %1650 = vmatprep.subr.bf16.mxu0 0
        %1651 = vmatpush1.bf16.msra.mxu0 0
        %1652 = vmatprep.subr.bf16.mxu0 0
        %1653 = vmatpush1.bf16.msra.mxu0 0
        %1654 = vmatprep.subr.bf16.mxu0 0
        %1655 = vmatpush1.bf16.msra.mxu0 0
        %1656 = vmatprep.mubr.bf16.mxu0 0
        %1657 = vmatmul.mubr.bf16.gmra.mrb[0].mxu0 %v1496
        %v1658 = vpop.f32.mrb[0].mxu0
        %v1659 = vadd.f32 %v1610, %v1658
        %v1660 = vpop.f32.mrb[0].mxu0
        %v1661 = vpop.f32.mrb[0].mxu0
        %v1662 = vpop.f32.mrb[0].mxu0
        %1663 = vdwg.mxu0
        %v1664 = vpack.c.bf16 %v1533, %v1533
        %v1665 = vpack.c.bf16 %v1596, %v1596
        %vm1666 = vcmask 64512
        %v1668 = vsel %vm1666, %v1664, 0
        %v1671 = vsel %vm1666, %v1665, 0
        %1673 = vmatprep.subr.bf16.mxu0 0
        %1674 = vmatpush1.bf16.xpose.msra.mxu0 %v1671
        %1675 = vmatprep.subr.bf16.mxu0 0
        %1676 = vmatpush1.bf16.xpose.msra.mxu0 0
        %1677 = vmatprep.subr.bf16.mxu0 0
        %1678 = vmatpush1.bf16.xpose.msra.mxu0 0
        %1679 = vmatprep.subr.bf16.mxu0 0
        %1680 = vmatpush1.bf16.xpose.msra.mxu0 0
        %1681 = vmatprep.subr.bf16.mxu0 0
        %1682 = vmatpush1.bf16.xpose.msra.mxu0 0
        %1683 = vmatprep.subr.bf16.mxu0 0
        %1684 = vmatpush1.bf16.xpose.msra.mxu0 0
        %1685 = vmatprep.subr.bf16.mxu0 0
        %1686 = vmatpush1.bf16.xpose.msra.mxu0 0
        %1687 = vmatprep.subr.bf16.mxu0 0
        %1688 = vmatpush1.bf16.xpose.msra.mxu0 0
        %1689 = vmatprep.subr.bf16.mxu0 0
        %1690 = vmatpush1.bf16.xpose.msra.mxu0 0
        %1691 = vmatprep.subr.bf16.mxu0 0
        %1692 = vmatpush1.bf16.xpose.msra.mxu0 0
        %1693 = vmatprep.subr.bf16.mxu0 0
        %1694 = vmatpush1.bf16.xpose.msra.mxu0 0
        %1695 = vmatprep.subr.bf16.mxu0 0
        %1696 = vmatpush1.bf16.xpose.msra.mxu0 0
        %1697 = vmatprep.subr.bf16.mxu0 0
        %1698 = vmatpush1.bf16.xpose.msra.mxu0 0
        %1699 = vmatprep.subr.bf16.mxu0 0
        %1700 = vmatpush1.bf16.xpose.msra.mxu0 0
        %1701 = vmatprep.subr.bf16.mxu0 0
        %1702 = vmatpush1.bf16.xpose.msra.mxu0 0
        %1703 = vmatprep.subr.bf16.mxu0 0
        %1704 = vmatpush1.bf16.xpose.msra.mxu0 0
        %1705 = vmatprep.mubr.bf16.mxu0 0
        %1706 = vmatmul.mubr.bf16.gmra.mrb[0].mxu0 %v1668
        %v1707 = vpop.f32.mrb[0].mxu0
        %v1708 = vadd.f32 0.0, %v1707
        %v1709 = vpop.f32.mrb[0].mxu0
        %v1710 = vpop.f32.mrb[0].mxu0
        %v1711 = vpop.f32.mrb[0].mxu0
        %1712 = vdwg.mxu0
        %v1713 = vmul.f32 %v1708, 0.35355338
        %v1714 = vadd.f32 %v1713, %v1470
        %v1715 = vsel %vm1666, %v1714, -inf
        %1716 = vmax.xlane.f32.xlu0 %v1715
        %v1717 = vpop.xlane.xlu0 %1716
        %v1718 = vsub.f32 %v1714, %v1717
        %v1719 = vmul.f32 %v1718, 1.442695
        %v1720 = vpow.pop %v1719
        %v1721 = vsel %vm1666, %v1720, 0.0
        %1722 = vadd.xlane.f32.xlu0 %v1721
        %v1723 = vpop.xlane.xlu0 %1722
        %v1724 = vrcp.pop %v1723
        %v1725 = vmul.f32 %v1720, %v1724
        %v1726 = vpack.c.bf16 %v1725, %v1725
        %v1727 = vpack.c.bf16 %v1659, %v1659
        %v1729 = vsel %vm1666, %v1726, 0
        %vm1731 = vcmask 1043456
        %v1733 = vsel %vm1731, %v1727, 0
        %1735 = vmatprep.subr.bf16.mxu0 0
        %1736 = vmatpush1.bf16.msra.mxu0 %v1733
        %1737 = vmatprep.subr.bf16.mxu0 0
        %1738 = vmatpush1.bf16.msra.mxu0 0
        %1739 = vmatprep.subr.bf16.mxu0 0
        %1740 = vmatpush1.bf16.msra.mxu0 0
        %1741 = vmatprep.subr.bf16.mxu0 0
        %1742 = vmatpush1.bf16.msra.mxu0 0
        %1743 = vmatprep.subr.bf16.mxu0 0
        %1744 = vmatpush1.bf16.msra.mxu0 0
        %1745 = vmatprep.subr.bf16.mxu0 0
        %1746 = vmatpush1.bf16.msra.mxu0 0
        %1747 = vmatprep.subr.bf16.mxu0 0
        %1748 = vmatpush1.bf16.msra.mxu0 0
        %1749 = vmatprep.subr.bf16.mxu0 0
        %1750 = vmatpush1.bf16.msra.mxu0 0
        %1751 = vmatprep.subr.bf16.mxu0 0
        %1752 = vmatpush1.bf16.msra.mxu0 0
        %1753 = vmatprep.subr.bf16.mxu0 0
        %1754 = vmatpush1.bf16.msra.mxu0 0
        %1755 = vmatprep.subr.bf16.mxu0 0
        %1756 = vmatpush1.bf16.msra.mxu0 0
        %1757 = vmatprep.subr.bf16.mxu0 0
        %1758 = vmatpush1.bf16.msra.mxu0 0
        %1759 = vmatprep.subr.bf16.mxu0 0
        %1760 = vmatpush1.bf16.msra.mxu0 0
        %1761 = vmatprep.subr.bf16.mxu0 0
        %1762 = vmatpush1.bf16.msra.mxu0 0
        %1763 = vmatprep.subr.bf16.mxu0 0
        %1764 = vmatpush1.bf16.msra.mxu0 0
        %1765 = vmatprep.subr.bf16.mxu0 0
        %1766 = vmatpush1.bf16.msra.mxu0 0
        %1767 = vmatprep.mubr.bf16.mxu0 0
        %1768 = vmatmul.mubr.bf16.gmra.mrb[0].mxu0 %v1729
        %v1769 = vpop.f32.mrb[0].mxu0
        %v1770 = vadd.f32 0.0, %v1769
        %v1771 = vpop.f32.mrb[0].mxu0
        %v1772 = vpop.f32.mrb[0].mxu0
        %v1773 = vpop.f32.mrb[0].mxu0
        %1774 = vdwg.mxu0
        %v1775 = vpack.c.bf16 %v1770, %v1770
        %v1776 = vld [vmem:[%s1185] sm:$0xf]
        %s1777 = scalar_lea.vmem %s1131, 16 [#allocation11]
        %v1778 = vld [vmem:[%s1777] sm:$0xf]
        %v1779 = vld [vmem:[%s1777 + $0x4] sm:$0xf]
        %v1780 = vld [vmem:[%s1777 + $0x8] sm:$0xf]
        %v1781 = vld [vmem:[%s1777 + $0xc] sm:$0xf]
        %s1782 = scalar_lea.vmem %s1158, 1 [#allocation14]
        %v1783 = vld [vmem:[%s1782] sm:$0x1]
        %v1785 = vlaneseq
        %v1786 = vshrl.u32 %v1785, 7
        %v1787 = vsub.s32 0, %v1786
        %v1788 = vrot.slane %v1783, %v1787
        %v1794 = vunpack.c.l.b16 %v1778
        %v1795 = vunpack.c.l.b16 %v1779
        %v1796 = vunpack.c.l.b16 %v1780
        %v1797 = vunpack.c.l.b16 %v1781
        %v1798 = vpack.c.b16 %v1795, %v1794
        %v1799 = vpack.c.b16 %v1797, %v1796
        %1802 = vmatprep.subr.bf16.mxu0 0
        %1803 = vmatpush1.bf16.msra.mxu0 %v1798
        %1804 = vmatprep.subr.bf16.mxu0 0
        %1805 = vmatpush1.bf16.msra.mxu0 %v1799
        %1806 = vmatprep.subr.bf16.mxu0 0
        %1807 = vmatpush1.bf16.msra.mxu0 0
        %1808 = vmatprep.subr.bf16.mxu0 0
        %1809 = vmatpush1.bf16.msra.mxu0 0
        %1810 = vmatprep.subr.bf16.mxu0 0
        %1811 = vmatpush1.bf16.msra.mxu0 0
        %1812 = vmatprep.subr.bf16.mxu0 0
        %1813 = vmatpush1.bf16.msra.mxu0 0
        %1814 = vmatprep.subr.bf16.mxu0 0
        %1815 = vmatpush1.bf16.msra.mxu0 0
        %1816 = vmatprep.subr.bf16.mxu0 0
        %1817 = vmatpush1.bf16.msra.mxu0 0
        %1818 = vmatprep.subr.bf16.mxu0 0
        %1819 = vmatpush1.bf16.msra.mxu0 0
        %1820 = vmatprep.subr.bf16.mxu0 0
        %1821 = vmatpush1.bf16.msra.mxu0 0
        %1822 = vmatprep.subr.bf16.mxu0 0
        %1823 = vmatpush1.bf16.msra.mxu0 0
        %1824 = vmatprep.subr.bf16.mxu0 0
        %1825 = vmatpush1.bf16.msra.mxu0 0
        %1826 = vmatprep.subr.bf16.mxu0 0
        %1827 = vmatpush1.bf16.msra.mxu0 0
        %1828 = vmatprep.subr.bf16.mxu0 0
        %1829 = vmatpush1.bf16.msra.mxu0 0
        %1830 = vmatprep.subr.bf16.mxu0 0
        %1831 = vmatpush1.bf16.msra.mxu0 0
        %1832 = vmatprep.subr.bf16.mxu0 0
        %1833 = vmatpush1.bf16.msra.mxu0 0
        %1834 = vmatprep.mubr.bf16.mxu0 0
        %1835 = vmatmul.mubr.bf16.gmra.mrb[0].mxu0 %v1496
        %v1836 = vpop.f32.mrb[0].mxu0
        %v1837 = vadd.f32 %v1788, %v1836
        %v1838 = vpop.f32.mrb[0].mxu0
        %v1839 = vpop.f32.mrb[0].mxu0
        %v1840 = vpop.f32.mrb[0].mxu0
        %1841 = vdwg.mxu0
        %s1842 = scalar_lea.vmem %s1140, 16 [#allocation12]
        %v1843 = vld [vmem:[%s1842] sm:$0xf]
        %v1844 = vld [vmem:[%s1842 + $0x4] sm:$0xf]
        %v1845 = vld [vmem:[%s1842 + $0x8] sm:$0xf]
        %v1846 = vld [vmem:[%s1842 + $0xc] sm:$0xf]
        %s1847 = scalar_lea.vmem %s1167, 1 [#allocation15]
        %v1848 = vld [vmem:[%s1847] sm:$0x1]
        %v1850 = vlaneseq
        %v1851 = vshrl.u32 %v1850, 7
        %v1852 = vsub.s32 0, %v1851
        %v1853 = vrot.slane %v1848, %v1852
        %v1859 = vunpack.c.l.b16 %v1843
        %v1860 = vunpack.c.l.b16 %v1844
        %v1861 = vunpack.c.l.b16 %v1845
        %v1862 = vunpack.c.l.b16 %v1846
        %v1863 = vpack.c.b16 %v1860, %v1859
        %v1864 = vpack.c.b16 %v1862, %v1861
        %1867 = vmatprep.subr.bf16.mxu0 0
        %1868 = vmatpush1.bf16.msra.mxu0 %v1863
        %1869 = vmatprep.subr.bf16.mxu0 0
        %1870 = vmatpush1.bf16.msra.mxu0 %v1864
        %1871 = vmatprep.subr.bf16.mxu0 0
        %1872 = vmatpush1.bf16.msra.mxu0 0
        %1873 = vmatprep.subr.bf16.mxu0 0
        %1874 = vmatpush1.bf16.msra.mxu0 0
        %1875 = vmatprep.subr.bf16.mxu0 0
        %1876 = vmatpush1.bf16.msra.mxu0 0
        %1877 = vmatprep.subr.bf16.mxu0 0
        %1878 = vmatpush1.bf16.msra.mxu0 0
        %1879 = vmatprep.subr.bf16.mxu0 0
        %1880 = vmatpush1.bf16.msra.mxu0 0
        %1881 = vmatprep.subr.bf16.mxu0 0
        %1882 = vmatpush1.bf16.msra.mxu0 0
        %1883 = vmatprep.subr.bf16.mxu0 0
        %1884 = vmatpush1.bf16.msra.mxu0 0
        %1885 = vmatprep.subr.bf16.mxu0 0
        %1886 = vmatpush1.bf16.msra.mxu0 0
        %1887 = vmatprep.subr.bf16.mxu0 0
        %1888 = vmatpush1.bf16.msra.mxu0 0
        %1889 = vmatprep.subr.bf16.mxu0 0
        %1890 = vmatpush1.bf16.msra.mxu0 0
        %1891 = vmatprep.subr.bf16.mxu0 0
        %1892 = vmatpush1.bf16.msra.mxu0 0
        %1893 = vmatprep.subr.bf16.mxu0 0
        %1894 = vmatpush1.bf16.msra.mxu0 0
        %1895 = vmatprep.subr.bf16.mxu0 0
        %1896 = vmatpush1.bf16.msra.mxu0 0
        %1897 = vmatprep.subr.bf16.mxu0 0
        %1898 = vmatpush1.bf16.msra.mxu0 0
        %1899 = vmatprep.mubr.bf16.mxu0 0
        %1900 = vmatmul.mubr.bf16.gmra.mrb[0].mxu0 %v1496
        %v1901 = vpop.f32.mrb[0].mxu0
        %v1902 = vadd.f32 %v1853, %v1901
        %v1903 = vpop.f32.mrb[0].mxu0
        %v1904 = vpop.f32.mrb[0].mxu0
        %v1905 = vpop.f32.mrb[0].mxu0
        %1906 = vdwg.mxu0
        %s1907 = scalar_lea.vmem %s1149, 16 [#allocation13]
        %v1908 = vld [vmem:[%s1907] sm:$0xf]
        %v1909 = vld [vmem:[%s1907 + $0x4] sm:$0xf]
        %v1910 = vld [vmem:[%s1907 + $0x8] sm:$0xf]
        %v1911 = vld [vmem:[%s1907 + $0xc] sm:$0xf]
        %s1912 = scalar_lea.vmem %s1176, 1 [#allocation16]
        %v1913 = vld [vmem:[%s1912] sm:$0x1]
        %v1915 = vlaneseq
        %v1916 = vshrl.u32 %v1915, 7
        %v1917 = vsub.s32 0, %v1916
        %v1918 = vrot.slane %v1913, %v1917
        %v1924 = vunpack.c.l.b16 %v1908
        %v1925 = vunpack.c.l.b16 %v1909
        %v1926 = vunpack.c.l.b16 %v1910
        %v1927 = vunpack.c.l.b16 %v1911
        %v1928 = vpack.c.b16 %v1925, %v1924
        %v1929 = vpack.c.b16 %v1927, %v1926
        %1932 = vmatprep.subr.bf16.mxu0 0
        %1933 = vmatpush1.bf16.msra.mxu0 %v1928
        %1934 = vmatprep.subr.bf16.mxu0 0
        %1935 = vmatpush1.bf16.msra.mxu0 %v1929
        %1936 = vmatprep.subr.bf16.mxu0 0
        %1937 = vmatpush1.bf16.msra.mxu0 0
        %1938 = vmatprep.subr.bf16.mxu0 0
        %1939 = vmatpush1.bf16.msra.mxu0 0
        %1940 = vmatprep.subr.bf16.mxu0 0
        %1941 = vmatpush1.bf16.msra.mxu0 0
        %1942 = vmatprep.subr.bf16.mxu0 0
        %1943 = vmatpush1.bf16.msra.mxu0 0
        %1944 = vmatprep.subr.bf16.mxu0 0
        %1945 = vmatpush1.bf16.msra.mxu0 0
        %1946 = vmatprep.subr.bf16.mxu0 0
        %1947 = vmatpush1.bf16.msra.mxu0 0
        %1948 = vmatprep.subr.bf16.mxu0 0
        %1949 = vmatpush1.bf16.msra.mxu0 0
        %1950 = vmatprep.subr.bf16.mxu0 0
        %1951 = vmatpush1.bf16.msra.mxu0 0
        %1952 = vmatprep.subr.bf16.mxu0 0
        %1953 = vmatpush1.bf16.msra.mxu0 0
        %1954 = vmatprep.subr.bf16.mxu0 0
        %1955 = vmatpush1.bf16.msra.mxu0 0
        %1956 = vmatprep.subr.bf16.mxu0 0
        %1957 = vmatpush1.bf16.msra.mxu0 0
        %1958 = vmatprep.subr.bf16.mxu0 0
        %1959 = vmatpush1.bf16.msra.mxu0 0
        %1960 = vmatprep.subr.bf16.mxu0 0
        %1961 = vmatpush1.bf16.msra.mxu0 0
        %1962 = vmatprep.subr.bf16.mxu0 0
        %1963 = vmatpush1.bf16.msra.mxu0 0
        %1964 = vmatprep.mubr.bf16.mxu0 0
        %1965 = vmatmul.mubr.bf16.gmra.mrb[0].mxu0 %v1496
        %v1966 = vpop.f32.mrb[0].mxu0
        %v1967 = vadd.f32 %v1918, %v1966
        %v1968 = vpop.f32.mrb[0].mxu0
        %v1969 = vpop.f32.mrb[0].mxu0
        %v1970 = vpop.f32.mrb[0].mxu0
        %1971 = vdwg.mxu0
        %v1972 = vpack.c.bf16 %v1837, %v1837
        %v1973 = vpack.c.bf16 %v1902, %v1902
        %v1975 = vsel %vm1666, %v1972, 0
        %v1978 = vsel %vm1666, %v1973, 0
        %1980 = vmatprep.subr.bf16.mxu0 0
        %1981 = vmatpush1.bf16.xpose.msra.mxu0 %v1978
        %1982 = vmatprep.subr.bf16.mxu0 0
        %1983 = vmatpush1.bf16.xpose.msra.mxu0 0
        %1984 = vmatprep.subr.bf16.mxu0 0
        %1985 = vmatpush1.bf16.xpose.msra.mxu0 0
        %1986 = vmatprep.subr.bf16.mxu0 0
        %1987 = vmatpush1.bf16.xpose.msra.mxu0 0
        %1988 = vmatprep.subr.bf16.mxu0 0
        %1989 = vmatpush1.bf16.xpose.msra.mxu0 0
        %1990 = vmatprep.subr.bf16.mxu0 0
        %1991 = vmatpush1.bf16.xpose.msra.mxu0 0
        %1992 = vmatprep.subr.bf16.mxu0 0
        %1993 = vmatpush1.bf16.xpose.msra.mxu0 0
        %1994 = vmatprep.subr.bf16.mxu0 0
        %1995 = vmatpush1.bf16.xpose.msra.mxu0 0
        %1996 = vmatprep.subr.bf16.mxu0 0
        %1997 = vmatpush1.bf16.xpose.msra.mxu0 0
        %1998 = vmatprep.subr.bf16.mxu0 0
        %1999 = vmatpush1.bf16.xpose.msra.mxu0 0
        %2000 = vmatprep.subr.bf16.mxu0 0
        %2001 = vmatpush1.bf16.xpose.msra.mxu0 0
        %2002 = vmatprep.subr.bf16.mxu0 0
        %2003 = vmatpush1.bf16.xpose.msra.mxu0 0
        %2004 = vmatprep.subr.bf16.mxu0 0
        %2005 = vmatpush1.bf16.xpose.msra.mxu0 0
        %2006 = vmatprep.subr.bf16.mxu0 0
        %2007 = vmatpush1.bf16.xpose.msra.mxu0 0
        %2008 = vmatprep.subr.bf16.mxu0 0
        %2009 = vmatpush1.bf16.xpose.msra.mxu0 0
        %2010 = vmatprep.subr.bf16.mxu0 0
        %2011 = vmatpush1.bf16.xpose.msra.mxu0 0
        %2012 = vmatprep.mubr.bf16.mxu0 0
        %2013 = vmatmul.mubr.bf16.gmra.mrb[0].mxu0 %v1975
        %v2014 = vpop.f32.mrb[0].mxu0
        %v2015 = vadd.f32 0.0, %v2014
        %v2016 = vpop.f32.mrb[0].mxu0
        %v2017 = vpop.f32.mrb[0].mxu0
        %v2018 = vpop.f32.mrb[0].mxu0
        %2019 = vdwg.mxu0
        %v2020 = vmul.f32 %v2015, 0.35355338
        %v2021 = vadd.f32 %v2020, %v1470
        %v2022 = vsel %vm1666, %v2021, -inf
        %2023 = vmax.xlane.f32.xlu0 %v2022
        %v2024 = vpop.xlane.xlu0 %2023
        %v2025 = vsub.f32 %v2021, %v2024
        %v2026 = vmul.f32 %v2025, 1.442695
        %v2027 = vpow.pop %v2026
        %v2028 = vsel %vm1666, %v2027, 0.0
        %2029 = vadd.xlane.f32.xlu0 %v2028
        %v2030 = vpop.xlane.xlu0 %2029
        %v2031 = vrcp.pop %v2030
        %v2032 = vmul.f32 %v2027, %v2031
        %v2033 = vpack.c.bf16 %v2032, %v2032
        %v2034 = vpack.c.bf16 %v1967, %v1967
        %v2036 = vsel %vm1666, %v2033, 0
        %v2039 = vsel %vm1731, %v2034, 0
        %2041 = vmatprep.subr.bf16.mxu0 0
        %2042 = vmatpush1.bf16.msra.mxu0 %v2039
        %2043 = vmatprep.subr.bf16.mxu0 0
        %2044 = vmatpush1.bf16.msra.mxu0 0
        %2045 = vmatprep.subr.bf16.mxu0 0
        %2046 = vmatpush1.bf16.msra.mxu0 0
        %2047 = vmatprep.subr.bf16.mxu0 0
        %2048 = vmatpush1.bf16.msra.mxu0 0
        %2049 = vmatprep.subr.bf16.mxu0 0
        %2050 = vmatpush1.bf16.msra.mxu0 0
        %2051 = vmatprep.subr.bf16.mxu0 0
        %2052 = vmatpush1.bf16.msra.mxu0 0
        %2053 = vmatprep.subr.bf16.mxu0 0
        %2054 = vmatpush1.bf16.msra.mxu0 0
        %2055 = vmatprep.subr.bf16.mxu0 0
        %2056 = vmatpush1.bf16.msra.mxu0 0
        %2057 = vmatprep.subr.bf16.mxu0 0
        %2058 = vmatpush1.bf16.msra.mxu0 0
        %2059 = vmatprep.subr.bf16.mxu0 0
        %2060 = vmatpush1.bf16.msra.mxu0 0
        %2061 = vmatprep.subr.bf16.mxu0 0
        %2062 = vmatpush1.bf16.msra.mxu0 0
        %2063 = vmatprep.subr.bf16.mxu0 0
        %2064 = vmatpush1.bf16.msra.mxu0 0
        %2065 = vmatprep.subr.bf16.mxu0 0
        %2066 = vmatpush1.bf16.msra.mxu0 0
        %2067 = vmatprep.subr.bf16.mxu0 0
        %2068 = vmatpush1.bf16.msra.mxu0 0
        %2069 = vmatprep.subr.bf16.mxu0 0
        %2070 = vmatpush1.bf16.msra.mxu0 0
        %2071 = vmatprep.subr.bf16.mxu0 0
        %2072 = vmatpush1.bf16.msra.mxu0 0
        %2073 = vmatprep.mubr.bf16.mxu0 0
        %2074 = vmatmul.mubr.bf16.gmra.mrb[0].mxu0 %v2036
        %v2075 = vpop.f32.mrb[0].mxu0
        %v2076 = vadd.f32 0.0, %v2075
        %v2077 = vpop.f32.mrb[0].mxu0
        %v2078 = vpop.f32.mrb[0].mxu0
        %v2079 = vpop.f32.mrb[0].mxu0
        %2080 = vdwg.mxu0
        %v2081 = vpack.c.bf16 %v2076, %v2076
        %s2082 = scalar_lea.vmem %s1185, 4 [#allocation17]
        %v2083 = vld [vmem:[%s2082] sm:$0xf]
        %v2085 = vsel %vm1666, %v2081, 0
        %v2088 = vsel %vm1731, %v2083, 0
        %2090 = vmatprep.subr.bf16.mxu0 0
        %2091 = vmatpush1.bf16.msra.mxu0 %v2088
        %2092 = vmatprep.subr.bf16.mxu0 0
        %2093 = vmatpush1.bf16.msra.mxu0 0
        %2094 = vmatprep.subr.bf16.mxu0 0
        %2095 = vmatpush1.bf16.msra.mxu0 0
        %2096 = vmatprep.subr.bf16.mxu0 0
        %2097 = vmatpush1.bf16.msra.mxu0 0
        %2098 = vmatprep.subr.bf16.mxu0 0
        %2099 = vmatpush1.bf16.msra.mxu0 0
        %2100 = vmatprep.subr.bf16.mxu0 0
        %2101 = vmatpush1.bf16.msra.mxu0 0
        %2102 = vmatprep.subr.bf16.mxu0 0
        %2103 = vmatpush1.bf16.msra.mxu0 0
        %2104 = vmatprep.subr.bf16.mxu0 0
        %2105 = vmatpush1.bf16.msra.mxu0 0
        %2106 = vmatprep.subr.bf16.mxu0 0
        %2107 = vmatpush1.bf16.msra.mxu0 0
        %2108 = vmatprep.subr.bf16.mxu0 0
        %2109 = vmatpush1.bf16.msra.mxu0 0
        %2110 = vmatprep.subr.bf16.mxu0 0
        %2111 = vmatpush1.bf16.msra.mxu0 0
        %2112 = vmatprep.subr.bf16.mxu0 0
        %2113 = vmatpush1.bf16.msra.mxu0 0
        %2114 = vmatprep.subr.bf16.mxu0 0
        %2115 = vmatpush1.bf16.msra.mxu0 0
        %2116 = vmatprep.subr.bf16.mxu0 0
        %2117 = vmatpush1.bf16.msra.mxu0 0
        %2118 = vmatprep.subr.bf16.mxu0 0
        %2119 = vmatpush1.bf16.msra.mxu0 0
        %2120 = vmatprep.subr.bf16.mxu0 0
        %2121 = vmatpush1.bf16.msra.mxu0 0
        %2122 = vmatprep.mubr.bf16.mxu0 0
        %2123 = vmatmul.mubr.bf16.gmra.mrb[0].mxu0 %v2085
        %v2124 = vpop.f32.mrb[0].mxu0
        %v2125 = vadd.f32 0.0, %v2124
        %v2126 = vpop.f32.mrb[0].mxu0
        %v2127 = vpop.f32.mrb[0].mxu0
        %v2128 = vpop.f32.mrb[0].mxu0
        %2129 = vdwg.mxu0
        %v2131 = vsel %vm1666, %v1775, 0
        %v2134 = vsel %vm1731, %v1776, 0
        %2136 = vmatprep.subr.bf16.mxu0 0
        %2137 = vmatpush1.bf16.msra.mxu0 %v2134
        %2138 = vmatprep.subr.bf16.mxu0 0
        %2139 = vmatpush1.bf16.msra.mxu0 0
        %2140 = vmatprep.subr.bf16.mxu0 0
        %2141 = vmatpush1.bf16.msra.mxu0 0
        %2142 = vmatprep.subr.bf16.mxu0 0
        %2143 = vmatpush1.bf16.msra.mxu0 0
        %2144 = vmatprep.subr.bf16.mxu0 0
        %2145 = vmatpush1.bf16.msra.mxu0 0
        %2146 = vmatprep.subr.bf16.mxu0 0
        %2147 = vmatpush1.bf16.msra.mxu0 0
        %2148 = vmatprep.subr.bf16.mxu0 0
        %2149 = vmatpush1.bf16.msra.mxu0 0
        %2150 = vmatprep.subr.bf16.mxu0 0
        %2151 = vmatpush1.bf16.msra.mxu0 0
        %2152 = vmatprep.subr.bf16.mxu0 0
        %2153 = vmatpush1.bf16.msra.mxu0 0
        %2154 = vmatprep.subr.bf16.mxu0 0
        %2155 = vmatpush1.bf16.msra.mxu0 0
        %2156 = vmatprep.subr.bf16.mxu0 0
        %2157 = vmatpush1.bf16.msra.mxu0 0
        %2158 = vmatprep.subr.bf16.mxu0 0
        %2159 = vmatpush1.bf16.msra.mxu0 0
        %2160 = vmatprep.subr.bf16.mxu0 0
        %2161 = vmatpush1.bf16.msra.mxu0 0
        %2162 = vmatprep.subr.bf16.mxu0 0
        %2163 = vmatpush1.bf16.msra.mxu0 0
        %2164 = vmatprep.subr.bf16.mxu0 0
        %2165 = vmatpush1.bf16.msra.mxu0 0
        %2166 = vmatprep.subr.bf16.mxu0 0
        %2167 = vmatpush1.bf16.msra.mxu0 0
        %2168 = vmatprep.mubr.bf16.mxu0 0
        %2169 = vmatmul.mubr.bf16.gmra.mrb[0].mxu0 %v2131
        %v2170 = vpop.f32.mrb[0].mxu0
        %v2171 = vadd.f32 %v2125, %v2170
        %v2172 = vpop.f32.mrb[0].mxu0
        %v2173 = vpop.f32.mrb[0].mxu0
        %v2174 = vpop.f32.mrb[0].mxu0
        %2175 = vdwg.mxu0
        %s2176 = scalar_lea.vmem %s1131, 32 [#allocation11]
        %v2177 = vld [vmem:[%s2176] sm:$0xf]
        %v2178 = vld [vmem:[%s2176 + $0x4] sm:$0xf]
        %v2179 = vld [vmem:[%s2176 + $0x8] sm:$0xf]
        %v2180 = vld [vmem:[%s2176 + $0xc] sm:$0xf]
        %s2181 = scalar_lea.vmem %s1158, 2 [#allocation14]
        %v2182 = vld [vmem:[%s2181] sm:$0x1]
        %v2184 = vlaneseq
        %v2185 = vshrl.u32 %v2184, 7
        %v2186 = vsub.s32 0, %v2185
        %v2187 = vrot.slane %v2182, %v2186
        %v2193 = vunpack.c.l.b16 %v2177
        %v2194 = vunpack.c.l.b16 %v2178
        %v2195 = vunpack.c.l.b16 %v2179
        %v2196 = vunpack.c.l.b16 %v2180
        %v2197 = vpack.c.b16 %v2194, %v2193
        %v2198 = vpack.c.b16 %v2196, %v2195
        %2201 = vmatprep.subr.bf16.mxu0 0
        %2202 = vmatpush1.bf16.msra.mxu0 %v2197
        %2203 = vmatprep.subr.bf16.mxu0 0
        %2204 = vmatpush1.bf16.msra.mxu0 %v2198
        %2205 = vmatprep.subr.bf16.mxu0 0
        %2206 = vmatpush1.bf16.msra.mxu0 0
        %2207 = vmatprep.subr.bf16.mxu0 0
        %2208 = vmatpush1.bf16.msra.mxu0 0
        %2209 = vmatprep.subr.bf16.mxu0 0
        %2210 = vmatpush1.bf16.msra.mxu0 0
        %2211 = vmatprep.subr.bf16.mxu0 0
        %2212 = vmatpush1.bf16.msra.mxu0 0
        %2213 = vmatprep.subr.bf16.mxu0 0
        %2214 = vmatpush1.bf16.msra.mxu0 0
        %2215 = vmatprep.subr.bf16.mxu0 0
        %2216 = vmatpush1.bf16.msra.mxu0 0
        %2217 = vmatprep.subr.bf16.mxu0 0
        %2218 = vmatpush1.bf16.msra.mxu0 0
        %2219 = vmatprep.subr.bf16.mxu0 0
        %2220 = vmatpush1.bf16.msra.mxu0 0
        %2221 = vmatprep.subr.bf16.mxu0 0
        %2222 = vmatpush1.bf16.msra.mxu0 0
        %2223 = vmatprep.subr.bf16.mxu0 0
        %2224 = vmatpush1.bf16.msra.mxu0 0
        %2225 = vmatprep.subr.bf16.mxu0 0
        %2226 = vmatpush1.bf16.msra.mxu0 0
        %2227 = vmatprep.subr.bf16.mxu0 0
        %2228 = vmatpush1.bf16.msra.mxu0 0
        %2229 = vmatprep.subr.bf16.mxu0 0
        %2230 = vmatpush1.bf16.msra.mxu0 0
        %2231 = vmatprep.subr.bf16.mxu0 0
        %2232 = vmatpush1.bf16.msra.mxu0 0
        %2233 = vmatprep.mubr.bf16.mxu0 0
        %2234 = vmatmul.mubr.bf16.gmra.mrb[0].mxu0 %v1496
        %v2235 = vpop.f32.mrb[0].mxu0
        %v2236 = vadd.f32 %v2187, %v2235
        %v2237 = vpop.f32.mrb[0].mxu0
        %v2238 = vpop.f32.mrb[0].mxu0
        %v2239 = vpop.f32.mrb[0].mxu0
        %2240 = vdwg.mxu0
        %s2241 = scalar_lea.vmem %s1140, 32 [#allocation12]
        %v2242 = vld [vmem:[%s2241] sm:$0xf]
        %v2243 = vld [vmem:[%s2241 + $0x4] sm:$0xf]
        %v2244 = vld [vmem:[%s2241 + $0x8] sm:$0xf]
        %v2245 = vld [vmem:[%s2241 + $0xc] sm:$0xf]
        %s2246 = scalar_lea.vmem %s1167, 2 [#allocation15]
        %v2247 = vld [vmem:[%s2246] sm:$0x1]
        %v2249 = vlaneseq
        %v2250 = vshrl.u32 %v2249, 7
        %v2251 = vsub.s32 0, %v2250
        %v2252 = vrot.slane %v2247, %v2251
        %v2258 = vunpack.c.l.b16 %v2242
        %v2259 = vunpack.c.l.b16 %v2243
        %v2260 = vunpack.c.l.b16 %v2244
        %v2261 = vunpack.c.l.b16 %v2245
        %v2262 = vpack.c.b16 %v2259, %v2258
        %v2263 = vpack.c.b16 %v2261, %v2260
        %2266 = vmatprep.subr.bf16.mxu0 0
        %2267 = vmatpush1.bf16.msra.mxu0 %v2262
        %2268 = vmatprep.subr.bf16.mxu0 0
        %2269 = vmatpush1.bf16.msra.mxu0 %v2263
        %2270 = vmatprep.subr.bf16.mxu0 0
        %2271 = vmatpush1.bf16.msra.mxu0 0
        %2272 = vmatprep.subr.bf16.mxu0 0
        %2273 = vmatpush1.bf16.msra.mxu0 0
        %2274 = vmatprep.subr.bf16.mxu0 0
        %2275 = vmatpush1.bf16.msra.mxu0 0
        %2276 = vmatprep.subr.bf16.mxu0 0
        %2277 = vmatpush1.bf16.msra.mxu0 0
        %2278 = vmatprep.subr.bf16.mxu0 0
        %2279 = vmatpush1.bf16.msra.mxu0 0
        %2280 = vmatprep.subr.bf16.mxu0 0
        %2281 = vmatpush1.bf16.msra.mxu0 0
        %2282 = vmatprep.subr.bf16.mxu0 0
        %2283 = vmatpush1.bf16.msra.mxu0 0
        %2284 = vmatprep.subr.bf16.mxu0 0
        %2285 = vmatpush1.bf16.msra.mxu0 0
        %2286 = vmatprep.subr.bf16.mxu0 0
        %2287 = vmatpush1.bf16.msra.mxu0 0
        %2288 = vmatprep.subr.bf16.mxu0 0
        %2289 = vmatpush1.bf16.msra.mxu0 0
        %2290 = vmatprep.subr.bf16.mxu0 0
        %2291 = vmatpush1.bf16.msra.mxu0 0
        %2292 = vmatprep.subr.bf16.mxu0 0
        %2293 = vmatpush1.bf16.msra.mxu0 0
        %2294 = vmatprep.subr.bf16.mxu0 0
        %2295 = vmatpush1.bf16.msra.mxu0 0
        %2296 = vmatprep.subr.bf16.mxu0 0
        %2297 = vmatpush1.bf16.msra.mxu0 0
        %2298 = vmatprep.mubr.bf16.mxu0 0
        %2299 = vmatmul.mubr.bf16.gmra.mrb[0].mxu0 %v1496
        %v2300 = vpop.f32.mrb[0].mxu0
        %v2301 = vadd.f32 %v2252, %v2300
        %v2302 = vpop.f32.mrb[0].mxu0
        %v2303 = vpop.f32.mrb[0].mxu0
        %v2304 = vpop.f32.mrb[0].mxu0
        %2305 = vdwg.mxu0
        %s2306 = scalar_lea.vmem %s1149, 32 [#allocation13]
        %v2307 = vld [vmem:[%s2306] sm:$0xf]
        %v2308 = vld [vmem:[%s2306 + $0x4] sm:$0xf]
        %v2309 = vld [vmem:[%s2306 + $0x8] sm:$0xf]
        %v2310 = vld [vmem:[%s2306 + $0xc] sm:$0xf]
        %s2311 = scalar_lea.vmem %s1176, 2 [#allocation16]
        %v2312 = vld [vmem:[%s2311] sm:$0x1]
        %v2314 = vlaneseq
        %v2315 = vshrl.u32 %v2314, 7
        %v2316 = vsub.s32 0, %v2315
        %v2317 = vrot.slane %v2312, %v2316
        %v2323 = vunpack.c.l.b16 %v2307
        %v2324 = vunpack.c.l.b16 %v2308
        %v2325 = vunpack.c.l.b16 %v2309
        %v2326 = vunpack.c.l.b16 %v2310
        %v2327 = vpack.c.b16 %v2324, %v2323
        %v2328 = vpack.c.b16 %v2326, %v2325
        %2331 = vmatprep.subr.bf16.mxu0 0
        %2332 = vmatpush1.bf16.msra.mxu0 %v2327
        %2333 = vmatprep.subr.bf16.mxu0 0
        %2334 = vmatpush1.bf16.msra.mxu0 %v2328
        %2335 = vmatprep.subr.bf16.mxu0 0
        %2336 = vmatpush1.bf16.msra.mxu0 0
        %2337 = vmatprep.subr.bf16.mxu0 0
        %2338 = vmatpush1.bf16.msra.mxu0 0
        %2339 = vmatprep.subr.bf16.mxu0 0
        %2340 = vmatpush1.bf16.msra.mxu0 0
        %2341 = vmatprep.subr.bf16.mxu0 0
        %2342 = vmatpush1.bf16.msra.mxu0 0
        %2343 = vmatprep.subr.bf16.mxu0 0
        %2344 = vmatpush1.bf16.msra.mxu0 0
        %2345 = vmatprep.subr.bf16.mxu0 0
        %2346 = vmatpush1.bf16.msra.mxu0 0
        %2347 = vmatprep.subr.bf16.mxu0 0
        %2348 = vmatpush1.bf16.msra.mxu0 0
        %2349 = vmatprep.subr.bf16.mxu0 0
        %2350 = vmatpush1.bf16.msra.mxu0 0
        %2351 = vmatprep.subr.bf16.mxu0 0
        %2352 = vmatpush1.bf16.msra.mxu0 0
        %2353 = vmatprep.subr.bf16.mxu0 0
        %2354 = vmatpush1.bf16.msra.mxu0 0
        %2355 = vmatprep.subr.bf16.mxu0 0
        %2356 = vmatpush1.bf16.msra.mxu0 0
        %2357 = vmatprep.subr.bf16.mxu0 0
        %2358 = vmatpush1.bf16.msra.mxu0 0
        %2359 = vmatprep.subr.bf16.mxu0 0
        %2360 = vmatpush1.bf16.msra.mxu0 0
        %2361 = vmatprep.subr.bf16.mxu0 0
        %2362 = vmatpush1.bf16.msra.mxu0 0
        %2363 = vmatprep.mubr.bf16.mxu0 0
        %2364 = vmatmul.mubr.bf16.gmra.mrb[0].mxu0 %v1496
        %v2365 = vpop.f32.mrb[0].mxu0
        %v2366 = vadd.f32 %v2317, %v2365
        %v2367 = vpop.f32.mrb[0].mxu0
        %v2368 = vpop.f32.mrb[0].mxu0
        %v2369 = vpop.f32.mrb[0].mxu0
        %2370 = vdwg.mxu0
        %v2371 = vpack.c.bf16 %v2236, %v2236
        %v2372 = vpack.c.bf16 %v2301, %v2301
        %v2374 = vsel %vm1666, %v2371, 0
        %v2377 = vsel %vm1666, %v2372, 0
        %2379 = vmatprep.subr.bf16.mxu0 0
        %2380 = vmatpush1.bf16.xpose.msra.mxu0 %v2377
        %2381 = vmatprep.subr.bf16.mxu0 0
        %2382 = vmatpush1.bf16.xpose.msra.mxu0 0
        %2383 = vmatprep.subr.bf16.mxu0 0
        %2384 = vmatpush1.bf16.xpose.msra.mxu0 0
        %2385 = vmatprep.subr.bf16.mxu0 0
        %2386 = vmatpush1.bf16.xpose.msra.mxu0 0
        %2387 = vmatprep.subr.bf16.mxu0 0
        %2388 = vmatpush1.bf16.xpose.msra.mxu0 0
        %2389 = vmatprep.subr.bf16.mxu0 0
        %2390 = vmatpush1.bf16.xpose.msra.mxu0 0
        %2391 = vmatprep.subr.bf16.mxu0 0
        %2392 = vmatpush1.bf16.xpose.msra.mxu0 0
        %2393 = vmatprep.subr.bf16.mxu0 0
        %2394 = vmatpush1.bf16.xpose.msra.mxu0 0
        %2395 = vmatprep.subr.bf16.mxu0 0
        %2396 = vmatpush1.bf16.xpose.msra.mxu0 0
        %2397 = vmatprep.subr.bf16.mxu0 0
        %2398 = vmatpush1.bf16.xpose.msra.mxu0 0
        %2399 = vmatprep.subr.bf16.mxu0 0
        %2400 = vmatpush1.bf16.xpose.msra.mxu0 0
        %2401 = vmatprep.subr.bf16.mxu0 0
        %2402 = vmatpush1.bf16.xpose.msra.mxu0 0
        %2403 = vmatprep.subr.bf16.mxu0 0
        %2404 = vmatpush1.bf16.xpose.msra.mxu0 0
        %2405 = vmatprep.subr.bf16.mxu0 0
        %2406 = vmatpush1.bf16.xpose.msra.mxu0 0
        %2407 = vmatprep.subr.bf16.mxu0 0
        %2408 = vmatpush1.bf16.xpose.msra.mxu0 0
        %2409 = vmatprep.subr.bf16.mxu0 0
        %2410 = vmatpush1.bf16.xpose.msra.mxu0 0
        %2411 = vmatprep.mubr.bf16.mxu0 0
        %2412 = vmatmul.mubr.bf16.gmra.mrb[0].mxu0 %v2374
        %v2413 = vpop.f32.mrb[0].mxu0
        %v2414 = vadd.f32 0.0, %v2413
        %v2415 = vpop.f32.mrb[0].mxu0
        %v2416 = vpop.f32.mrb[0].mxu0
        %v2417 = vpop.f32.mrb[0].mxu0
        %2418 = vdwg.mxu0
        %v2419 = vmul.f32 %v2414, 0.35355338
        %v2420 = vadd.f32 %v2419, %v1470
        %v2421 = vsel %vm1666, %v2420, -inf
        %2422 = vmax.xlane.f32.xlu0 %v2421
        %v2423 = vpop.xlane.xlu0 %2422
        %v2424 = vsub.f32 %v2420, %v2423
        %v2425 = vmul.f32 %v2424, 1.442695
        %v2426 = vpow.pop %v2425
        %v2427 = vsel %vm1666, %v2426, 0.0
        %2428 = vadd.xlane.f32.xlu0 %v2427
        %v2429 = vpop.xlane.xlu0 %2428
        %v2430 = vrcp.pop %v2429
        %v2431 = vmul.f32 %v2426, %v2430
        %v2432 = vpack.c.bf16 %v2431, %v2431
        %v2433 = vpack.c.bf16 %v2366, %v2366
        %v2435 = vsel %vm1666, %v2432, 0
        %v2438 = vsel %vm1731, %v2433, 0
        %2440 = vmatprep.subr.bf16.mxu0 0
        %2441 = vmatpush1.bf16.msra.mxu0 %v2438
        %2442 = vmatprep.subr.bf16.mxu0 0
        %2443 = vmatpush1.bf16.msra.mxu0 0
        %2444 = vmatprep.subr.bf16.mxu0 0
        %2445 = vmatpush1.bf16.msra.mxu0 0
        %2446 = vmatprep.subr.bf16.mxu0 0
        %2447 = vmatpush1.bf16.msra.mxu0 0
        %2448 = vmatprep.subr.bf16.mxu0 0
        %2449 = vmatpush1.bf16.msra.mxu0 0
        %2450 = vmatprep.subr.bf16.mxu0 0
        %2451 = vmatpush1.bf16.msra.mxu0 0
        %2452 = vmatprep.subr.bf16.mxu0 0
        %2453 = vmatpush1.bf16.msra.mxu0 0
        %2454 = vmatprep.subr.bf16.mxu0 0
        %2455 = vmatpush1.bf16.msra.mxu0 0
        %2456 = vmatprep.subr.bf16.mxu0 0
        %2457 = vmatpush1.bf16.msra.mxu0 0
        %2458 = vmatprep.subr.bf16.mxu0 0
        %2459 = vmatpush1.bf16.msra.mxu0 0
        %2460 = vmatprep.subr.bf16.mxu0 0
        %2461 = vmatpush1.bf16.msra.mxu0 0
        %2462 = vmatprep.subr.bf16.mxu0 0
        %2463 = vmatpush1.bf16.msra.mxu0 0
        %2464 = vmatprep.subr.bf16.mxu0 0
        %2465 = vmatpush1.bf16.msra.mxu0 0
        %2466 = vmatprep.subr.bf16.mxu0 0
        %2467 = vmatpush1.bf16.msra.mxu0 0
        %2468 = vmatprep.subr.bf16.mxu0 0
        %2469 = vmatpush1.bf16.msra.mxu0 0
        %2470 = vmatprep.subr.bf16.mxu0 0
        %2471 = vmatpush1.bf16.msra.mxu0 0
        %2472 = vmatprep.mubr.bf16.mxu0 0
        %2473 = vmatmul.mubr.bf16.gmra.mrb[0].mxu0 %v2435
        %v2474 = vpop.f32.mrb[0].mxu0
        %v2475 = vadd.f32 0.0, %v2474
        %v2476 = vpop.f32.mrb[0].mxu0
        %v2477 = vpop.f32.mrb[0].mxu0
        %v2478 = vpop.f32.mrb[0].mxu0
        %2479 = vdwg.mxu0
        %v2480 = vpack.c.bf16 %v2475, %v2475
        %s2481 = scalar_lea.vmem %s1185, 8 [#allocation17]
        %v2482 = vld [vmem:[%s2481] sm:$0xf]
        %v2484 = vsel %vm1666, %v2480, 0
        %v2487 = vsel %vm1731, %v2482, 0
        %2489 = vmatprep.subr.bf16.mxu0 0
        %2490 = vmatpush1.bf16.msra.mxu0 %v2487
        %2491 = vmatprep.subr.bf16.mxu0 0
        %2492 = vmatpush1.bf16.msra.mxu0 0
        %2493 = vmatprep.subr.bf16.mxu0 0
        %2494 = vmatpush1.bf16.msra.mxu0 0
        %2495 = vmatprep.subr.bf16.mxu0 0
        %2496 = vmatpush1.bf16.msra.mxu0 0
        %2497 = vmatprep.subr.bf16.mxu0 0
        %2498 = vmatpush1.bf16.msra.mxu0 0
        %2499 = vmatprep.subr.bf16.mxu0 0
        %2500 = vmatpush1.bf16.msra.mxu0 0
        %2501 = vmatprep.subr.bf16.mxu0 0
        %2502 = vmatpush1.bf16.msra.mxu0 0
        %2503 = vmatprep.subr.bf16.mxu0 0
        %2504 = vmatpush1.bf16.msra.mxu0 0
        %2505 = vmatprep.subr.bf16.mxu0 0
        %2506 = vmatpush1.bf16.msra.mxu0 0
        %2507 = vmatprep.subr.bf16.mxu0 0
        %2508 = vmatpush1.bf16.msra.mxu0 0
        %2509 = vmatprep.subr.bf16.mxu0 0
        %2510 = vmatpush1.bf16.msra.mxu0 0
        %2511 = vmatprep.subr.bf16.mxu0 0
        %2512 = vmatpush1.bf16.msra.mxu0 0
        %2513 = vmatprep.subr.bf16.mxu0 0
        %2514 = vmatpush1.bf16.msra.mxu0 0
        %2515 = vmatprep.subr.bf16.mxu0 0
        %2516 = vmatpush1.bf16.msra.mxu0 0
        %2517 = vmatprep.subr.bf16.mxu0 0
        %2518 = vmatpush1.bf16.msra.mxu0 0
        %2519 = vmatprep.subr.bf16.mxu0 0
        %2520 = vmatpush1.bf16.msra.mxu0 0
        %2521 = vmatprep.mubr.bf16.mxu0 0
        %2522 = vmatmul.mubr.bf16.gmra.mrb[0].mxu0 %v2484
        %v2523 = vpop.f32.mrb[0].mxu0
        %v2524 = vadd.f32 0.0, %v2523
        %v2525 = vpop.f32.mrb[0].mxu0
        %v2526 = vpop.f32.mrb[0].mxu0
        %v2527 = vpop.f32.mrb[0].mxu0
        %2528 = vdwg.mxu0
        %v2529 = vadd.f32 %v2171, %v2524
        %s2530 = scalar_lea.vmem %s1131, 48 [#allocation11]
        %v2531 = vld [vmem:[%s2530] sm:$0xf]
        %v2532 = vld [vmem:[%s2530 + $0x4] sm:$0xf]
        %v2533 = vld [vmem:[%s2530 + $0x8] sm:$0xf]
        %v2534 = vld [vmem:[%s2530 + $0xc] sm:$0xf]
        %s2535 = scalar_lea.vmem %s1158, 3 [#allocation14]
        %v2536 = vld [vmem:[%s2535] sm:$0x1]
        %v2538 = vlaneseq
        %v2539 = vshrl.u32 %v2538, 7
        %v2540 = vsub.s32 0, %v2539
        %v2541 = vrot.slane %v2536, %v2540
        %v2547 = vunpack.c.l.b16 %v2531
        %v2548 = vunpack.c.l.b16 %v2532
        %v2549 = vunpack.c.l.b16 %v2533
        %v2550 = vunpack.c.l.b16 %v2534
        %v2551 = vpack.c.b16 %v2548, %v2547
        %v2552 = vpack.c.b16 %v2550, %v2549
        %2555 = vmatprep.subr.bf16.mxu0 0
        %2556 = vmatpush1.bf16.msra.mxu0 %v2551
        %2557 = vmatprep.subr.bf16.mxu0 0
        %2558 = vmatpush1.bf16.msra.mxu0 %v2552
        %2559 = vmatprep.subr.bf16.mxu0 0
        %2560 = vmatpush1.bf16.msra.mxu0 0
        %2561 = vmatprep.subr.bf16.mxu0 0
        %2562 = vmatpush1.bf16.msra.mxu0 0
        %2563 = vmatprep.subr.bf16.mxu0 0
        %2564 = vmatpush1.bf16.msra.mxu0 0
        %2565 = vmatprep.subr.bf16.mxu0 0
        %2566 = vmatpush1.bf16.msra.mxu0 0
        %2567 = vmatprep.subr.bf16.mxu0 0
        %2568 = vmatpush1.bf16.msra.mxu0 0
        %2569 = vmatprep.subr.bf16.mxu0 0
        %2570 = vmatpush1.bf16.msra.mxu0 0
        %2571 = vmatprep.subr.bf16.mxu0 0
        %2572 = vmatpush1.bf16.msra.mxu0 0
        %2573 = vmatprep.subr.bf16.mxu0 0
        %2574 = vmatpush1.bf16.msra.mxu0 0
        %2575 = vmatprep.subr.bf16.mxu0 0
        %2576 = vmatpush1.bf16.msra.mxu0 0
        %2577 = vmatprep.subr.bf16.mxu0 0
        %2578 = vmatpush1.bf16.msra.mxu0 0
        %2579 = vmatprep.subr.bf16.mxu0 0
        %2580 = vmatpush1.bf16.msra.mxu0 0
        %2581 = vmatprep.subr.bf16.mxu0 0
        %2582 = vmatpush1.bf16.msra.mxu0 0
        %2583 = vmatprep.subr.bf16.mxu0 0
        %2584 = vmatpush1.bf16.msra.mxu0 0
        %2585 = vmatprep.subr.bf16.mxu0 0
        %2586 = vmatpush1.bf16.msra.mxu0 0
        %2587 = vmatprep.mubr.bf16.mxu0 0
        %2588 = vmatmul.mubr.bf16.gmra.mrb[0].mxu0 %v1496
        %v2589 = vpop.f32.mrb[0].mxu0
        %v2590 = vadd.f32 %v2541, %v2589
        %v2591 = vpop.f32.mrb[0].mxu0
        %v2592 = vpop.f32.mrb[0].mxu0
        %v2593 = vpop.f32.mrb[0].mxu0
        %2594 = vdwg.mxu0
        %s2595 = scalar_lea.vmem %s1140, 48 [#allocation12]
        %v2596 = vld [vmem:[%s2595] sm:$0xf]
        %v2597 = vld [vmem:[%s2595 + $0x4] sm:$0xf]
        %v2598 = vld [vmem:[%s2595 + $0x8] sm:$0xf]
        %v2599 = vld [vmem:[%s2595 + $0xc] sm:$0xf]
        %s2600 = scalar_lea.vmem %s1167, 3 [#allocation15]
        %v2601 = vld [vmem:[%s2600] sm:$0x1]
        %v2603 = vlaneseq
        %v2604 = vshrl.u32 %v2603, 7
        %v2605 = vsub.s32 0, %v2604
        %v2606 = vrot.slane %v2601, %v2605
        %v2612 = vunpack.c.l.b16 %v2596
        %v2613 = vunpack.c.l.b16 %v2597
        %v2614 = vunpack.c.l.b16 %v2598
        %v2615 = vunpack.c.l.b16 %v2599
        %v2616 = vpack.c.b16 %v2613, %v2612
        %v2617 = vpack.c.b16 %v2615, %v2614
        %2620 = vmatprep.subr.bf16.mxu0 0
        %2621 = vmatpush1.bf16.msra.mxu0 %v2616
        %2622 = vmatprep.subr.bf16.mxu0 0
        %2623 = vmatpush1.bf16.msra.mxu0 %v2617
        %2624 = vmatprep.subr.bf16.mxu0 0
        %2625 = vmatpush1.bf16.msra.mxu0 0
        %2626 = vmatprep.subr.bf16.mxu0 0
        %2627 = vmatpush1.bf16.msra.mxu0 0
        %2628 = vmatprep.subr.bf16.mxu0 0
        %2629 = vmatpush1.bf16.msra.mxu0 0
        %2630 = vmatprep.subr.bf16.mxu0 0
        %2631 = vmatpush1.bf16.msra.mxu0 0
        %2632 = vmatprep.subr.bf16.mxu0 0
        %2633 = vmatpush1.bf16.msra.mxu0 0
        %2634 = vmatprep.subr.bf16.mxu0 0
        %2635 = vmatpush1.bf16.msra.mxu0 0
        %2636 = vmatprep.subr.bf16.mxu0 0
        %2637 = vmatpush1.bf16.msra.mxu0 0
        %2638 = vmatprep.subr.bf16.mxu0 0
        %2639 = vmatpush1.bf16.msra.mxu0 0
        %2640 = vmatprep.subr.bf16.mxu0 0
        %2641 = vmatpush1.bf16.msra.mxu0 0
        %2642 = vmatprep.subr.bf16.mxu0 0
        %2643 = vmatpush1.bf16.msra.mxu0 0
        %2644 = vmatprep.subr.bf16.mxu0 0
        %2645 = vmatpush1.bf16.msra.mxu0 0
        %2646 = vmatprep.subr.bf16.mxu0 0
        %2647 = vmatpush1.bf16.msra.mxu0 0
        %2648 = vmatprep.subr.bf16.mxu0 0
        %2649 = vmatpush1.bf16.msra.mxu0 0
        %2650 = vmatprep.subr.bf16.mxu0 0
        %2651 = vmatpush1.bf16.msra.mxu0 0
        %2652 = vmatprep.mubr.bf16.mxu0 0
        %2653 = vmatmul.mubr.bf16.gmra.mrb[0].mxu0 %v1496
        %v2654 = vpop.f32.mrb[0].mxu0
        %v2655 = vadd.f32 %v2606, %v2654
        %v2656 = vpop.f32.mrb[0].mxu0
        %v2657 = vpop.f32.mrb[0].mxu0
        %v2658 = vpop.f32.mrb[0].mxu0
        %2659 = vdwg.mxu0
        %s2660 = scalar_lea.vmem %s1149, 48 [#allocation13]
        %v2661 = vld [vmem:[%s2660] sm:$0xf]
        %v2662 = vld [vmem:[%s2660 + $0x4] sm:$0xf]
        %v2663 = vld [vmem:[%s2660 + $0x8] sm:$0xf]
        %v2664 = vld [vmem:[%s2660 + $0xc] sm:$0xf]
        %s2665 = scalar_lea.vmem %s1176, 3 [#allocation16]
        %v2666 = vld [vmem:[%s2665] sm:$0x1]
        %v2668 = vlaneseq
        %v2669 = vshrl.u32 %v2668, 7
        %v2670 = vsub.s32 0, %v2669
        %v2671 = vrot.slane %v2666, %v2670
        %v2677 = vunpack.c.l.b16 %v2661
        %v2678 = vunpack.c.l.b16 %v2662
        %v2679 = vunpack.c.l.b16 %v2663
        %v2680 = vunpack.c.l.b16 %v2664
        %v2681 = vpack.c.b16 %v2678, %v2677
        %v2682 = vpack.c.b16 %v2680, %v2679
        %2685 = vmatprep.subr.bf16.mxu0 0
        %2686 = vmatpush1.bf16.msra.mxu0 %v2681
        %2687 = vmatprep.subr.bf16.mxu0 0
        %2688 = vmatpush1.bf16.msra.mxu0 %v2682
        %2689 = vmatprep.subr.bf16.mxu0 0
        %2690 = vmatpush1.bf16.msra.mxu0 0
        %2691 = vmatprep.subr.bf16.mxu0 0
        %2692 = vmatpush1.bf16.msra.mxu0 0
        %2693 = vmatprep.subr.bf16.mxu0 0
        %2694 = vmatpush1.bf16.msra.mxu0 0
        %2695 = vmatprep.subr.bf16.mxu0 0
        %2696 = vmatpush1.bf16.msra.mxu0 0
        %2697 = vmatprep.subr.bf16.mxu0 0
        %2698 = vmatpush1.bf16.msra.mxu0 0
        %2699 = vmatprep.subr.bf16.mxu0 0
        %2700 = vmatpush1.bf16.msra.mxu0 0
        %2701 = vmatprep.subr.bf16.mxu0 0
        %2702 = vmatpush1.bf16.msra.mxu0 0
        %2703 = vmatprep.subr.bf16.mxu0 0
        %2704 = vmatpush1.bf16.msra.mxu0 0
        %2705 = vmatprep.subr.bf16.mxu0 0
        %2706 = vmatpush1.bf16.msra.mxu0 0
        %2707 = vmatprep.subr.bf16.mxu0 0
        %2708 = vmatpush1.bf16.msra.mxu0 0
        %2709 = vmatprep.subr.bf16.mxu0 0
        %2710 = vmatpush1.bf16.msra.mxu0 0
        %2711 = vmatprep.subr.bf16.mxu0 0
        %2712 = vmatpush1.bf16.msra.mxu0 0
        %2713 = vmatprep.subr.bf16.mxu0 0
        %2714 = vmatpush1.bf16.msra.mxu0 0
        %2715 = vmatprep.subr.bf16.mxu0 0
        %2716 = vmatpush1.bf16.msra.mxu0 0
        %2717 = vmatprep.mubr.bf16.mxu0 0
        %2718 = vmatmul.mubr.bf16.gmra.mrb[0].mxu0 %v1496
        %v2719 = vpop.f32.mrb[0].mxu0
        %v2720 = vadd.f32 %v2671, %v2719
        %v2721 = vpop.f32.mrb[0].mxu0
        %v2722 = vpop.f32.mrb[0].mxu0
        %v2723 = vpop.f32.mrb[0].mxu0
        %2724 = vdwg.mxu0
        %v2725 = vpack.c.bf16 %v2590, %v2590
        %v2726 = vpack.c.bf16 %v2655, %v2655
        %v2728 = vsel %vm1666, %v2725, 0
        %v2731 = vsel %vm1666, %v2726, 0
        %2733 = vmatprep.subr.bf16.mxu0 0
        %2734 = vmatpush1.bf16.xpose.msra.mxu0 %v2731
        %2735 = vmatprep.subr.bf16.mxu0 0
        %2736 = vmatpush1.bf16.xpose.msra.mxu0 0
        %2737 = vmatprep.subr.bf16.mxu0 0
        %2738 = vmatpush1.bf16.xpose.msra.mxu0 0
        %2739 = vmatprep.subr.bf16.mxu0 0
        %2740 = vmatpush1.bf16.xpose.msra.mxu0 0
        %2741 = vmatprep.subr.bf16.mxu0 0
        %2742 = vmatpush1.bf16.xpose.msra.mxu0 0
        %2743 = vmatprep.subr.bf16.mxu0 0
        %2744 = vmatpush1.bf16.xpose.msra.mxu0 0
        %2745 = vmatprep.subr.bf16.mxu0 0
        %2746 = vmatpush1.bf16.xpose.msra.mxu0 0
        %2747 = vmatprep.subr.bf16.mxu0 0
        %2748 = vmatpush1.bf16.xpose.msra.mxu0 0
        %2749 = vmatprep.subr.bf16.mxu0 0
        %2750 = vmatpush1.bf16.xpose.msra.mxu0 0
        %2751 = vmatprep.subr.bf16.mxu0 0
        %2752 = vmatpush1.bf16.xpose.msra.mxu0 0
        %2753 = vmatprep.subr.bf16.mxu0 0
        %2754 = vmatpush1.bf16.xpose.msra.mxu0 0
        %2755 = vmatprep.subr.bf16.mxu0 0
        %2756 = vmatpush1.bf16.xpose.msra.mxu0 0
        %2757 = vmatprep.subr.bf16.mxu0 0
        %2758 = vmatpush1.bf16.xpose.msra.mxu0 0
        %2759 = vmatprep.subr.bf16.mxu0 0
        %2760 = vmatpush1.bf16.xpose.msra.mxu0 0
        %2761 = vmatprep.subr.bf16.mxu0 0
        %2762 = vmatpush1.bf16.xpose.msra.mxu0 0
        %2763 = vmatprep.subr.bf16.mxu0 0
        %2764 = vmatpush1.bf16.xpose.msra.mxu0 0
        %2765 = vmatprep.mubr.bf16.mxu0 0
        %2766 = vmatmul.mubr.bf16.gmra.mrb[0].mxu0 %v2728
        %v2767 = vpop.f32.mrb[0].mxu0
        %v2768 = vadd.f32 0.0, %v2767
        %v2769 = vpop.f32.mrb[0].mxu0
        %v2770 = vpop.f32.mrb[0].mxu0
        %v2771 = vpop.f32.mrb[0].mxu0
        %2772 = vdwg.mxu0
        %v2773 = vmul.f32 %v2768, 0.35355338
        %v2774 = vadd.f32 %v2773, %v1470
        %v2775 = vsel %vm1666, %v2774, -inf
        %2776 = vmax.xlane.f32.xlu0 %v2775
        %v2777 = vpop.xlane.xlu0 %2776
        %v2778 = vsub.f32 %v2774, %v2777
        %v2779 = vmul.f32 %v2778, 1.442695
        %v2780 = vpow.pop %v2779
        %v2781 = vsel %vm1666, %v2780, 0.0
        %2782 = vadd.xlane.f32.xlu0 %v2781
        %v2783 = vpop.xlane.xlu0 %2782
        %v2784 = vrcp.pop %v2783
        %v2785 = vmul.f32 %v2780, %v2784
        %v2786 = vpack.c.bf16 %v2785, %v2785
        %v2787 = vpack.c.bf16 %v2720, %v2720
        %v2789 = vsel %vm1666, %v2786, 0
        %v2792 = vsel %vm1731, %v2787, 0
        %2794 = vmatprep.subr.bf16.mxu0 0
        %2795 = vmatpush1.bf16.msra.mxu0 %v2792
        %2796 = vmatprep.subr.bf16.mxu0 0
        %2797 = vmatpush1.bf16.msra.mxu0 0
        %2798 = vmatprep.subr.bf16.mxu0 0
        %2799 = vmatpush1.bf16.msra.mxu0 0
        %2800 = vmatprep.subr.bf16.mxu0 0
        %2801 = vmatpush1.bf16.msra.mxu0 0
        %2802 = vmatprep.subr.bf16.mxu0 0
        %2803 = vmatpush1.bf16.msra.mxu0 0
        %2804 = vmatprep.subr.bf16.mxu0 0
        %2805 = vmatpush1.bf16.msra.mxu0 0
        %2806 = vmatprep.subr.bf16.mxu0 0
        %2807 = vmatpush1.bf16.msra.mxu0 0
        %2808 = vmatprep.subr.bf16.mxu0 0
        %2809 = vmatpush1.bf16.msra.mxu0 0
        %2810 = vmatprep.subr.bf16.mxu0 0
        %2811 = vmatpush1.bf16.msra.mxu0 0
        %2812 = vmatprep.subr.bf16.mxu0 0
        %2813 = vmatpush1.bf16.msra.mxu0 0
        %2814 = vmatprep.subr.bf16.mxu0 0
        %2815 = vmatpush1.bf16.msra.mxu0 0
        %2816 = vmatprep.subr.bf16.mxu0 0
        %2817 = vmatpush1.bf16.msra.mxu0 0
        %2818 = vmatprep.subr.bf16.mxu0 0
        %2819 = vmatpush1.bf16.msra.mxu0 0
        %2820 = vmatprep.subr.bf16.mxu0 0
        %2821 = vmatpush1.bf16.msra.mxu0 0
        %2822 = vmatprep.subr.bf16.mxu0 0
        %2823 = vmatpush1.bf16.msra.mxu0 0
        %2824 = vmatprep.subr.bf16.mxu0 0
        %2825 = vmatpush1.bf16.msra.mxu0 0
        %2826 = vmatprep.mubr.bf16.mxu0 0
        %2827 = vmatmul.mubr.bf16.gmra.mrb[0].mxu0 %v2789
        %v2828 = vpop.f32.mrb[0].mxu0
        %v2829 = vadd.f32 0.0, %v2828
        %v2830 = vpop.f32.mrb[0].mxu0
        %v2831 = vpop.f32.mrb[0].mxu0
        %v2832 = vpop.f32.mrb[0].mxu0
        %2833 = vdwg.mxu0
        %v2834 = vpack.c.bf16 %v2829, %v2829
        %s2835 = scalar_lea.vmem %s1185, 12 [#allocation17]
        %v2836 = vld [vmem:[%s2835] sm:$0xf]
        %v2838 = vsel %vm1666, %v2834, 0
        %v2841 = vsel %vm1731, %v2836, 0
        %2843 = vmatprep.subr.bf16.mxu0 0
        %2844 = vmatpush1.bf16.msra.mxu0 %v2841
        %2845 = vmatprep.subr.bf16.mxu0 0
        %2846 = vmatpush1.bf16.msra.mxu0 0
        %2847 = vmatprep.subr.bf16.mxu0 0
        %2848 = vmatpush1.bf16.msra.mxu0 0
        %2849 = vmatprep.subr.bf16.mxu0 0
        %2850 = vmatpush1.bf16.msra.mxu0 0
        %2851 = vmatprep.subr.bf16.mxu0 0
        %2852 = vmatpush1.bf16.msra.mxu0 0
        %2853 = vmatprep.subr.bf16.mxu0 0
        %2854 = vmatpush1.bf16.msra.mxu0 0
        %2855 = vmatprep.subr.bf16.mxu0 0
        %2856 = vmatpush1.bf16.msra.mxu0 0
        %2857 = vmatprep.subr.bf16.mxu0 0
        %2858 = vmatpush1.bf16.msra.mxu0 0
        %2859 = vmatprep.subr.bf16.mxu0 0
        %2860 = vmatpush1.bf16.msra.mxu0 0
        %2861 = vmatprep.subr.bf16.mxu0 0
        %2862 = vmatpush1.bf16.msra.mxu0 0
        %2863 = vmatprep.subr.bf16.mxu0 0
        %2864 = vmatpush1.bf16.msra.mxu0 0
        %2865 = vmatprep.subr.bf16.mxu0 0
        %2866 = vmatpush1.bf16.msra.mxu0 0
        %2867 = vmatprep.subr.bf16.mxu0 0
        %2868 = vmatpush1.bf16.msra.mxu0 0
        %2869 = vmatprep.subr.bf16.mxu0 0
        %2870 = vmatpush1.bf16.msra.mxu0 0
        %2871 = vmatprep.subr.bf16.mxu0 0
        %2872 = vmatpush1.bf16.msra.mxu0 0
        %2873 = vmatprep.subr.bf16.mxu0 0
        %2874 = vmatpush1.bf16.msra.mxu0 0
        %2875 = vmatprep.mubr.bf16.mxu0 0
        %2876 = vmatmul.mubr.bf16.gmra.mrb[0].mxu0 %v2838
        %v2877 = vpop.f32.mrb[0].mxu0
        %v2878 = vadd.f32 0.0, %v2877
        %v2879 = vpop.f32.mrb[0].mxu0
        %v2880 = vpop.f32.mrb[0].mxu0
        %v2881 = vpop.f32.mrb[0].mxu0
        %2882 = vdwg.mxu0
        %v2883 = vadd.f32 %v2529, %v2878
        %v2884 = vld [vmem:[%s1193] sm:$0x1]
        %v2886 = vlaneseq
        %v2887 = vshrl.u32 %v2886, 7
        %v2888 = vsub.s32 0, %v2887
        %v2889 = vrot.slane %v2884, %v2888
        %v2891 = vadd.f32 %v2883, %v2889
        %v2892 = vadd.f32 %v1463, %v2891
        %v2893 = vld [vmem:[%s1201] sm:$0x1]
        %v2894 = vld [vmem:[%s1209] sm:$0x1]
        %v2895 = vsel %vm1494, %v2892, 0.0
        %2896 = vadd.xlane.f32.xlu0 %v2895
        %v2897 = vpop.xlane.xlu0 %2896
        %v2898 = vrcp.pop 32.0
        %v2899 = vmul.f32 %v2897, %v2898
        %v2900 = vsub.f32 %v2892, %v2899
        %v2901 = vmul.f32 %v2900, %v2900
        %v2902 = vsel %vm1494, %v2901, 0.0
        %2903 = vadd.xlane.f32.xlu0 %v2902
        %v2904 = vpop.xlane.xlu0 %2903
        %v2905 = vmul.f32 %v2904, %v2898
        %v2906 = vadd.f32 %v2905, 1e-05
        %v2907 = vrsqrt.pop %v2906
        %v2908 = vmul.f32 %v2900, %v2907
        %v2910 = vlaneseq
        %v2911 = vshrl.u32 %v2910, 7
        %v2912 = vsub.s32 0, %v2911
        %v2913 = vrot.slane %v2893, %v2912
        %v2915 = vmul.f32 %v2908, %v2913
        %v2917 = vlaneseq
        %v2918 = vshrl.u32 %v2917, 7
        %v2919 = vsub.s32 0, %v2918
        %v2920 = vrot.slane %v2894, %v2919
        %v2922 = vadd.f32 %v2915, %v2920
        %v2923 = vld [vmem:[%s1122] sm:$0x1]
        %v2925 = vlaneseq
        %v2926 = vshrl.u32 %v2925, 7
        %v2927 = vsub.s32 0, %v2926
        %v2928 = vrot.slane %v2923, %v2927
        %v2930 = vadd.f32 %v2922, %v2928
        %v2931 = vld [vmem:[%s1217] sm:$0x1]
        %v2932 = vld [vmem:[%s1225] sm:$0x1]
        %v2933 = vsel %vm1494, %v2930, 0.0
        %2934 = vadd.xlane.f32.xlu0 %v2933
        %v2935 = vpop.xlane.xlu0 %2934
        %v2936 = vmul.f32 %v2935, %v2898
        %v2937 = vsub.f32 %v2930, %v2936
        %v2938 = vmul.f32 %v2937, %v2937
        %v2939 = vsel %vm1494, %v2938, 0.0
        %2940 = vadd.xlane.f32.xlu0 %v2939
        %v2941 = vpop.xlane.xlu0 %2940
        %v2942 = vmul.f32 %v2941, %v2898
        %v2943 = vadd.f32 %v2942, 1e-05
        %v2944 = vrsqrt.pop %v2943
        %v2945 = vmul.f32 %v2937, %v2944
        %v2947 = vlaneseq
        %v2948 = vshrl.u32 %v2947, 7
        %v2949 = vsub.s32 0, %v2948
        %v2950 = vrot.slane %v2931, %v2949
        %v2952 = vmul.f32 %v2945, %v2950
        %v2954 = vlaneseq
        %v2955 = vshrl.u32 %v2954, 7
        %v2956 = vsub.s32 0, %v2955
        %v2957 = vrot.slane %v2932, %v2956
        %v2959 = vadd.f32 %v2952, %v2957
        %v2960 = vpack.c.bf16 %v2959, %v2959
        %v2961 = vld [vmem:[%s1234] sm:$0xf]
        %v2962 = vld [vmem:[%s1234 + $0x4] sm:$0xf]
        %v2963 = vld [vmem:[%s1234 + $0x8] sm:$0xf]
        %v2964 = vld [vmem:[%s1234 + $0xc] sm:$0xf]
        %v2965 = vld [vmem:[%s1242] sm:$0x1]
        %v2967 = vlaneseq
        %v2968 = vshrl.u32 %v2967, 7
        %v2969 = vsub.s32 0, %v2968
        %v2970 = vrot.slane %v2965, %v2969
        %v2976 = vunpack.c.l.b16 %v2961
        %v2977 = vunpack.c.l.b16 %v2962
        %v2978 = vunpack.c.l.b16 %v2963
        %v2979 = vunpack.c.l.b16 %v2964
        %v2980 = vpack.c.b16 %v2977, %v2976
        %v2981 = vpack.c.b16 %v2979, %v2978
        %v2985 = vsel %vm1494, %v2960, 0
        %2987 = vmatprep.subr.bf16.mxu0 0
        %2988 = vmatpush1.bf16.msra.mxu0 %v2980
        %2989 = vmatprep.subr.bf16.mxu0 0
        %2990 = vmatpush1.bf16.msra.mxu0 %v2981
        %2991 = vmatprep.subr.bf16.mxu0 0
        %2992 = vmatpush1.bf16.msra.mxu0 0
        %2993 = vmatprep.subr.bf16.mxu0 0
        %2994 = vmatpush1.bf16.msra.mxu0 0
        %2995 = vmatprep.subr.bf16.mxu0 0
        %2996 = vmatpush1.bf16.msra.mxu0 0
        %2997 = vmatprep.subr.bf16.mxu0 0
        %2998 = vmatpush1.bf16.msra.mxu0 0
        %2999 = vmatprep.subr.bf16.mxu0 0
        %3000 = vmatpush1.bf16.msra.mxu0 0
        %3001 = vmatprep.subr.bf16.mxu0 0
        %3002 = vmatpush1.bf16.msra.mxu0 0
        %3003 = vmatprep.subr.bf16.mxu0 0
        %3004 = vmatpush1.bf16.msra.mxu0 0
        %3005 = vmatprep.subr.bf16.mxu0 0
        %3006 = vmatpush1.bf16.msra.mxu0 0
        %3007 = vmatprep.subr.bf16.mxu0 0
        %3008 = vmatpush1.bf16.msra.mxu0 0
        %3009 = vmatprep.subr.bf16.mxu0 0
        %3010 = vmatpush1.bf16.msra.mxu0 0
        %3011 = vmatprep.subr.bf16.mxu0 0
        %3012 = vmatpush1.bf16.msra.mxu0 0
        %3013 = vmatprep.subr.bf16.mxu0 0
        %3014 = vmatpush1.bf16.msra.mxu0 0
        %3015 = vmatprep.subr.bf16.mxu0 0
        %3016 = vmatpush1.bf16.msra.mxu0 0
        %3017 = vmatprep.subr.bf16.mxu0 0
        %3018 = vmatpush1.bf16.msra.mxu0 0
        %3019 = vmatprep.mubr.bf16.mxu0 0
        %3020 = vmatmul.mubr.bf16.gmra.mrb[0].mxu0 %v2985
        %v3021 = vpop.f32.mrb[0].mxu0
        %v3022 = vadd.f32 %v2970, %v3021
        %v3023 = vpop.f32.mrb[0].mxu0
        %v3024 = vpop.f32.mrb[0].mxu0
        %v3025 = vpop.f32.mrb[0].mxu0
        %3026 = vdwg.mxu0
        %v3027 = vmax.f32 %v3022, 0.0
        %v3028 = vpack.c.bf16 %v3027, %v3027
        %v3029 = vld [vmem:[%s1251] sm:$0xf]
        %v3030 = vld [vmem:[%s1251 + $0x4] sm:$0xf]
        %v3031 = vld [vmem:[%s1251 + $0x8] sm:$0xf]
        %v3032 = vld [vmem:[%s1251 + $0xc] sm:$0xf]
        %v3033 = vld [vmem:[%s1251 + $0x10] sm:$0xf]
        %v3034 = vld [vmem:[%s1251 + $0x14] sm:$0xf]
        %v3035 = vld [vmem:[%s1251 + $0x18] sm:$0xf]
        %v3036 = vld [vmem:[%s1251 + $0x1c] sm:$0xf]
        %v3037 = vld [vmem:[%s1259] sm:$0x1]
        %v3039 = vlaneseq
        %v3040 = vshrl.u32 %v3039, 7
        %v3041 = vsub.s32 0, %v3040
        %v3042 = vrot.slane %v3037, %v3041
        %v3052 = vunpack.c.l.b16 %v3029
        %v3053 = vunpack.c.l.b16 %v3030
        %v3054 = vunpack.c.l.b16 %v3031
        %v3055 = vunpack.c.l.b16 %v3032
        %v3056 = vunpack.c.l.b16 %v3033
        %v3057 = vunpack.c.l.b16 %v3034
        %v3058 = vunpack.c.l.b16 %v3035
        %v3059 = vunpack.c.l.b16 %v3036
        %v3060 = vpack.c.b16 %v3053, %v3052
        %v3061 = vpack.c.b16 %v3055, %v3054
        %v3062 = vpack.c.b16 %v3057, %v3056
        %v3063 = vpack.c.b16 %v3059, %v3058
        %vm3068 = vcmask 523264
        %v3070 = vsel %vm3068, %v3028, 0
        %3072 = vmatprep.subr.bf16.mxu0 0
        %3073 = vmatpush1.bf16.msra.mxu0 %v3060
        %3074 = vmatprep.subr.bf16.mxu0 0
        %3075 = vmatpush1.bf16.msra.mxu0 %v3061
        %3076 = vmatprep.subr.bf16.mxu0 0
        %3077 = vmatpush1.bf16.msra.mxu0 %v3062
        %3078 = vmatprep.subr.bf16.mxu0 0
        %3079 = vmatpush1.bf16.msra.mxu0 %v3063
        %3080 = vmatprep.subr.bf16.mxu0 0
        %3081 = vmatpush1.bf16.msra.mxu0 0
        %3082 = vmatprep.subr.bf16.mxu0 0
        %3083 = vmatpush1.bf16.msra.mxu0 0
        %3084 = vmatprep.subr.bf16.mxu0 0
        %3085 = vmatpush1.bf16.msra.mxu0 0
        %3086 = vmatprep.subr.bf16.mxu0 0
        %3087 = vmatpush1.bf16.msra.mxu0 0
        %3088 = vmatprep.subr.bf16.mxu0 0
        %3089 = vmatpush1.bf16.msra.mxu0 0
        %3090 = vmatprep.subr.bf16.mxu0 0
        %3091 = vmatpush1.bf16.msra.mxu0 0
        %3092 = vmatprep.subr.bf16.mxu0 0
        %3093 = vmatpush1.bf16.msra.mxu0 0
        %3094 = vmatprep.subr.bf16.mxu0 0
        %3095 = vmatpush1.bf16.msra.mxu0 0
        %3096 = vmatprep.subr.bf16.mxu0 0
        %3097 = vmatpush1.bf16.msra.mxu0 0
        %3098 = vmatprep.subr.bf16.mxu0 0
        %3099 = vmatpush1.bf16.msra.mxu0 0
        %3100 = vmatprep.subr.bf16.mxu0 0
        %3101 = vmatpush1.bf16.msra.mxu0 0
        %3102 = vmatprep.subr.bf16.mxu0 0
        %3103 = vmatpush1.bf16.msra.mxu0 0
        %3104 = vmatprep.mubr.bf16.mxu0 0
        %3105 = vmatmul.mubr.bf16.gmra.mrb[0].mxu0 %v3070
        %v3106 = vpop.f32.mrb[0].mxu0
        %v3107 = vadd.f32 %v3042, %v3106
        %v3108 = vpop.f32.mrb[0].mxu0
        %v3109 = vpop.f32.mrb[0].mxu0
        %v3110 = vpop.f32.mrb[0].mxu0
        %3111 = vdwg.mxu0
        %v3112 = vadd.f32 %v2959, %v3107
        %v3113 = vld [vmem:[%s1267] sm:$0x1]
        %v3114 = vld [vmem:[%s1275] sm:$0x1]
        %v3115 = vsel %vm1494, %v3112, 0.0
        %3116 = vadd.xlane.f32.xlu0 %v3115
        %v3117 = vpop.xlane.xlu0 %3116
        %v3118 = vmul.f32 %v3117, %v2898
        %v3119 = vsub.f32 %v3112, %v3118
        %v3120 = vmul.f32 %v3119, %v3119
        %v3121 = vsel %vm1494, %v3120, 0.0
        %3122 = vadd.xlane.f32.xlu0 %v3121
        %v3123 = vpop.xlane.xlu0 %3122
        %v3124 = vmul.f32 %v3123, %v2898
        %v3125 = vadd.f32 %v3124, 1e-05
        %v3126 = vrsqrt.pop %v3125
        %v3127 = vmul.f32 %v3119, %v3126
        %v3129 = vlaneseq
        %v3130 = vshrl.u32 %v3129, 7
        %v3131 = vsub.s32 0, %v3130
        %v3132 = vrot.slane %v3113, %v3131
        %v3134 = vmul.f32 %v3127, %v3132
        %v3136 = vlaneseq
        %v3137 = vshrl.u32 %v3136, 7
        %v3138 = vsub.s32 0, %v3137
        %v3139 = vrot.slane %v3114, %v3138
        %v3141 = vadd.f32 %v3134, %v3139
        %3142 = vst.msk [vmem:[%s1422] sm:$0xff] %vm1494, %v3141
        %s3143 = sand.u32 %s647, 1
        %s3144 = scalar_lea.sflag [#allocation4], %s3143
        %s3145 = sand.u32 %s647, 1
        %s3146 = smul.addr %s3145, 8
        %s3147 = scalar_lea.vmem [#allocation29], %s3146
        // Predicated region
        $region209: #{output_interface_forward_training.4} parent=111 // pred_check
          %p3148 = pneg %p657
        $region210: #{output_interface_forward_training.4} parent=111 // pred_check_branch
          %3150 = sbr.rel (%p3148) target = $region212
        $region211: #{output_interface_forward_training.4} parent=111 // pred_region
          %s3152 = ssub.s32 128, 128
          %3153 = vsyncadd %s3144, %s3152
          %s3154 = smul.addr %s46, 128
          %s3155 = scalar_lea.hbm %s23, %s3154
          %s3157 = sshll.u32 %s3147, 4
          %s3158 = int_to_ptr.vmem [resolvable:$true] %s3157
          %3160 = dma.vmem_to_hbm [thread:$0]  %s3158, 128, %s3155, %s3144
        $region212: #{output_interface_forward_training.4} parent=111 // pred_fallthru
          _
      $region112: #{output_interface_forward_training.4} parent=5 // pred_fallthru
        _
      %p3161 = scmp.le.s32.totalorder 2, %s37
      // Predicated region
      $region213: #{output_interface_forward_training.4} parent=5 // pred_check
        %p3162 = pneg %p3161
      $region214: #{output_interface_forward_training.4} parent=5 // pred_check_branch
        %3164 = sbr.rel (%p3162) target = $region216
      $region215: #{output_interface_forward_training.4} parent=5 // pred_region
        %s3165 = ssub.s32 %s37, 2
        // Predicated region
        $region217: #{output_interface_forward_training.4} parent=215 // pred_check
          %p3166 = pneg %p663
        $region218: #{output_interface_forward_training.4} parent=215 // pred_check_branch
          %3168 = sbr.rel (%p3166) target = $region220
        $region219: #{output_interface_forward_training.4} parent=215 // pred_region
          %s3169 = sand.u32 %s648, 1
          %s3170 = scalar_lea.sflag [#allocation4], %s3169
          %s3171 = sand.u32 %s648, 1
          %s3172 = smul.addr %s3171, 8
          %s3173 = scalar_lea.vmem [#allocation29], %s3172
          %3174 = dma.done %s3170, 128
        $region220: #{output_interface_forward_training.4} parent=215 // pred_fallthru
          _
      $region216: #{output_interface_forward_training.4} parent=5 // pred_fallthru
        _
    $region6: #{output_interface_forward_training.4} parent=1 // loop_footer
      %s41 = sadd.s32 1, %s37
    $region7: #{output_interface_forward_training.4} parent=1 // loop_footer_branch
      %36 = sbr.rel target = $region3
    $region8: #{output_interface_forward_training.4} parent=1 // loop_exit
      _
    %3175 = vsyncpa [#allocation3], 1
    %s3176 = scalar_lea.sflag [#allocation3], 1
    %3177 = vsyncpa %s3176, 1
    %3178 = vsyncpa [#allocation6], 1
    %3179 = vsyncpa [#allocation9], 1
    %3180 = vsyncpa [#allocation4], 1
    %s3181 = scalar_lea.sflag [#allocation4], 1
    %3182 = vsyncpa %s3181, 1

</llo_original>
